<compile_context>
chip_gen: v6e
topology: v6e:2x2x1
jax: 0.10.0
libtpu: 0.0.40
codegen_flags: <defaults>
</compile_context>

<pallas_src>
import functools

import jax
import jax.numpy as jnp
from jax.experimental import pallas as pl
from jax.experimental.pallas import tpu as pltpu

IN = 28 * 28      # 784
H = 512
OUT = 10
OUT_PAD = 128     # lane-dense final layer / output block


def _round_up(n, m):
    return ((n + m - 1) // m) * m


def mlp_kernel(x_ref, w0_ref, b0_ref, w1_ref, b1_ref, w2_ref, b2_ref,
               w3_ref, b3_ref, o_ref, *, n_classes):
    # x tile: (TB, 784) bf16; weights bf16 (VMEM-resident); biases f32.
    x = x_ref[...]

    h = jnp.dot(x, w0_ref[...], preferred_element_type=jnp.float32) + b0_ref[...]
    h = jnp.maximum(h, 0.0).astype(jnp.bfloat16)

    h = jnp.dot(h, w1_ref[...], preferred_element_type=jnp.float32) + b1_ref[...]
    h = jnp.maximum(h, 0.0).astype(jnp.bfloat16)

    h = jnp.dot(h, w2_ref[...], preferred_element_type=jnp.float32) + b2_ref[...]
    h = jnp.maximum(h, 0.0).astype(jnp.bfloat16)

    logits = jnp.dot(h, w3_ref[...], preferred_element_type=jnp.float32) + b3_ref[...]

    # Mask the zero-padded class lanes out of the softmax with a large finite negative
    # (safer than -inf if anyone ever consumes the un-sliced (Bp, 128) buffer).
    col = jax.lax.broadcasted_iota(jnp.int32, logits.shape, 1)
    logits = jnp.where(col < n_classes, logits, -1e30)

    # Numerically stable log-softmax over the class (lane) axis.
    m = jnp.max(logits, axis=-1, keepdims=True)
    shifted = logits - m
    lse = jnp.log(jnp.sum(jnp.exp(shifted), axis=-1, keepdims=True))
    o_ref[...] = (shifted - lse).astype(o_ref.dtype)


def init_params(key, input_dim=IN):
    """PyTorch-style uniform(-1/sqrt(fan_in), 1/sqrt(fan_in)) init, f32.

    Weights are stored transposed: [in_features, out_features].
    """
    dims = [(input_dim, H), (H, H), (H, H), (H, OUT)]
    params = []
    for fan_in, fan_out in dims:
        key, kw, kb = jax.random.split(key, 3)
        bound = 1.0 / float(fan_in) ** 0.5
        w = jax.random.uniform(kw, (fan_in, fan_out), jnp.float32, -bound, bound)
        b = jax.random.uniform(kb, (1, fan_out), jnp.float32, -bound, bound)
        params.extend([w, b])
    return tuple(params)


def prepare_params(params):
    """One-time host-side prep: cast weights to bf16, pad only the 10-wide output layer."""
    w0, b0, w1, b1, w2, b2, w3, b3 = params
    bf = jnp.bfloat16
    w3p = jnp.zeros((H, OUT_PAD), bf).at[:, :OUT].set(w3.astype(bf))      # zero N-cols
    b3p = jnp.zeros((1, OUT_PAD), jnp.float32).at[:, :OUT].set(b3.astype(jnp.float32))
    return (w0.astype(bf), b0.astype(jnp.float32),
            w1.astype(bf), b1.astype(jnp.float32),
            w2.astype(bf), b2.astype(jnp.float32),
            w3p, b3p)


def _batch_tile(B):
    """Batch tile: multiple of 16, capped per generation, >=2 grid steps when possible."""
    kind = ""
    try:
        kind = jax.devices()[0].device_kind.lower()
    except Exception:  # no accelerator metadata — stay conservative
        pass
    cap = 512 if "v5" in kind else 1024       # v5e: 16 MiB scoped-VMEM default
    if B <= 16:
        return 16
    # Aim for >= 2 grid steps so the "parallel" batch axis spans both v7x TensorCores.
    half = _round_up(-(-B // 2), 16)
    return min(cap, half)


@jax.jit
def mlp_forward(x, prepared):
    """x: [B, ...] -> log-probs [B, 10]."""
    w0, b0, w1, b1, w2, b2, w3, b3 = prepared
    B = x.shape[0]
    x2 = x.reshape(B, -1).astype(jnp.bfloat16)

    TB = _batch_tile(B)
    Bp = _round_up(B, TB)

    # Only materialize a padded copy when the batch isn't already tile-aligned.
    xp = x2 if Bp == B else jnp.zeros((Bp, IN), jnp.bfloat16).at[:B, :].set(x2)

    # Constant-index (VMEM-resident) blocks: single buffer — no point double-buffering.
    resident = lambda shape: pl.BlockSpec(shape, lambda i: (0, 0),
                                          pipeline_mode=pl.Buffered(1))

    out = pl.pallas_call(
        functools.partial(mlp_kernel, n_classes=OUT),
        out_shape=jax.ShapeDtypeStruct((Bp, OUT_PAD), jnp.float32),
        grid_spec=pltpu.PrefetchScalarGridSpec(
            num_scalar_prefetch=0,
            grid=(Bp // TB,),
            in_specs=[
                pl.BlockSpec((TB, IN), lambda i: (i, 0)),       # x tile (pipelined)
                resident(w0.shape), resident(b0.shape),         # weights stay resident
                resident(w1.shape), resident(b1.shape),
                resident(w2.shape), resident(b2.shape),
                resident(w3.shape), resident(b3.shape),
            ],
            out_specs=pl.BlockSpec((TB, OUT_PAD), lambda i: (i, 0)),
        ),
        compiler_params=pltpu.CompilerParams(
            dimension_semantics=("parallel",),
            # Only needed for large tiles; 40 MiB leaves headroom on every generation
            # (below v7x's 64 MiB physical VMEM).
            vmem_limit_bytes=(40 << 20) if TB > 512 else None,
        ),
    )(xp, w0, b0, w1, b1, w2, b2, w3, b3)

    return out[:B, :OUT]


def mlp_reference_f32(x, params):
    w0, b0, w1, b1, w2, b2, w3, b3 = params
    h = x.reshape(x.shape[0], -1)
    h = jnp.maximum(h @ w0 + b0, 0.0)
    h = jnp.maximum(h @ w1 + b1, 0.0)
    h = jnp.maximum(h @ w2 + b2, 0.0)
    return jax.nn.log_softmax(h @ w3 + b3, axis=1)


def mlp_reference_bf16(x, params):
    """Same math as the kernel (bf16 operands, f32 accumulation), plain jnp."""
    w0, b0, w1, b1, w2, b2, w3, b3 = params
    bf = jnp.bfloat16
    f32 = jnp.float32
    h = x.reshape(x.shape[0], -1).astype(bf)
    h = jnp.maximum(jnp.dot(h, w0.astype(bf), preferred_element_type=f32) + b0, 0.0).astype(bf)
    h = jnp.maximum(jnp.dot(h, w1.astype(bf), preferred_element_type=f32) + b1, 0.0).astype(bf)
    h = jnp.maximum(jnp.dot(h, w2.astype(bf), preferred_element_type=f32) + b2, 0.0).astype(bf)
    logits = jnp.dot(h, w3.astype(bf), preferred_element_type=f32) + b3
    return jax.nn.log_softmax(logits, axis=1)


if __name__ == "__main__":
    key = jax.random.PRNGKey(0)
    key, kx = jax.random.split(key)

    B = 8
    x = jax.random.normal(kx, (B, 28, 28), jnp.float32)   # flattened to [B, 784]
    params = init_params(key)
    prepared = prepare_params(params)

    out = mlp_forward(x, prepared)
    jax.block_until_ready(out)

    assert out.shape == (B, OUT), out.shape

    ref_bf16 = mlp_reference_bf16(x, params)
    ref_f32 = mlp_reference_f32(x, params)
    err_bf16 = float(jnp.max(jnp.abs(out - ref_bf16)))
    err_f32 = float(jnp.max(jnp.abs(out - ref_f32)))
    assert jnp.allclose(out, ref_bf16, atol=2e-3, rtol=2e-3), f"bf16-ref mismatch: {err_bf16}"
    assert jnp.allclose(out, ref_f32, atol=1.5e-1, rtol=1.5e-1), f"f32-ref mismatch: {err_f32}"

    print("KERNEL_OK")
</pallas_src>

<mosaic_0001>
module attributes {stable_mosaic.version = 11 : i64} {
  func.func @mlp_kernel(%arg0: i32, %arg1: memref<16x784xbf16, #tpu.memory_space<vmem>>, %arg2: memref<784x512xbf16, #tpu.memory_space<vmem>>, %arg3: memref<1x512xf32, #tpu.memory_space<vmem>>, %arg4: memref<512x512xbf16, #tpu.memory_space<vmem>>, %arg5: memref<1x512xf32, #tpu.memory_space<vmem>>, %arg6: memref<512x512xbf16, #tpu.memory_space<vmem>>, %arg7: memref<1x512xf32, #tpu.memory_space<vmem>>, %arg8: memref<512x128xbf16, #tpu.memory_space<vmem>>, %arg9: memref<1x128xf32, #tpu.memory_space<vmem>>, %arg10: memref<16x128xf32, #tpu.memory_space<vmem>>) attributes {dimension_semantics = [#tpu.dimension_semantics<parallel>], iteration_bounds = array<i64: 1>, scalar_prefetch = 0 : i64, scratch_operands = 0 : i64, tpu.core_type = #tpu.core_type<tc>, window_params = [{transform_indices = @transform_0, window_bounds = array<i64: 16, 784>}, {pipeline_mode = #tpu.pipeline_mode<synchronous>, transform_indices = @transform_1, window_bounds = array<i64: 784, 512>}, {pipeline_mode = #tpu.pipeline_mode<synchronous>, transform_indices = @transform_2, window_bounds = array<i64: 1, 512>}, {pipeline_mode = #tpu.pipeline_mode<synchronous>, transform_indices = @transform_3, window_bounds = array<i64: 512, 512>}, {pipeline_mode = #tpu.pipeline_mode<synchronous>, transform_indices = @transform_4, window_bounds = array<i64: 1, 512>}, {pipeline_mode = #tpu.pipeline_mode<synchronous>, transform_indices = @transform_5, window_bounds = array<i64: 512, 512>}, {pipeline_mode = #tpu.pipeline_mode<synchronous>, transform_indices = @transform_6, window_bounds = array<i64: 1, 512>}, {pipeline_mode = #tpu.pipeline_mode<synchronous>, transform_indices = @transform_7, window_bounds = array<i64: 512, 128>}, {pipeline_mode = #tpu.pipeline_mode<synchronous>, transform_indices = @transform_8, window_bounds = array<i64: 1, 128>}, {transform_indices = @transform_9, window_bounds = array<i64: 16, 128>}]} {
    %c0 = arith.constant 0 : index
    %c0_0 = arith.constant 0 : index
    %0 = vector.load %arg1[%c0, %c0_0] : memref<16x784xbf16, #tpu.memory_space<vmem>>, vector<16x784xbf16>
    %c0_1 = arith.constant 0 : index
    %c0_2 = arith.constant 0 : index
    %1 = vector.load %arg2[%c0_1, %c0_2] : memref<784x512xbf16, #tpu.memory_space<vmem>>, vector<784x512xbf16>
    %cst = arith.constant dense<0.000000e+00> : vector<16x512xf32>
    %2 = tpu.matmul %0, %1, %cst {dimension_numbers = #tpu.dot_dimension_numbers<[1], [0], [0], [1], [0, 0, 1, 1], [], []>} : vector<16x784xbf16>, vector<784x512xbf16>, vector<16x512xf32> -> vector<16x512xf32>
    %c0_3 = arith.constant 0 : index
    %c0_4 = arith.constant 0 : index
    %3 = vector.load %arg3[%c0_3, %c0_4] : memref<1x512xf32, #tpu.memory_space<vmem>>, vector<1x512xf32>
    %4 = vector.broadcast %3 : vector<1x512xf32> to vector<16x512xf32>
    %5 = arith.addf %2, %4 : vector<16x512xf32>
    %cst_5 = arith.constant 0.000000e+00 : f32
    %6 = vector.broadcast %cst_5 : f32 to vector<16x512xf32>
    %7 = arith.maximumf %5, %6 : vector<16x512xf32>
    %8 = arith.truncf %7 : vector<16x512xf32> to vector<16x512xbf16>
    %c0_6 = arith.constant 0 : index
    %c0_7 = arith.constant 0 : index
    %9 = vector.load %arg4[%c0_6, %c0_7] : memref<512x512xbf16, #tpu.memory_space<vmem>>, vector<512x512xbf16>
    %cst_8 = arith.constant dense<0.000000e+00> : vector<16x512xf32>
    %10 = tpu.matmul %8, %9, %cst_8 {dimension_numbers = #tpu.dot_dimension_numbers<[1], [0], [0], [1], [0, 0, 1, 1], [], []>} : vector<16x512xbf16>, vector<512x512xbf16>, vector<16x512xf32> -> vector<16x512xf32>
    %c0_9 = arith.constant 0 : index
    %c0_10 = arith.constant 0 : index
    %11 = vector.load %arg5[%c0_9, %c0_10] : memref<1x512xf32, #tpu.memory_space<vmem>>, vector<1x512xf32>
    %12 = vector.broadcast %11 : vector<1x512xf32> to vector<16x512xf32>
    %13 = arith.addf %10, %12 : vector<16x512xf32>
    %cst_11 = arith.constant 0.000000e+00 : f32
    %14 = vector.broadcast %cst_11 : f32 to vector<16x512xf32>
    %15 = arith.maximumf %13, %14 : vector<16x512xf32>
    %16 = arith.truncf %15 : vector<16x512xf32> to vector<16x512xbf16>
    %c0_12 = arith.constant 0 : index
    %c0_13 = arith.constant 0 : index
    %17 = vector.load %arg6[%c0_12, %c0_13] : memref<512x512xbf16, #tpu.memory_space<vmem>>, vector<512x512xbf16>
    %cst_14 = arith.constant dense<0.000000e+00> : vector<16x512xf32>
    %18 = tpu.matmul %16, %17, %cst_14 {dimension_numbers = #tpu.dot_dimension_numbers<[1], [0], [0], [1], [0, 0, 1, 1], [], []>} : vector<16x512xbf16>, vector<512x512xbf16>, vector<16x512xf32> -> vector<16x512xf32>
    %c0_15 = arith.constant 0 : index
    %c0_16 = arith.constant 0 : index
    %19 = vector.load %arg7[%c0_15, %c0_16] : memref<1x512xf32, #tpu.memory_space<vmem>>, vector<1x512xf32>
    %20 = vector.broadcast %19 : vector<1x512xf32> to vector<16x512xf32>
    %21 = arith.addf %18, %20 : vector<16x512xf32>
    %cst_17 = arith.constant 0.000000e+00 : f32
    %22 = vector.broadcast %cst_17 : f32 to vector<16x512xf32>
    %23 = arith.maximumf %21, %22 : vector<16x512xf32>
    %24 = arith.truncf %23 : vector<16x512xf32> to vector<16x512xbf16>
    %c0_18 = arith.constant 0 : index
    %c0_19 = arith.constant 0 : index
    %25 = vector.load %arg8[%c0_18, %c0_19] : memref<512x128xbf16, #tpu.memory_space<vmem>>, vector<512x128xbf16>
    %cst_20 = arith.constant dense<0.000000e+00> : vector<16x128xf32>
    %26 = tpu.matmul %24, %25, %cst_20 {dimension_numbers = #tpu.dot_dimension_numbers<[1], [0], [0], [1], [0, 0, 1, 1], [], []>} : vector<16x512xbf16>, vector<512x128xbf16>, vector<16x128xf32> -> vector<16x128xf32>
    %c0_21 = arith.constant 0 : index
    %c0_22 = arith.constant 0 : index
    %27 = vector.load %arg9[%c0_21, %c0_22] : memref<1x128xf32, #tpu.memory_space<vmem>>, vector<1x128xf32>
    %28 = vector.broadcast %27 : vector<1x128xf32> to vector<16x128xf32>
    %29 = arith.addf %26, %28 : vector<16x128xf32>
    %30 = tpu.iota {dimensions = array<i32: 1>} : vector<16x128xi32>
    %c10_i32 = arith.constant 10 : i32
    %31 = vector.broadcast %c10_i32 : i32 to vector<16x128xi32>
    %32 = arith.cmpi slt, %30, %31 : vector<16x128xi32>
    %cst_23 = arith.constant -1.000000e+30 : f32
    %33 = vector.broadcast %cst_23 : f32 to vector<16x128xf32>
    %34 = arith.select %32, %29, %33 : vector<16x128xi1>, vector<16x128xf32>
    %cst_24 = arith.constant dense<0xFF800000> : vector<16xf32>
    %35 = vector.multi_reduction <maximumf>, %34, %cst_24 [1] : vector<16x128xf32> to vector<16xf32>
    %36 = vector.shape_cast %35 : vector<16xf32> to vector<16x1xf32>
    %37 = vector.broadcast %36 : vector<16x1xf32> to vector<16x128xf32>
    %38 = arith.subf %34, %37 : vector<16x128xf32>
    %39 = math.exp %38 : vector<16x128xf32>
    %cst_25 = arith.constant dense<0.000000e+00> : vector<16xf32>
    %40 = vector.multi_reduction <add>, %39, %cst_25 [1] : vector<16x128xf32> to vector<16xf32>
    %41 = vector.shape_cast %40 : vector<16xf32> to vector<16x1xf32>
    %42 = math.log %41 : vector<16x1xf32>
    %43 = vector.broadcast %42 : vector<16x1xf32> to vector<16x128xf32>
    %44 = arith.subf %38, %43 : vector<16x128xf32>
    %c0_26 = arith.constant 0 : index
    %c0_27 = arith.constant 0 : index
    %45 = vector.load %arg10[%c0_26, %c0_27] : memref<16x128xf32, #tpu.memory_space<vmem>>, vector<16x128xf32>
    tpu.vector_store %arg10[%c0_26, %c0_27], %44 {strides = array<i32>} : memref<16x128xf32, #tpu.memory_space<vmem>>, vector<16x128xf32>,
    return
  }
  func.func @transform_0(%arg0: i32) -> (i32, i32) {
    %c0_i32 = arith.constant 0 : i32
    %c0_i32_0 = arith.constant 0 : i32
    return %arg0, %c0_i32 : i32, i32
  }
  func.func @transform_1(%arg0: i32) -> (i32, i32) {
    %c0_i32 = arith.constant 0 : i32
    %c0_i32_0 = arith.constant 0 : i32
    %c0_i32_1 = arith.constant 0 : i32
    return %c0_i32, %c0_i32_0 : i32, i32
  }
  func.func @transform_2(%arg0: i32) -> (i32, i32) {
    %c0_i32 = arith.constant 0 : i32
    %c0_i32_0 = arith.constant 0 : i32
    %c0_i32_1 = arith.constant 0 : i32
    return %c0_i32, %c0_i32_0 : i32, i32
  }
  func.func @transform_3(%arg0: i32) -> (i32, i32) {
    %c0_i32 = arith.constant 0 : i32
    %c0_i32_0 = arith.constant 0 : i32
    %c0_i32_1 = arith.constant 0 : i32
    return %c0_i32, %c0_i32_0 : i32, i32
  }
  func.func @transform_4(%arg0: i32) -> (i32, i32) {
    %c0_i32 = arith.constant 0 : i32
    %c0_i32_0 = arith.constant 0 : i32
    %c0_i32_1 = arith.constant 0 : i32
    return %c0_i32, %c0_i32_0 : i32, i32
  }
  func.func @transform_5(%arg0: i32) -> (i32, i32) {
    %c0_i32 = arith.constant 0 : i32
    %c0_i32_0 = arith.constant 0 : i32
    %c0_i32_1 = arith.constant 0 : i32
    return %c0_i32, %c0_i32_0 : i32, i32
  }
  func.func @transform_6(%arg0: i32) -> (i32, i32) {
    %c0_i32 = arith.constant 0 : i32
    %c0_i32_0 = arith.constant 0 : i32
    %c0_i32_1 = arith.constant 0 : i32
    return %c0_i32, %c0_i32_0 : i32, i32
  }
  func.func @transform_7(%arg0: i32) -> (i32, i32) {
    %c0_i32 = arith.constant 0 : i32
    %c0_i32_0 = arith.constant 0 : i32
    %c0_i32_1 = arith.constant 0 : i32
    return %c0_i32, %c0_i32_0 : i32, i32
  }
  func.func @transform_8(%arg0: i32) -> (i32, i32) {
    %c0_i32 = arith.constant 0 : i32
    %c0_i32_0 = arith.constant 0 : i32
    %c0_i32_1 = arith.constant 0 : i32
    return %c0_i32, %c0_i32_0 : i32, i32
  }
  func.func @transform_9(%arg0: i32) -> (i32, i32) {
    %c0_i32 = arith.constant 0 : i32
    %c0_i32_0 = arith.constant 0 : i32
    return %arg0, %c0_i32 : i32, i32
  }
}

</mosaic_0001>

<llo_original>
// kernel: mlp_forward.1
$region0: #{mlp_forward.1}
  #allocation0 [shape = 'u32[]', space=smem, size = 0x4, offset = 0x4, fixed_abs, tag = 'smem constant byte address 0x4 - core index']
  #allocation1 [shape = 'u32[144,128]{1,0:T(1,128)}', space=vmem, size = 0x12000, scoped, tag = 'internal scratch']
  %s0 = inlined_call_operand.vmem [shape: bf16[16,784], index: 0, kind: input, shape index: {}]
  %s1 = inlined_call_operand.hbm [shape: bf16[784,512], index: 1, kind: input, shape index: {}]
  %s2 = inlined_call_operand.vmem [shape: f32[1,512], index: 2, kind: input, shape index: {}]
  %s3 = inlined_call_operand.hbm [shape: bf16[512,512], index: 3, kind: input, shape index: {}]
  %s4 = inlined_call_operand.vmem [shape: f32[1,512], index: 4, kind: input, shape index: {}]
  %s5 = inlined_call_operand.hbm [shape: bf16[512,512], index: 5, kind: input, shape index: {}]
  %s6 = inlined_call_operand.vmem [shape: f32[1,512], index: 6, kind: input, shape index: {}]
  %s7 = inlined_call_operand.vmem [shape: bf16[512,128], index: 7, kind: input, shape index: {}]
  %s8 = inlined_call_operand.vmem [shape: f32[1,128], index: 8, kind: input, shape index: {}]
  %s9 = inlined_call_operand.vmem [shape: f32[16,128], index: 9, kind: output, shape index: {}]
  %s10 = sld [smem:[#allocation0]]
  $region58: #{mlp_forward.1} parent=0
    _
  %s12 = ssub.s32 1, %s10
  %s13 = scalar_select 0, %s12, %s10
  $region1: #{mlp_forward.1} parent=0
    #allocation2 [shape = 'u8[802816]{0}', space=vmem, size = 0xc4000, scoped, tag = 'input window, operand 1, single buffered']
    #allocation3 [shape = 's32[1]{0}', space=sflag, size = 0x4, scoped, tag = 'scoped memory for mlp_forward.1']
    #allocation4 [shape = 'u8[524288]{0}', space=vmem, size = 0x80000, scoped, tag = 'input window, operand 3, single buffered']
    #allocation5 [shape = 's32[1]{0}', space=sflag, size = 0x4, scoped, tag = 'scoped memory for mlp_forward.1']
    #allocation6 [shape = 'u8[524288]{0}', space=vmem, size = 0x80000, scoped, tag = 'input window, operand 5, single buffered']
    %14 = vsyncpa [#allocation3], 0
    %15 = vsyncpa [#allocation5], 0
    // Predicated region
    $region2: #{mlp_forward.1} parent=1 // pred_check
      _
    $region3: #{mlp_forward.1} parent=1 // pred_check_branch
      %17 = sbr.rel (0) target = $region5
    $region4: #{mlp_forward.1} parent=1 // pred_region
      _
    $region5: #{mlp_forward.1} parent=1 // pred_fallthru
      _
    // Predicated region
    $region6: #{mlp_forward.1} parent=1 // pred_check
      _
    $region7: #{mlp_forward.1} parent=1 // pred_check_branch
      %19 = sbr.rel (0) target = $region9
    $region8: #{mlp_forward.1} parent=1 // pred_region
      %s21 = ssub.s32 25088, 25088
      %22 = vsyncadd [#allocation3], %s21
      %s23 = sshll.u32 [#allocation2], 4
      %s24 = int_to_ptr.vmem [resolvable:$true] %s23
      %29 = dma.hbm_to_vmem [thread:$0]  %s1, 25088, %s24, [#allocation3], 256, 256, 16
    $region9: #{mlp_forward.1} parent=1 // pred_fallthru
      _
    // Predicated region
    $region10: #{mlp_forward.1} parent=1 // pred_check
      _
    $region11: #{mlp_forward.1} parent=1 // pred_check_branch
      %31 = sbr.rel (0) target = $region13
    $region12: #{mlp_forward.1} parent=1 // pred_region
      _
    $region13: #{mlp_forward.1} parent=1 // pred_fallthru
      _
    // Predicated region
    $region14: #{mlp_forward.1} parent=1 // pred_check
      _
    $region15: #{mlp_forward.1} parent=1 // pred_check_branch
      %33 = sbr.rel (0) target = $region17
    $region16: #{mlp_forward.1} parent=1 // pred_region
      %s35 = ssub.s32 16384, 16384
      %36 = vsyncadd [#allocation5], %s35
      %s37 = sshll.u32 [#allocation4], 4
      %s38 = int_to_ptr.vmem [resolvable:$true] %s37
      %43 = dma.hbm_to_vmem [thread:$0]  %s3, 16384, %s38, [#allocation5], 256, 256, 16
    $region17: #{mlp_forward.1} parent=1 // pred_fallthru
      _
    // Predicated region
    $region18: #{mlp_forward.1} parent=1 // pred_check
      _
    $region19: #{mlp_forward.1} parent=1 // pred_check_branch
      %45 = sbr.rel (0) target = $region21
    $region20: #{mlp_forward.1} parent=1 // pred_region
      _
    $region21: #{mlp_forward.1} parent=1 // pred_fallthru
      _
    // Predicated region
    $region22: #{mlp_forward.1} parent=1 // pred_check
      _
    $region23: #{mlp_forward.1} parent=1 // pred_check_branch
      %47 = sbr.rel (0) target = $region25
    $region24: #{mlp_forward.1} parent=1 // pred_region
      %s49 = ssub.s32 16384, 16384
      %50 = vsyncadd [#allocation5], %s49
      %s51 = sshll.u32 [#allocation6], 4
      %s52 = int_to_ptr.vmem [resolvable:$true] %s51
      %57 = dma.hbm_to_vmem [thread:$0]  %s5, 16384, %s52, [#allocation5], 256, 256, 16
    $region25: #{mlp_forward.1} parent=1 // pred_fallthru
      _
    // Predicated region
    $region26: #{mlp_forward.1} parent=1 // pred_check
      _
    $region27: #{mlp_forward.1} parent=1 // pred_check_branch
      %59 = sbr.rel (0) target = $region29
    $region28: #{mlp_forward.1} parent=1 // pred_region
      _
    $region29: #{mlp_forward.1} parent=1 // pred_fallthru
      _
    // Predicated region
    $region30: #{mlp_forward.1} parent=1 // pred_check
      _
    $region31: #{mlp_forward.1} parent=1 // pred_check_branch
      %61 = sbr.rel (0) target = $region33
    $region32: #{mlp_forward.1} parent=1 // pred_region
      _
    $region33: #{mlp_forward.1} parent=1 // pred_fallthru
      _
    // Predicated region
    $region34: #{mlp_forward.1} parent=1 // pred_check
      _
    $region35: #{mlp_forward.1} parent=1 // pred_check_branch
      %63 = sbr.rel (0) target = $region37
    $region36: #{mlp_forward.1} parent=1 // pred_region
      _
    $region37: #{mlp_forward.1} parent=1 // pred_fallthru
      _
    // Predicated region
    $region38: #{mlp_forward.1} parent=1 // pred_check
      _
    $region39: #{mlp_forward.1} parent=1 // pred_check_branch
      %65 = sbr.rel (0) target = $region41
    $region40: #{mlp_forward.1} parent=1 // pred_region
      %66 = dma.done [#allocation3], 25088
    $region41: #{mlp_forward.1} parent=1 // pred_fallthru
      _
    // Predicated region
    $region42: #{mlp_forward.1} parent=1 // pred_check
      _
    $region43: #{mlp_forward.1} parent=1 // pred_check_branch
      %68 = sbr.rel (0) target = $region45
    $region44: #{mlp_forward.1} parent=1 // pred_region
      %69 = dma.done [#allocation5], 16384
    $region45: #{mlp_forward.1} parent=1 // pred_fallthru
      _
    // Predicated region
    $region46: #{mlp_forward.1} parent=1 // pred_check
      _
    $region47: #{mlp_forward.1} parent=1 // pred_check_branch
      %71 = sbr.rel (0) target = $region49
    $region48: #{mlp_forward.1} parent=1 // pred_region
      %72 = dma.done [#allocation5], 16384
    $region49: #{mlp_forward.1} parent=1 // pred_fallthru
      _
    %v74 = vld [vmem:[%s0] sm:$0xff]
    %v75 = vld [vmem:[%s0 + $0x8] sm:$0xff]
    %v76 = vld [vmem:[%s0 + $0x10] sm:$0xff]
    %v77 = vld [vmem:[%s0 + $0x18] sm:$0xf]
    %v78 = vld [vmem:[%s0 + $0x1c] sm:$0xff]
    %v79 = vld [vmem:[%s0 + $0x24] sm:$0xff]
    %v80 = vld [vmem:[%s0 + $0x2c] sm:$0xff]
    %v81 = vld [vmem:[%s0 + $0x34] sm:$0xf]
    %v82 = vld [vmem:[#allocation2] sm:$0xff]
    %v83 = vld [vmem:[#allocation2 + $0x8] sm:$0xff]
    %v84 = vld [vmem:[#allocation2 + $0x10] sm:$0xff]
    %v85 = vld [vmem:[#allocation2 + $0x18] sm:$0xff]
    %v86 = vld [vmem:[#allocation2 + $0x20] sm:$0xff]
    %v87 = vld [vmem:[#allocation2 + $0x28] sm:$0xff]
    %v88 = vld [vmem:[#allocation2 + $0x30] sm:$0xff]
    %v89 = vld [vmem:[#allocation2 + $0x38] sm:$0xff]
    %v90 = vld [vmem:[#allocation2 + $0x40] sm:$0xff]
    %v91 = vld [vmem:[#allocation2 + $0x48] sm:$0xff]
    %v92 = vld [vmem:[#allocation2 + $0x50] sm:$0xff]
    %v93 = vld [vmem:[#allocation2 + $0x58] sm:$0xff]
    %v94 = vld [vmem:[#allocation2 + $0x60] sm:$0xff]
    %v95 = vld [vmem:[#allocation2 + $0x68] sm:$0xff]
    %v96 = vld [vmem:[#allocation2 + $0x70] sm:$0xff]
    %v97 = vld [vmem:[#allocation2 + $0x78] sm:$0xff]
    %v98 = vld [vmem:[#allocation2 + $0x80] sm:$0xff]
    %v99 = vld [vmem:[#allocation2 + $0x88] sm:$0xff]
    %v100 = vld [vmem:[#allocation2 + $0x90] sm:$0xff]
    %v101 = vld [vmem:[#allocation2 + $0x98] sm:$0xff]
    %v102 = vld [vmem:[#allocation2 + $0xa0] sm:$0xff]
    %v103 = vld [vmem:[#allocation2 + $0xa8] sm:$0xff]
    %v104 = vld [vmem:[#allocation2 + $0xb0] sm:$0xff]
    %v105 = vld [vmem:[#allocation2 + $0xb8] sm:$0xff]
    %v106 = vld [vmem:[#allocation2 + $0xc0] sm:$0xff]
    %v107 = vld [vmem:[#allocation2 + $0xc8] sm:$0xff]
    %v108 = vld [vmem:[#allocation2 + $0xd0] sm:$0xff]
    %v109 = vld [vmem:[#allocation2 + $0xd8] sm:$0xff]
    %v110 = vld [vmem:[#allocation2 + $0xe0] sm:$0xff]
    %v111 = vld [vmem:[#allocation2 + $0xe8] sm:$0xff]
    %v112 = vld [vmem:[#allocation2 + $0xf0] sm:$0xff]
    %v113 = vld [vmem:[#allocation2 + $0xf8] sm:$0xff]
    %v114 = vld [vmem:[#allocation2 + $0x100] sm:$0xff]
    %v115 = vld [vmem:[#allocation2 + $0x108] sm:$0xff]
    %v116 = vld [vmem:[#allocation2 + $0x110] sm:$0xff]
    %v117 = vld [vmem:[#allocation2 + $0x118] sm:$0xff]
    %v118 = vld [vmem:[#allocation2 + $0x120] sm:$0xff]
    %v119 = vld [vmem:[#allocation2 + $0x128] sm:$0xff]
    %v120 = vld [vmem:[#allocation2 + $0x130] sm:$0xff]
    %v121 = vld [vmem:[#allocation2 + $0x138] sm:$0xff]
    %v122 = vld [vmem:[#allocation2 + $0x140] sm:$0xff]
    %v123 = vld [vmem:[#allocation2 + $0x148] sm:$0xff]
    %v124 = vld [vmem:[#allocation2 + $0x150] sm:$0xff]
    %v125 = vld [vmem:[#allocation2 + $0x158] sm:$0xff]
    %v126 = vld [vmem:[#allocation2 + $0x160] sm:$0xff]
    %v127 = vld [vmem:[#allocation2 + $0x168] sm:$0xff]
    %v128 = vld [vmem:[#allocation2 + $0x170] sm:$0xff]
    %v129 = vld [vmem:[#allocation2 + $0x178] sm:$0xff]
    %v130 = vld [vmem:[#allocation2 + $0x180] sm:$0xff]
    %v131 = vld [vmem:[#allocation2 + $0x188] sm:$0xff]
    %v132 = vld [vmem:[#allocation2 + $0x190] sm:$0xff]
    %v133 = vld [vmem:[#allocation2 + $0x198] sm:$0xff]
    %v134 = vld [vmem:[#allocation2 + $0x1a0] sm:$0xff]
    %v135 = vld [vmem:[#allocation2 + $0x1a8] sm:$0xff]
    %v136 = vld [vmem:[#allocation2 + $0x1b0] sm:$0xff]
    %v137 = vld [vmem:[#allocation2 + $0x1b8] sm:$0xff]
    %v138 = vld [vmem:[#allocation2 + $0x1c0] sm:$0xff]
    %v139 = vld [vmem:[#allocation2 + $0x1c8] sm:$0xff]
    %v140 = vld [vmem:[#allocation2 + $0x1d0] sm:$0xff]
    %v141 = vld [vmem:[#allocation2 + $0x1d8] sm:$0xff]
    %v142 = vld [vmem:[#allocation2 + $0x1e0] sm:$0xff]
    %v143 = vld [vmem:[#allocation2 + $0x1e8] sm:$0xff]
    %v144 = vld [vmem:[#allocation2 + $0x1f0] sm:$0xff]
    %v145 = vld [vmem:[#allocation2 + $0x1f8] sm:$0xff]
    %v146 = vld [vmem:[#allocation2 + $0x200] sm:$0xff]
    %v147 = vld [vmem:[#allocation2 + $0x208] sm:$0xff]
    %v148 = vld [vmem:[#allocation2 + $0x210] sm:$0xff]
    %v149 = vld [vmem:[#allocation2 + $0x218] sm:$0xff]
    %v150 = vld [vmem:[#allocation2 + $0x220] sm:$0xff]
    %v151 = vld [vmem:[#allocation2 + $0x228] sm:$0xff]
    %v152 = vld [vmem:[#allocation2 + $0x230] sm:$0xff]
    %v153 = vld [vmem:[#allocation2 + $0x238] sm:$0xff]
    %v154 = vld [vmem:[#allocation2 + $0x240] sm:$0xff]
    %v155 = vld [vmem:[#allocation2 + $0x248] sm:$0xff]
    %v156 = vld [vmem:[#allocation2 + $0x250] sm:$0xff]
    %v157 = vld [vmem:[#allocation2 + $0x258] sm:$0xff]
    %v158 = vld [vmem:[#allocation2 + $0x260] sm:$0xff]
    %v159 = vld [vmem:[#allocation2 + $0x268] sm:$0xff]
    %v160 = vld [vmem:[#allocation2 + $0x270] sm:$0xff]
    %v161 = vld [vmem:[#allocation2 + $0x278] sm:$0xff]
    %v162 = vld [vmem:[#allocation2 + $0x280] sm:$0xff]
    %v163 = vld [vmem:[#allocation2 + $0x288] sm:$0xff]
    %v164 = vld [vmem:[#allocation2 + $0x290] sm:$0xff]
    %v165 = vld [vmem:[#allocation2 + $0x298] sm:$0xff]
    %v166 = vld [vmem:[#allocation2 + $0x2a0] sm:$0xff]
    %v167 = vld [vmem:[#allocation2 + $0x2a8] sm:$0xff]
    %v168 = vld [vmem:[#allocation2 + $0x2b0] sm:$0xff]
    %v169 = vld [vmem:[#allocation2 + $0x2b8] sm:$0xff]
    %v170 = vld [vmem:[#allocation2 + $0x2c0] sm:$0xff]
    %v171 = vld [vmem:[#allocation2 + $0x2c8] sm:$0xff]
    %v172 = vld [vmem:[#allocation2 + $0x2d0] sm:$0xff]
    %v173 = vld [vmem:[#allocation2 + $0x2d8] sm:$0xff]
    %v174 = vld [vmem:[#allocation2 + $0x2e0] sm:$0xff]
    %v175 = vld [vmem:[#allocation2 + $0x2e8] sm:$0xff]
    %v176 = vld [vmem:[#allocation2 + $0x2f0] sm:$0xff]
    %v177 = vld [vmem:[#allocation2 + $0x2f8] sm:$0xff]
    %v178 = vld [vmem:[#allocation2 + $0x300] sm:$0xff]
    %v179 = vld [vmem:[#allocation2 + $0x308] sm:$0xff]
    %v180 = vld [vmem:[#allocation2 + $0x310] sm:$0xff]
    %v181 = vld [vmem:[#allocation2 + $0x318] sm:$0xff]
    %v182 = vld [vmem:[#allocation2 + $0x320] sm:$0xff]
    %v183 = vld [vmem:[#allocation2 + $0x328] sm:$0xff]
    %v184 = vld [vmem:[#allocation2 + $0x330] sm:$0xff]
    %v185 = vld [vmem:[#allocation2 + $0x338] sm:$0xff]
    %v186 = vld [vmem:[#allocation2 + $0x340] sm:$0xff]
    %v187 = vld [vmem:[#allocation2 + $0x348] sm:$0xff]
    %v188 = vld [vmem:[#allocation2 + $0x350] sm:$0xff]
    %v189 = vld [vmem:[#allocation2 + $0x358] sm:$0xff]
    %v190 = vld [vmem:[#allocation2 + $0x360] sm:$0xff]
    %v191 = vld [vmem:[#allocation2 + $0x368] sm:$0xff]
    %v192 = vld [vmem:[#allocation2 + $0x370] sm:$0xff]
    %v193 = vld [vmem:[#allocation2 + $0x378] sm:$0xff]
    %v194 = vld [vmem:[#allocation2 + $0x380] sm:$0xff]
    %v195 = vld [vmem:[#allocation2 + $0x388] sm:$0xff]
    %v196 = vld [vmem:[#allocation2 + $0x390] sm:$0xff]
    %v197 = vld [vmem:[#allocation2 + $0x398] sm:$0xff]
    %v198 = vld [vmem:[#allocation2 + $0x3a0] sm:$0xff]
    %v199 = vld [vmem:[#allocation2 + $0x3a8] sm:$0xff]
    %v200 = vld [vmem:[#allocation2 + $0x3b0] sm:$0xff]
    %v201 = vld [vmem:[#allocation2 + $0x3b8] sm:$0xff]
    %v202 = vld [vmem:[#allocation2 + $0x3c0] sm:$0xff]
    %v203 = vld [vmem:[#allocation2 + $0x3c8] sm:$0xff]
    %v204 = vld [vmem:[#allocation2 + $0x3d0] sm:$0xff]
    %v205 = vld [vmem:[#allocation2 + $0x3d8] sm:$0xff]
    %v206 = vld [vmem:[#allocation2 + $0x3e0] sm:$0xff]
    %v207 = vld [vmem:[#allocation2 + $0x3e8] sm:$0xff]
    %v208 = vld [vmem:[#allocation2 + $0x3f0] sm:$0xff]
    %v209 = vld [vmem:[#allocation2 + $0x3f8] sm:$0xff]
    %v210 = vld [vmem:[#allocation2 + $0x400] sm:$0xff]
    %v211 = vld [vmem:[#allocation2 + $0x408] sm:$0xff]
    %v212 = vld [vmem:[#allocation2 + $0x410] sm:$0xff]
    %v213 = vld [vmem:[#allocation2 + $0x418] sm:$0xff]
    %v214 = vld [vmem:[#allocation2 + $0x420] sm:$0xff]
    %v215 = vld [vmem:[#allocation2 + $0x428] sm:$0xff]
    %v216 = vld [vmem:[#allocation2 + $0x430] sm:$0xff]
    %v217 = vld [vmem:[#allocation2 + $0x438] sm:$0xff]
    %v218 = vld [vmem:[#allocation2 + $0x440] sm:$0xff]
    %v219 = vld [vmem:[#allocation2 + $0x448] sm:$0xff]
    %v220 = vld [vmem:[#allocation2 + $0x450] sm:$0xff]
    %v221 = vld [vmem:[#allocation2 + $0x458] sm:$0xff]
    %v222 = vld [vmem:[#allocation2 + $0x460] sm:$0xff]
    %v223 = vld [vmem:[#allocation2 + $0x468] sm:$0xff]
    %v224 = vld [vmem:[#allocation2 + $0x470] sm:$0xff]
    %v225 = vld [vmem:[#allocation2 + $0x478] sm:$0xff]
    %v226 = vld [vmem:[#allocation2 + $0x480] sm:$0xff]
    %v227 = vld [vmem:[#allocation2 + $0x488] sm:$0xff]
    %v228 = vld [vmem:[#allocation2 + $0x490] sm:$0xff]
    %v229 = vld [vmem:[#allocation2 + $0x498] sm:$0xff]
    %v230 = vld [vmem:[#allocation2 + $0x4a0] sm:$0xff]
    %v231 = vld [vmem:[#allocation2 + $0x4a8] sm:$0xff]
    %v232 = vld [vmem:[#allocation2 + $0x4b0] sm:$0xff]
    %v233 = vld [vmem:[#allocation2 + $0x4b8] sm:$0xff]
    %v234 = vld [vmem:[#allocation2 + $0x4c0] sm:$0xff]
    %v235 = vld [vmem:[#allocation2 + $0x4c8] sm:$0xff]
    %v236 = vld [vmem:[#allocation2 + $0x4d0] sm:$0xff]
    %v237 = vld [vmem:[#allocation2 + $0x4d8] sm:$0xff]
    %v238 = vld [vmem:[#allocation2 + $0x4e0] sm:$0xff]
    %v239 = vld [vmem:[#allocation2 + $0x4e8] sm:$0xff]
    %v240 = vld [vmem:[#allocation2 + $0x4f0] sm:$0xff]
    %v241 = vld [vmem:[#allocation2 + $0x4f8] sm:$0xff]
    %v242 = vld [vmem:[#allocation2 + $0x500] sm:$0xff]
    %v243 = vld [vmem:[#allocation2 + $0x508] sm:$0xff]
    %v244 = vld [vmem:[#allocation2 + $0x510] sm:$0xff]
    %v245 = vld [vmem:[#allocation2 + $0x518] sm:$0xff]
    %v246 = vld [vmem:[#allocation2 + $0x520] sm:$0xff]
    %v247 = vld [vmem:[#allocation2 + $0x528] sm:$0xff]
    %v248 = vld [vmem:[#allocation2 + $0x530] sm:$0xff]
    %v249 = vld [vmem:[#allocation2 + $0x538] sm:$0xff]
    %v250 = vld [vmem:[#allocation2 + $0x540] sm:$0xff]
    %v251 = vld [vmem:[#allocation2 + $0x548] sm:$0xff]
    %v252 = vld [vmem:[#allocation2 + $0x550] sm:$0xff]
    %v253 = vld [vmem:[#allocation2 + $0x558] sm:$0xff]
    %v254 = vld [vmem:[#allocation2 + $0x560] sm:$0xff]
    %v255 = vld [vmem:[#allocation2 + $0x568] sm:$0xff]
    %v256 = vld [vmem:[#allocation2 + $0x570] sm:$0xff]
    %v257 = vld [vmem:[#allocation2 + $0x578] sm:$0xff]
    %v258 = vld [vmem:[#allocation2 + $0x580] sm:$0xff]
    %v259 = vld [vmem:[#allocation2 + $0x588] sm:$0xff]
    %v260 = vld [vmem:[#allocation2 + $0x590] sm:$0xff]
    %v261 = vld [vmem:[#allocation2 + $0x598] sm:$0xff]
    %v262 = vld [vmem:[#allocation2 + $0x5a0] sm:$0xff]
    %v263 = vld [vmem:[#allocation2 + $0x5a8] sm:$0xff]
    %v264 = vld [vmem:[#allocation2 + $0x5b0] sm:$0xff]
    %v265 = vld [vmem:[#allocation2 + $0x5b8] sm:$0xff]
    %v266 = vld [vmem:[#allocation2 + $0x5c0] sm:$0xff]
    %v267 = vld [vmem:[#allocation2 + $0x5c8] sm:$0xff]
    %v268 = vld [vmem:[#allocation2 + $0x5d0] sm:$0xff]
    %v269 = vld [vmem:[#allocation2 + $0x5d8] sm:$0xff]
    %v270 = vld [vmem:[#allocation2 + $0x5e0] sm:$0xff]
    %v271 = vld [vmem:[#allocation2 + $0x5e8] sm:$0xff]
    %v272 = vld [vmem:[#allocation2 + $0x5f0] sm:$0xff]
    %v273 = vld [vmem:[#allocation2 + $0x5f8] sm:$0xff]
    %v274 = vld [vmem:[#allocation2 + $0x600] sm:$0xff]
    %v275 = vld [vmem:[#allocation2 + $0x608] sm:$0xff]
    %v276 = vld [vmem:[#allocation2 + $0x610] sm:$0xff]
    %v277 = vld [vmem:[#allocation2 + $0x618] sm:$0xff]
    %v278 = vld [vmem:[%s2] sm:$0xf]
    %v280 = vlaneseq
    %v281 = vshrl.u32 %v280, 7
    %v282 = vsub.s32 0, %v281
    %v283 = vrot.slane %v278, %v282
    %v284 = vlaneseq
    %v285 = vshrl.u32 %v284, 7
    %v286 = vsub.s32 1, %v285
    %v287 = vrot.slane %v278, %v286
    %v288 = vlaneseq
    %v289 = vshrl.u32 %v288, 7
    %v290 = vsub.s32 2, %v289
    %v291 = vrot.slane %v278, %v290
    %v292 = vlaneseq
    %v293 = vshrl.u32 %v292, 7
    %v294 = vsub.s32 3, %v293
    %v295 = vrot.slane %v278, %v294
    %v308 = vunpack.c.l.b16 %v74
    %v309 = vunpack.c.h.b16 %v74
    %v310 = vunpack.c.l.b16 %v75
    %v311 = vunpack.c.h.b16 %v75
    %v312 = vunpack.c.l.b16 %v76
    %v313 = vunpack.c.h.b16 %v76
    %v314 = vunpack.c.l.b16 %v77
    %v315 = vunpack.c.l.b16 %v78
    %v316 = vunpack.c.h.b16 %v78
    %v317 = vunpack.c.l.b16 %v79
    %v318 = vunpack.c.h.b16 %v79
    %v319 = vunpack.c.l.b16 %v80
    %v320 = vunpack.c.h.b16 %v80
    %v321 = vunpack.c.l.b16 %v81
    %v322 = vpack.c.b16 %v315, %v308
    %v323 = vpack.c.b16 %v316, %v309
    %v324 = vpack.c.b16 %v317, %v310
    %v325 = vpack.c.b16 %v318, %v311
    %v326 = vpack.c.b16 %v319, %v312
    %v327 = vpack.c.b16 %v320, %v313
    %v328 = vpack.c.b16 %v321, %v314
    %v531 = vunpack.c.l.b16 %v82
    %v532 = vunpack.c.h.b16 %v82
    %v533 = vunpack.c.l.b16 %v83
    %v534 = vunpack.c.h.b16 %v83
    %v535 = vunpack.c.l.b16 %v84
    %v536 = vunpack.c.h.b16 %v84
    %v537 = vunpack.c.l.b16 %v85
    %v538 = vunpack.c.h.b16 %v85
    %v539 = vunpack.c.l.b16 %v86
    %v540 = vunpack.c.h.b16 %v86
    %v541 = vunpack.c.l.b16 %v87
    %v542 = vunpack.c.h.b16 %v87
    %v543 = vunpack.c.l.b16 %v88
    %v544 = vunpack.c.h.b16 %v88
    %v545 = vunpack.c.l.b16 %v89
    %v546 = vunpack.c.h.b16 %v89
    %v547 = vunpack.c.l.b16 %v90
    %v548 = vunpack.c.h.b16 %v90
    %v549 = vunpack.c.l.b16 %v91
    %v550 = vunpack.c.h.b16 %v91
    %v551 = vunpack.c.l.b16 %v92
    %v552 = vunpack.c.h.b16 %v92
    %v553 = vunpack.c.l.b16 %v93
    %v554 = vunpack.c.h.b16 %v93
    %v555 = vunpack.c.l.b16 %v94
    %v556 = vunpack.c.h.b16 %v94
    %v557 = vunpack.c.l.b16 %v95
    %v558 = vunpack.c.h.b16 %v95
    %v559 = vunpack.c.l.b16 %v96
    %v560 = vunpack.c.h.b16 %v96
    %v561 = vunpack.c.l.b16 %v97
    %v562 = vunpack.c.h.b16 %v97
    %v563 = vunpack.c.l.b16 %v98
    %v564 = vunpack.c.h.b16 %v98
    %v565 = vunpack.c.l.b16 %v99
    %v566 = vunpack.c.h.b16 %v99
    %v567 = vunpack.c.l.b16 %v100
    %v568 = vunpack.c.h.b16 %v100
    %v569 = vunpack.c.l.b16 %v101
    %v570 = vunpack.c.h.b16 %v101
    %v571 = vunpack.c.l.b16 %v102
    %v572 = vunpack.c.h.b16 %v102
    %v573 = vunpack.c.l.b16 %v103
    %v574 = vunpack.c.h.b16 %v103
    %v575 = vunpack.c.l.b16 %v104
    %v576 = vunpack.c.h.b16 %v104
    %v577 = vunpack.c.l.b16 %v105
    %v578 = vunpack.c.h.b16 %v105
    %v579 = vunpack.c.l.b16 %v106
    %v580 = vunpack.c.h.b16 %v106
    %v581 = vunpack.c.l.b16 %v107
    %v582 = vunpack.c.h.b16 %v107
    %v583 = vunpack.c.l.b16 %v108
    %v584 = vunpack.c.h.b16 %v108
    %v585 = vunpack.c.l.b16 %v109
    %v586 = vunpack.c.h.b16 %v109
    %v587 = vunpack.c.l.b16 %v110
    %v588 = vunpack.c.h.b16 %v110
    %v589 = vunpack.c.l.b16 %v111
    %v590 = vunpack.c.h.b16 %v111
    %v591 = vunpack.c.l.b16 %v112
    %v592 = vunpack.c.h.b16 %v112
    %v593 = vunpack.c.l.b16 %v113
    %v594 = vunpack.c.h.b16 %v113
    %v595 = vunpack.c.l.b16 %v114
    %v596 = vunpack.c.h.b16 %v114
    %v597 = vunpack.c.l.b16 %v115
    %v598 = vunpack.c.h.b16 %v115
    %v599 = vunpack.c.l.b16 %v116
    %v600 = vunpack.c.h.b16 %v116
    %v601 = vunpack.c.l.b16 %v117
    %v602 = vunpack.c.h.b16 %v117
    %v603 = vunpack.c.l.b16 %v118
    %v604 = vunpack.c.h.b16 %v118
    %v605 = vunpack.c.l.b16 %v119
    %v606 = vunpack.c.h.b16 %v119
    %v607 = vunpack.c.l.b16 %v120
    %v608 = vunpack.c.h.b16 %v120
    %v609 = vunpack.c.l.b16 %v121
    %v610 = vunpack.c.h.b16 %v121
    %v611 = vunpack.c.l.b16 %v122
    %v612 = vunpack.c.h.b16 %v122
    %v613 = vunpack.c.l.b16 %v123
    %v614 = vunpack.c.h.b16 %v123
    %v615 = vunpack.c.l.b16 %v124
    %v616 = vunpack.c.h.b16 %v124
    %v617 = vunpack.c.l.b16 %v125
    %v618 = vunpack.c.h.b16 %v125
    %v619 = vunpack.c.l.b16 %v126
    %v620 = vunpack.c.h.b16 %v126
    %v621 = vunpack.c.l.b16 %v127
    %v622 = vunpack.c.h.b16 %v127
    %v623 = vunpack.c.l.b16 %v128
    %v624 = vunpack.c.h.b16 %v128
    %v625 = vunpack.c.l.b16 %v129
    %v626 = vunpack.c.h.b16 %v129
    %v627 = vunpack.c.l.b16 %v130
    %v628 = vunpack.c.h.b16 %v130
    %v629 = vunpack.c.l.b16 %v131
    %v630 = vunpack.c.h.b16 %v131
    %v631 = vunpack.c.l.b16 %v132
    %v632 = vunpack.c.h.b16 %v132
    %v633 = vunpack.c.l.b16 %v133
    %v634 = vunpack.c.h.b16 %v133
    %v635 = vunpack.c.l.b16 %v134
    %v636 = vunpack.c.h.b16 %v134
    %v637 = vunpack.c.l.b16 %v135
    %v638 = vunpack.c.h.b16 %v135
    %v639 = vunpack.c.l.b16 %v136
    %v640 = vunpack.c.h.b16 %v136
    %v641 = vunpack.c.l.b16 %v137
    %v642 = vunpack.c.h.b16 %v137
    %v643 = vunpack.c.l.b16 %v138
    %v644 = vunpack.c.h.b16 %v138
    %v645 = vunpack.c.l.b16 %v139
    %v646 = vunpack.c.h.b16 %v139
    %v647 = vunpack.c.l.b16 %v140
    %v648 = vunpack.c.h.b16 %v140
    %v649 = vunpack.c.l.b16 %v141
    %v650 = vunpack.c.h.b16 %v141
    %v651 = vunpack.c.l.b16 %v142
    %v652 = vunpack.c.h.b16 %v142
    %v653 = vunpack.c.l.b16 %v143
    %v654 = vunpack.c.h.b16 %v143
    %v655 = vunpack.c.l.b16 %v144
    %v656 = vunpack.c.h.b16 %v144
    %v657 = vunpack.c.l.b16 %v145
    %v658 = vunpack.c.h.b16 %v145
    %v659 = vunpack.c.l.b16 %v146
    %v660 = vunpack.c.h.b16 %v146
    %v661 = vunpack.c.l.b16 %v147
    %v662 = vunpack.c.h.b16 %v147
    %v663 = vunpack.c.l.b16 %v148
    %v664 = vunpack.c.h.b16 %v148
    %v665 = vunpack.c.l.b16 %v149
    %v666 = vunpack.c.h.b16 %v149
    %v667 = vunpack.c.l.b16 %v150
    %v668 = vunpack.c.h.b16 %v150
    %v669 = vunpack.c.l.b16 %v151
    %v670 = vunpack.c.h.b16 %v151
    %v671 = vunpack.c.l.b16 %v152
    %v672 = vunpack.c.h.b16 %v152
    %v673 = vunpack.c.l.b16 %v153
    %v674 = vunpack.c.h.b16 %v153
    %v675 = vunpack.c.l.b16 %v154
    %v676 = vunpack.c.h.b16 %v154
    %v677 = vunpack.c.l.b16 %v155
    %v678 = vunpack.c.h.b16 %v155
    %v679 = vunpack.c.l.b16 %v156
    %v680 = vunpack.c.h.b16 %v156
    %v681 = vunpack.c.l.b16 %v157
    %v682 = vunpack.c.h.b16 %v157
    %v683 = vunpack.c.l.b16 %v158
    %v684 = vunpack.c.h.b16 %v158
    %v685 = vunpack.c.l.b16 %v159
    %v686 = vunpack.c.h.b16 %v159
    %v687 = vunpack.c.l.b16 %v160
    %v688 = vunpack.c.h.b16 %v160
    %v689 = vunpack.c.l.b16 %v161
    %v690 = vunpack.c.h.b16 %v161
    %v691 = vunpack.c.l.b16 %v162
    %v692 = vunpack.c.h.b16 %v162
    %v693 = vunpack.c.l.b16 %v163
    %v694 = vunpack.c.h.b16 %v163
    %v695 = vunpack.c.l.b16 %v164
    %v696 = vunpack.c.h.b16 %v164
    %v697 = vunpack.c.l.b16 %v165
    %v698 = vunpack.c.h.b16 %v165
    %v699 = vunpack.c.l.b16 %v166
    %v700 = vunpack.c.h.b16 %v166
    %v701 = vunpack.c.l.b16 %v167
    %v702 = vunpack.c.h.b16 %v167
    %v703 = vunpack.c.l.b16 %v168
    %v704 = vunpack.c.h.b16 %v168
    %v705 = vunpack.c.l.b16 %v169
    %v706 = vunpack.c.h.b16 %v169
    %v707 = vunpack.c.l.b16 %v170
    %v708 = vunpack.c.h.b16 %v170
    %v709 = vunpack.c.l.b16 %v171
    %v710 = vunpack.c.h.b16 %v171
    %v711 = vunpack.c.l.b16 %v172
    %v712 = vunpack.c.h.b16 %v172
    %v713 = vunpack.c.l.b16 %v173
    %v714 = vunpack.c.h.b16 %v173
    %v715 = vunpack.c.l.b16 %v174
    %v716 = vunpack.c.h.b16 %v174
    %v717 = vunpack.c.l.b16 %v175
    %v718 = vunpack.c.h.b16 %v175
    %v719 = vunpack.c.l.b16 %v176
    %v720 = vunpack.c.h.b16 %v176
    %v721 = vunpack.c.l.b16 %v177
    %v722 = vunpack.c.h.b16 %v177
    %v723 = vunpack.c.l.b16 %v178
    %v724 = vunpack.c.h.b16 %v178
    %v725 = vunpack.c.l.b16 %v179
    %v726 = vunpack.c.h.b16 %v179
    %v727 = vunpack.c.l.b16 %v180
    %v728 = vunpack.c.h.b16 %v180
    %v729 = vunpack.c.l.b16 %v181
    %v730 = vunpack.c.h.b16 %v181
    %v731 = vunpack.c.l.b16 %v182
    %v732 = vunpack.c.h.b16 %v182
    %v733 = vunpack.c.l.b16 %v183
    %v734 = vunpack.c.h.b16 %v183
    %v735 = vunpack.c.l.b16 %v184
    %v736 = vunpack.c.h.b16 %v184
    %v737 = vunpack.c.l.b16 %v185
    %v738 = vunpack.c.h.b16 %v185
    %v739 = vunpack.c.l.b16 %v186
    %v740 = vunpack.c.h.b16 %v186
    %v741 = vunpack.c.l.b16 %v187
    %v742 = vunpack.c.h.b16 %v187
    %v743 = vunpack.c.l.b16 %v188
    %v744 = vunpack.c.h.b16 %v188
    %v745 = vunpack.c.l.b16 %v189
    %v746 = vunpack.c.h.b16 %v189
    %v747 = vunpack.c.l.b16 %v190
    %v748 = vunpack.c.h.b16 %v190
    %v749 = vunpack.c.l.b16 %v191
    %v750 = vunpack.c.h.b16 %v191
    %v751 = vunpack.c.l.b16 %v192
    %v752 = vunpack.c.h.b16 %v192
    %v753 = vunpack.c.l.b16 %v193
    %v754 = vunpack.c.h.b16 %v193
    %v755 = vunpack.c.l.b16 %v194
    %v756 = vunpack.c.h.b16 %v194
    %v757 = vunpack.c.l.b16 %v195
    %v758 = vunpack.c.h.b16 %v195
    %v759 = vunpack.c.l.b16 %v196
    %v760 = vunpack.c.h.b16 %v196
    %v761 = vunpack.c.l.b16 %v197
    %v762 = vunpack.c.h.b16 %v197
    %v763 = vunpack.c.l.b16 %v198
    %v764 = vunpack.c.h.b16 %v198
    %v765 = vunpack.c.l.b16 %v199
    %v766 = vunpack.c.h.b16 %v199
    %v767 = vunpack.c.l.b16 %v200
    %v768 = vunpack.c.h.b16 %v200
    %v769 = vunpack.c.l.b16 %v201
    %v770 = vunpack.c.h.b16 %v201
    %v771 = vunpack.c.l.b16 %v202
    %v772 = vunpack.c.h.b16 %v202
    %v773 = vunpack.c.l.b16 %v203
    %v774 = vunpack.c.h.b16 %v203
    %v775 = vunpack.c.l.b16 %v204
    %v776 = vunpack.c.h.b16 %v204
    %v777 = vunpack.c.l.b16 %v205
    %v778 = vunpack.c.h.b16 %v205
    %v779 = vunpack.c.l.b16 %v206
    %v780 = vunpack.c.h.b16 %v206
    %v781 = vunpack.c.l.b16 %v207
    %v782 = vunpack.c.h.b16 %v207
    %v783 = vunpack.c.l.b16 %v208
    %v784 = vunpack.c.h.b16 %v208
    %v785 = vunpack.c.l.b16 %v209
    %v786 = vunpack.c.h.b16 %v209
    %v787 = vunpack.c.l.b16 %v210
    %v788 = vunpack.c.h.b16 %v210
    %v789 = vunpack.c.l.b16 %v211
    %v790 = vunpack.c.h.b16 %v211
    %v791 = vunpack.c.l.b16 %v212
    %v792 = vunpack.c.h.b16 %v212
    %v793 = vunpack.c.l.b16 %v213
    %v794 = vunpack.c.h.b16 %v213
    %v795 = vunpack.c.l.b16 %v214
    %v796 = vunpack.c.h.b16 %v214
    %v797 = vunpack.c.l.b16 %v215
    %v798 = vunpack.c.h.b16 %v215
    %v799 = vunpack.c.l.b16 %v216
    %v800 = vunpack.c.h.b16 %v216
    %v801 = vunpack.c.l.b16 %v217
    %v802 = vunpack.c.h.b16 %v217
    %v803 = vunpack.c.l.b16 %v218
    %v804 = vunpack.c.h.b16 %v218
    %v805 = vunpack.c.l.b16 %v219
    %v806 = vunpack.c.h.b16 %v219
    %v807 = vunpack.c.l.b16 %v220
    %v808 = vunpack.c.h.b16 %v220
    %v809 = vunpack.c.l.b16 %v221
    %v810 = vunpack.c.h.b16 %v221
    %v811 = vunpack.c.l.b16 %v222
    %v812 = vunpack.c.h.b16 %v222
    %v813 = vunpack.c.l.b16 %v223
    %v814 = vunpack.c.h.b16 %v223
    %v815 = vunpack.c.l.b16 %v224
    %v816 = vunpack.c.h.b16 %v224
    %v817 = vunpack.c.l.b16 %v225
    %v818 = vunpack.c.h.b16 %v225
    %v819 = vunpack.c.l.b16 %v226
    %v820 = vunpack.c.h.b16 %v226
    %v821 = vunpack.c.l.b16 %v227
    %v822 = vunpack.c.h.b16 %v227
    %v823 = vunpack.c.l.b16 %v228
    %v824 = vunpack.c.h.b16 %v228
    %v825 = vunpack.c.l.b16 %v229
    %v826 = vunpack.c.h.b16 %v229
    %v827 = vunpack.c.l.b16 %v230
    %v828 = vunpack.c.h.b16 %v230
    %v829 = vunpack.c.l.b16 %v231
    %v830 = vunpack.c.h.b16 %v231
    %v831 = vunpack.c.l.b16 %v232
    %v832 = vunpack.c.h.b16 %v232
    %v833 = vunpack.c.l.b16 %v233
    %v834 = vunpack.c.h.b16 %v233
    %v835 = vunpack.c.l.b16 %v234
    %v836 = vunpack.c.h.b16 %v234
    %v837 = vunpack.c.l.b16 %v235
    %v838 = vunpack.c.h.b16 %v235
    %v839 = vunpack.c.l.b16 %v236
    %v840 = vunpack.c.h.b16 %v236
    %v841 = vunpack.c.l.b16 %v237
    %v842 = vunpack.c.h.b16 %v237
    %v843 = vunpack.c.l.b16 %v238
    %v844 = vunpack.c.h.b16 %v238
    %v845 = vunpack.c.l.b16 %v239
    %v846 = vunpack.c.h.b16 %v239
    %v847 = vunpack.c.l.b16 %v240
    %v848 = vunpack.c.h.b16 %v240
    %v849 = vunpack.c.l.b16 %v241
    %v850 = vunpack.c.h.b16 %v241
    %v851 = vunpack.c.l.b16 %v242
    %v852 = vunpack.c.h.b16 %v242
    %v853 = vunpack.c.l.b16 %v243
    %v854 = vunpack.c.h.b16 %v243
    %v855 = vunpack.c.l.b16 %v244
    %v856 = vunpack.c.h.b16 %v244
    %v857 = vunpack.c.l.b16 %v245
    %v858 = vunpack.c.h.b16 %v245
    %v859 = vunpack.c.l.b16 %v246
    %v860 = vunpack.c.h.b16 %v246
    %v861 = vunpack.c.l.b16 %v247
    %v862 = vunpack.c.h.b16 %v247
    %v863 = vunpack.c.l.b16 %v248
    %v864 = vunpack.c.h.b16 %v248
    %v865 = vunpack.c.l.b16 %v249
    %v866 = vunpack.c.h.b16 %v249
    %v867 = vunpack.c.l.b16 %v250
    %v868 = vunpack.c.h.b16 %v250
    %v869 = vunpack.c.l.b16 %v251
    %v870 = vunpack.c.h.b16 %v251
    %v871 = vunpack.c.l.b16 %v252
    %v872 = vunpack.c.h.b16 %v252
    %v873 = vunpack.c.l.b16 %v253
    %v874 = vunpack.c.h.b16 %v253
    %v875 = vunpack.c.l.b16 %v254
    %v876 = vunpack.c.h.b16 %v254
    %v877 = vunpack.c.l.b16 %v255
    %v878 = vunpack.c.h.b16 %v255
    %v879 = vunpack.c.l.b16 %v256
    %v880 = vunpack.c.h.b16 %v256
    %v881 = vunpack.c.l.b16 %v257
    %v882 = vunpack.c.h.b16 %v257
    %v883 = vunpack.c.l.b16 %v258
    %v884 = vunpack.c.h.b16 %v258
    %v885 = vunpack.c.l.b16 %v259
    %v886 = vunpack.c.h.b16 %v259
    %v887 = vunpack.c.l.b16 %v260
    %v888 = vunpack.c.h.b16 %v260
    %v889 = vunpack.c.l.b16 %v261
    %v890 = vunpack.c.h.b16 %v261
    %v891 = vunpack.c.l.b16 %v262
    %v892 = vunpack.c.h.b16 %v262
    %v893 = vunpack.c.l.b16 %v263
    %v894 = vunpack.c.h.b16 %v263
    %v895 = vunpack.c.l.b16 %v264
    %v896 = vunpack.c.h.b16 %v264
    %v897 = vunpack.c.l.b16 %v265
    %v898 = vunpack.c.h.b16 %v265
    %v899 = vunpack.c.l.b16 %v266
    %v900 = vunpack.c.h.b16 %v266
    %v901 = vunpack.c.l.b16 %v267
    %v902 = vunpack.c.h.b16 %v267
    %v903 = vunpack.c.l.b16 %v268
    %v904 = vunpack.c.h.b16 %v268
    %v905 = vunpack.c.l.b16 %v269
    %v906 = vunpack.c.h.b16 %v269
    %v907 = vunpack.c.l.b16 %v270
    %v908 = vunpack.c.h.b16 %v270
    %v909 = vunpack.c.l.b16 %v271
    %v910 = vunpack.c.h.b16 %v271
    %v911 = vunpack.c.l.b16 %v272
    %v912 = vunpack.c.h.b16 %v272
    %v913 = vunpack.c.l.b16 %v273
    %v914 = vunpack.c.h.b16 %v273
    %v915 = vunpack.c.l.b16 %v274
    %v916 = vunpack.c.h.b16 %v274
    %v917 = vunpack.c.l.b16 %v275
    %v918 = vunpack.c.h.b16 %v275
    %v919 = vunpack.c.l.b16 %v276
    %v920 = vunpack.c.h.b16 %v276
    %v921 = vunpack.c.l.b16 %v277
    %v922 = vunpack.c.h.b16 %v277
    %v923 = vpack.c.b16 %v535, %v531
    %v924 = vpack.c.b16 %v536, %v532
    %v925 = vpack.c.b16 %v537, %v533
    %v926 = vpack.c.b16 %v538, %v534
    %v927 = vpack.c.b16 %v543, %v539
    %v928 = vpack.c.b16 %v544, %v540
    %v929 = vpack.c.b16 %v545, %v541
    %v930 = vpack.c.b16 %v546, %v542
    %v931 = vpack.c.b16 %v551, %v547
    %v932 = vpack.c.b16 %v552, %v548
    %v933 = vpack.c.b16 %v553, %v549
    %v934 = vpack.c.b16 %v554, %v550
    %v935 = vpack.c.b16 %v559, %v555
    %v936 = vpack.c.b16 %v560, %v556
    %v937 = vpack.c.b16 %v561, %v557
    %v938 = vpack.c.b16 %v562, %v558
    %v939 = vpack.c.b16 %v567, %v563
    %v940 = vpack.c.b16 %v568, %v564
    %v941 = vpack.c.b16 %v569, %v565
    %v942 = vpack.c.b16 %v570, %v566
    %v943 = vpack.c.b16 %v575, %v571
    %v944 = vpack.c.b16 %v576, %v572
    %v945 = vpack.c.b16 %v577, %v573
    %v946 = vpack.c.b16 %v578, %v574
    %v947 = vpack.c.b16 %v583, %v579
    %v948 = vpack.c.b16 %v584, %v580
    %v949 = vpack.c.b16 %v585, %v581
    %v950 = vpack.c.b16 %v586, %v582
    %v951 = vpack.c.b16 %v591, %v587
    %v952 = vpack.c.b16 %v592, %v588
    %v953 = vpack.c.b16 %v593, %v589
    %v954 = vpack.c.b16 %v594, %v590
    %v955 = vpack.c.b16 %v599, %v595
    %v956 = vpack.c.b16 %v600, %v596
    %v957 = vpack.c.b16 %v601, %v597
    %v958 = vpack.c.b16 %v602, %v598
    %v959 = vpack.c.b16 %v607, %v603
    %v960 = vpack.c.b16 %v608, %v604
    %v961 = vpack.c.b16 %v609, %v605
    %v962 = vpack.c.b16 %v610, %v606
    %v963 = vpack.c.b16 %v615, %v611
    %v964 = vpack.c.b16 %v616, %v612
    %v965 = vpack.c.b16 %v617, %v613
    %v966 = vpack.c.b16 %v618, %v614
    %v967 = vpack.c.b16 %v623, %v619
    %v968 = vpack.c.b16 %v624, %v620
    %v969 = vpack.c.b16 %v625, %v621
    %v970 = vpack.c.b16 %v626, %v622
    %v971 = vpack.c.b16 %v631, %v627
    %v972 = vpack.c.b16 %v632, %v628
    %v973 = vpack.c.b16 %v633, %v629
    %v974 = vpack.c.b16 %v634, %v630
    %v975 = vpack.c.b16 %v639, %v635
    %v976 = vpack.c.b16 %v640, %v636
    %v977 = vpack.c.b16 %v641, %v637
    %v978 = vpack.c.b16 %v642, %v638
    %v979 = vpack.c.b16 %v647, %v643
    %v980 = vpack.c.b16 %v648, %v644
    %v981 = vpack.c.b16 %v649, %v645
    %v982 = vpack.c.b16 %v650, %v646
    %v983 = vpack.c.b16 %v655, %v651
    %v984 = vpack.c.b16 %v656, %v652
    %v985 = vpack.c.b16 %v657, %v653
    %v986 = vpack.c.b16 %v658, %v654
    %v987 = vpack.c.b16 %v663, %v659
    %v988 = vpack.c.b16 %v664, %v660
    %v989 = vpack.c.b16 %v665, %v661
    %v990 = vpack.c.b16 %v666, %v662
    %v991 = vpack.c.b16 %v671, %v667
    %v992 = vpack.c.b16 %v672, %v668
    %v993 = vpack.c.b16 %v673, %v669
    %v994 = vpack.c.b16 %v674, %v670
    %v995 = vpack.c.b16 %v679, %v675
    %v996 = vpack.c.b16 %v680, %v676
    %v997 = vpack.c.b16 %v681, %v677
    %v998 = vpack.c.b16 %v682, %v678
    %v999 = vpack.c.b16 %v687, %v683
    %v1000 = vpack.c.b16 %v688, %v684
    %v1001 = vpack.c.b16 %v689, %v685
    %v1002 = vpack.c.b16 %v690, %v686
    %v1003 = vpack.c.b16 %v695, %v691
    %v1004 = vpack.c.b16 %v696, %v692
    %v1005 = vpack.c.b16 %v697, %v693
    %v1006 = vpack.c.b16 %v698, %v694
    %v1007 = vpack.c.b16 %v703, %v699
    %v1008 = vpack.c.b16 %v704, %v700
    %v1009 = vpack.c.b16 %v705, %v701
    %v1010 = vpack.c.b16 %v706, %v702
    %v1011 = vpack.c.b16 %v711, %v707
    %v1012 = vpack.c.b16 %v712, %v708
    %v1013 = vpack.c.b16 %v713, %v709
    %v1014 = vpack.c.b16 %v714, %v710
    %v1015 = vpack.c.b16 %v719, %v715
    %v1016 = vpack.c.b16 %v720, %v716
    %v1017 = vpack.c.b16 %v721, %v717
    %v1018 = vpack.c.b16 %v722, %v718
    %v1019 = vpack.c.b16 %v727, %v723
    %v1020 = vpack.c.b16 %v728, %v724
    %v1021 = vpack.c.b16 %v729, %v725
    %v1022 = vpack.c.b16 %v730, %v726
    %v1023 = vpack.c.b16 %v735, %v731
    %v1024 = vpack.c.b16 %v736, %v732
    %v1025 = vpack.c.b16 %v737, %v733
    %v1026 = vpack.c.b16 %v738, %v734
    %v1027 = vpack.c.b16 %v743, %v739
    %v1028 = vpack.c.b16 %v744, %v740
    %v1029 = vpack.c.b16 %v745, %v741
    %v1030 = vpack.c.b16 %v746, %v742
    %v1031 = vpack.c.b16 %v751, %v747
    %v1032 = vpack.c.b16 %v752, %v748
    %v1033 = vpack.c.b16 %v753, %v749
    %v1034 = vpack.c.b16 %v754, %v750
    %v1035 = vpack.c.b16 %v759, %v755
    %v1036 = vpack.c.b16 %v760, %v756
    %v1037 = vpack.c.b16 %v761, %v757
    %v1038 = vpack.c.b16 %v762, %v758
    %v1039 = vpack.c.b16 %v767, %v763
    %v1040 = vpack.c.b16 %v768, %v764
    %v1041 = vpack.c.b16 %v769, %v765
    %v1042 = vpack.c.b16 %v770, %v766
    %v1043 = vpack.c.b16 %v775, %v771
    %v1044 = vpack.c.b16 %v776, %v772
    %v1045 = vpack.c.b16 %v777, %v773
    %v1046 = vpack.c.b16 %v778, %v774
    %v1047 = vpack.c.b16 %v783, %v779
    %v1048 = vpack.c.b16 %v784, %v780
    %v1049 = vpack.c.b16 %v785, %v781
    %v1050 = vpack.c.b16 %v786, %v782
    %v1051 = vpack.c.b16 %v791, %v787
    %v1052 = vpack.c.b16 %v792, %v788
    %v1053 = vpack.c.b16 %v793, %v789
    %v1054 = vpack.c.b16 %v794, %v790
    %v1055 = vpack.c.b16 %v799, %v795
    %v1056 = vpack.c.b16 %v800, %v796
    %v1057 = vpack.c.b16 %v801, %v797
    %v1058 = vpack.c.b16 %v802, %v798
    %v1059 = vpack.c.b16 %v807, %v803
    %v1060 = vpack.c.b16 %v808, %v804
    %v1061 = vpack.c.b16 %v809, %v805
    %v1062 = vpack.c.b16 %v810, %v806
    %v1063 = vpack.c.b16 %v815, %v811
    %v1064 = vpack.c.b16 %v816, %v812
    %v1065 = vpack.c.b16 %v817, %v813
    %v1066 = vpack.c.b16 %v818, %v814
    %v1067 = vpack.c.b16 %v823, %v819
    %v1068 = vpack.c.b16 %v824, %v820
    %v1069 = vpack.c.b16 %v825, %v821
    %v1070 = vpack.c.b16 %v826, %v822
    %v1071 = vpack.c.b16 %v831, %v827
    %v1072 = vpack.c.b16 %v832, %v828
    %v1073 = vpack.c.b16 %v833, %v829
    %v1074 = vpack.c.b16 %v834, %v830
    %v1075 = vpack.c.b16 %v839, %v835
    %v1076 = vpack.c.b16 %v840, %v836
    %v1077 = vpack.c.b16 %v841, %v837
    %v1078 = vpack.c.b16 %v842, %v838
    %v1079 = vpack.c.b16 %v847, %v843
    %v1080 = vpack.c.b16 %v848, %v844
    %v1081 = vpack.c.b16 %v849, %v845
    %v1082 = vpack.c.b16 %v850, %v846
    %v1083 = vpack.c.b16 %v855, %v851
    %v1084 = vpack.c.b16 %v856, %v852
    %v1085 = vpack.c.b16 %v857, %v853
    %v1086 = vpack.c.b16 %v858, %v854
    %v1087 = vpack.c.b16 %v863, %v859
    %v1088 = vpack.c.b16 %v864, %v860
    %v1089 = vpack.c.b16 %v865, %v861
    %v1090 = vpack.c.b16 %v866, %v862
    %v1091 = vpack.c.b16 %v871, %v867
    %v1092 = vpack.c.b16 %v872, %v868
    %v1093 = vpack.c.b16 %v873, %v869
    %v1094 = vpack.c.b16 %v874, %v870
    %v1095 = vpack.c.b16 %v879, %v875
    %v1096 = vpack.c.b16 %v880, %v876
    %v1097 = vpack.c.b16 %v881, %v877
    %v1098 = vpack.c.b16 %v882, %v878
    %v1099 = vpack.c.b16 %v887, %v883
    %v1100 = vpack.c.b16 %v888, %v884
    %v1101 = vpack.c.b16 %v889, %v885
    %v1102 = vpack.c.b16 %v890, %v886
    %v1103 = vpack.c.b16 %v895, %v891
    %v1104 = vpack.c.b16 %v896, %v892
    %v1105 = vpack.c.b16 %v897, %v893
    %v1106 = vpack.c.b16 %v898, %v894
    %v1107 = vpack.c.b16 %v903, %v899
    %v1108 = vpack.c.b16 %v904, %v900
    %v1109 = vpack.c.b16 %v905, %v901
    %v1110 = vpack.c.b16 %v906, %v902
    %v1111 = vpack.c.b16 %v911, %v907
    %v1112 = vpack.c.b16 %v912, %v908
    %v1113 = vpack.c.b16 %v913, %v909
    %v1114 = vpack.c.b16 %v914, %v910
    %v1115 = vpack.c.b16 %v919, %v915
    %v1116 = vpack.c.b16 %v920, %v916
    %v1117 = vpack.c.b16 %v921, %v917
    %v1118 = vpack.c.b16 %v922, %v918
    %vm1315 = vcmask 130048
    %v1317 = vsel %vm1315, %v328, 0
    %1319 = vmatprep.subr.bf16.mxu0 %v952
    %1320 = vmatpush1.bf16.msra.mxu0 %v951
    %1321 = vmatprep.subr.bf16.mxu0 %v948
    %1322 = vmatpush1.bf16.msra.mxu0 %v947
    %1323 = vmatprep.subr.bf16.mxu0 %v944
    %1324 = vmatpush1.bf16.msra.mxu0 %v943
    %1325 = vmatprep.subr.bf16.mxu0 %v940
    %1326 = vmatpush1.bf16.msra.mxu0 %v939
    %1327 = vmatprep.subr.bf16.mxu0 %v936
    %1328 = vmatpush1.bf16.msra.mxu0 %v935
    %1329 = vmatprep.subr.bf16.mxu0 %v932
    %1330 = vmatpush1.bf16.msra.mxu0 %v931
    %1331 = vmatprep.subr.bf16.mxu0 %v928
    %1332 = vmatpush1.bf16.msra.mxu0 %v927
    %1333 = vmatprep.subr.bf16.mxu0 %v924
    %1334 = vmatpush1.bf16.msra.mxu0 %v923
    %1335 = vmatprep.subr.bf16.mxu0 %v984
    %1336 = vmatpush2.bf16.msra.mxu0 %v983
    %1337 = vmatprep.subr.bf16.mxu0 %v980
    %1338 = vmatpush2.bf16.msra.mxu0 %v979
    %1339 = vmatprep.subr.bf16.mxu0 %v976
    %1340 = vmatpush2.bf16.msra.mxu0 %v975
    %1341 = vmatprep.subr.bf16.mxu0 %v972
    %1342 = vmatpush2.bf16.msra.mxu0 %v971
    %1343 = vmatprep.subr.bf16.mxu0 %v968
    %1344 = vmatpush2.bf16.msra.mxu0 %v967
    %1345 = vmatprep.subr.bf16.mxu0 %v964
    %1346 = vmatpush2.bf16.msra.mxu0 %v963
    %1347 = vmatprep.subr.bf16.mxu0 %v960
    %1348 = vmatpush2.bf16.msra.mxu0 %v959
    %1349 = vmatprep.subr.bf16.mxu0 %v956
    %1350 = vmatpush2.bf16.msra.mxu0 %v955
    %1351 = vmatprep.mubr.bf16.mxu0 %v323
    %1352 = vmatmul.mubr.bf16.gmra.mxu0 %v322
    %v1353 = vpop.f32.mrf.mxu0
    %v1354 = vadd.f32 %v283, %v1353
    %v1355 = vpop.f32.mrf.mxu0
    %v1356 = vadd.f32 %v287, %v1355
    %v1357 = vpop.f32.mrf.mxu0
    %v1358 = vadd.f32 %v283, %v1357
    %v1359 = vpop.f32.mrf.mxu0
    %v1360 = vadd.f32 %v287, %v1359
    %1361 = vdwg.mxu0
    %1362 = vmatprep.subr.bf16.mxu0 %v1016
    %1363 = vmatpush1.bf16.msra.mxu0 %v1015
    %1364 = vmatprep.subr.bf16.mxu0 %v1012
    %1365 = vmatpush1.bf16.msra.mxu0 %v1011
    %1366 = vmatprep.subr.bf16.mxu0 %v1008
    %1367 = vmatpush1.bf16.msra.mxu0 %v1007
    %1368 = vmatprep.subr.bf16.mxu0 %v1004
    %1369 = vmatpush1.bf16.msra.mxu0 %v1003
    %1370 = vmatprep.subr.bf16.mxu0 %v1000
    %1371 = vmatpush1.bf16.msra.mxu0 %v999
    %1372 = vmatprep.subr.bf16.mxu0 %v996
    %1373 = vmatpush1.bf16.msra.mxu0 %v995
    %1374 = vmatprep.subr.bf16.mxu0 %v992
    %1375 = vmatpush1.bf16.msra.mxu0 %v991
    %1376 = vmatprep.subr.bf16.mxu0 %v988
    %1377 = vmatpush1.bf16.msra.mxu0 %v987
    %1378 = vmatprep.subr.bf16.mxu0 %v1048
    %1379 = vmatpush2.bf16.msra.mxu0 %v1047
    %1380 = vmatprep.subr.bf16.mxu0 %v1044
    %1381 = vmatpush2.bf16.msra.mxu0 %v1043
    %1382 = vmatprep.subr.bf16.mxu0 %v1040
    %1383 = vmatpush2.bf16.msra.mxu0 %v1039
    %1384 = vmatprep.subr.bf16.mxu0 %v1036
    %1385 = vmatpush2.bf16.msra.mxu0 %v1035
    %1386 = vmatprep.subr.bf16.mxu0 %v1032
    %1387 = vmatpush2.bf16.msra.mxu0 %v1031
    %1388 = vmatprep.subr.bf16.mxu0 %v1028
    %1389 = vmatpush2.bf16.msra.mxu0 %v1027
    %1390 = vmatprep.subr.bf16.mxu0 %v1024
    %1391 = vmatpush2.bf16.msra.mxu0 %v1023
    %1392 = vmatprep.subr.bf16.mxu0 %v1020
    %1393 = vmatpush2.bf16.msra.mxu0 %v1019
    %1394 = vmatprep.mubr.bf16.mxu0 %v325
    %1395 = vmatmul.mubr.bf16.gmra.mxu0 %v324
    %v1396 = vpop.f32.mrf.mxu0
    %v1397 = vadd.f32 %v1354, %v1396
    %v1398 = vpop.f32.mrf.mxu0
    %v1399 = vadd.f32 %v1356, %v1398
    %v1400 = vpop.f32.mrf.mxu0
    %v1401 = vadd.f32 %v1358, %v1400
    %v1402 = vpop.f32.mrf.mxu0
    %v1403 = vadd.f32 %v1360, %v1402
    %1404 = vdwg.mxu0
    %1405 = vmatprep.subr.bf16.mxu0 %v1080
    %1406 = vmatpush1.bf16.msra.mxu0 %v1079
    %1407 = vmatprep.subr.bf16.mxu0 %v1076
    %1408 = vmatpush1.bf16.msra.mxu0 %v1075
    %1409 = vmatprep.subr.bf16.mxu0 %v1072
    %1410 = vmatpush1.bf16.msra.mxu0 %v1071
    %1411 = vmatprep.subr.bf16.mxu0 %v1068
    %1412 = vmatpush1.bf16.msra.mxu0 %v1067
    %1413 = vmatprep.subr.bf16.mxu0 %v1064
    %1414 = vmatpush1.bf16.msra.mxu0 %v1063
    %1415 = vmatprep.subr.bf16.mxu0 %v1060
    %1416 = vmatpush1.bf16.msra.mxu0 %v1059
    %1417 = vmatprep.subr.bf16.mxu0 %v1056
    %1418 = vmatpush1.bf16.msra.mxu0 %v1055
    %1419 = vmatprep.subr.bf16.mxu0 %v1052
    %1420 = vmatpush1.bf16.msra.mxu0 %v1051
    %1421 = vmatprep.subr.bf16.mxu0 %v1112
    %1422 = vmatpush2.bf16.msra.mxu0 %v1111
    %1423 = vmatprep.subr.bf16.mxu0 %v1108
    %1424 = vmatpush2.bf16.msra.mxu0 %v1107
    %1425 = vmatprep.subr.bf16.mxu0 %v1104
    %1426 = vmatpush2.bf16.msra.mxu0 %v1103
    %1427 = vmatprep.subr.bf16.mxu0 %v1100
    %1428 = vmatpush2.bf16.msra.mxu0 %v1099
    %1429 = vmatprep.subr.bf16.mxu0 %v1096
    %1430 = vmatpush2.bf16.msra.mxu0 %v1095
    %1431 = vmatprep.subr.bf16.mxu0 %v1092
    %1432 = vmatpush2.bf16.msra.mxu0 %v1091
    %1433 = vmatprep.subr.bf16.mxu0 %v1088
    %1434 = vmatpush2.bf16.msra.mxu0 %v1087
    %1435 = vmatprep.subr.bf16.mxu0 %v1084
    %1436 = vmatpush2.bf16.msra.mxu0 %v1083
    %1437 = vmatprep.mubr.bf16.mxu0 %v327
    %1438 = vmatmul.mubr.bf16.gmra.mxu0 %v326
    %v1439 = vpop.f32.mrf.mxu0
    %v1440 = vadd.f32 %v1397, %v1439
    %v1441 = vpop.f32.mrf.mxu0
    %v1442 = vadd.f32 %v1399, %v1441
    %v1443 = vpop.f32.mrf.mxu0
    %v1444 = vadd.f32 %v1401, %v1443
    %v1445 = vpop.f32.mrf.mxu0
    %v1446 = vadd.f32 %v1403, %v1445
    %1447 = vdwg.mxu0
    %1448 = vmatprep.subr.bf16.mxu0 0
    %1449 = vmatpush1.bf16.msra.mxu0 0
    %1450 = vmatprep.subr.bf16.mxu0 0
    %1451 = vmatpush1.bf16.msra.mxu0 0
    %1452 = vmatprep.subr.bf16.mxu0 0
    %1453 = vmatpush1.bf16.msra.mxu0 0
    %1454 = vmatprep.subr.bf16.mxu0 0
    %1455 = vmatpush1.bf16.msra.mxu0 0
    %1456 = vmatprep.subr.bf16.mxu0 0
    %1457 = vmatpush1.bf16.msra.mxu0 0
    %1458 = vmatprep.subr.bf16.mxu0 0
    %1459 = vmatpush1.bf16.msra.mxu0 0
    %1460 = vmatprep.subr.bf16.mxu0 0
    %1461 = vmatpush1.bf16.msra.mxu0 0
    %1462 = vmatprep.subr.bf16.mxu0 %v1116
    %1463 = vmatpush1.bf16.msra.mxu0 %v1115
    %1464 = vmatprep.subr.bf16.mxu0 0
    %1465 = vmatpush2.bf16.msra.mxu0 0
    %1466 = vmatprep.subr.bf16.mxu0 0
    %1467 = vmatpush2.bf16.msra.mxu0 0
    %1468 = vmatprep.subr.bf16.mxu0 0
    %1469 = vmatpush2.bf16.msra.mxu0 0
    %1470 = vmatprep.subr.bf16.mxu0 0
    %1471 = vmatpush2.bf16.msra.mxu0 0
    %1472 = vmatprep.subr.bf16.mxu0 0
    %1473 = vmatpush2.bf16.msra.mxu0 0
    %1474 = vmatprep.subr.bf16.mxu0 0
    %1475 = vmatpush2.bf16.msra.mxu0 0
    %1476 = vmatprep.subr.bf16.mxu0 0
    %1477 = vmatpush2.bf16.msra.mxu0 0
    %1478 = vmatprep.subr.bf16.mxu0 0
    %1479 = vmatpush2.bf16.msra.mxu0 0
    %1480 = vmatprep.mubr.bf16.mxu0 0
    %1481 = vmatmul.mubr.bf16.gmra.mxu0 %v1317
    %v1482 = vpop.f32.mrf.mxu0
    %v1483 = vadd.f32 %v1440, %v1482
    %v1484 = vpop.f32.mrf.mxu0
    %v1485 = vadd.f32 %v1442, %v1484
    %v1486 = vpop.f32.mrf.mxu0
    %v1487 = vadd.f32 %v1444, %v1486
    %v1488 = vpop.f32.mrf.mxu0
    %v1489 = vadd.f32 %v1446, %v1488
    %1490 = vdwg.mxu0
    %1491 = vmatprep.subr.bf16.mxu0 %v954
    %1492 = vmatpush1.bf16.msra.mxu0 %v953
    %1493 = vmatprep.subr.bf16.mxu0 %v950
    %1494 = vmatpush1.bf16.msra.mxu0 %v949
    %1495 = vmatprep.subr.bf16.mxu0 %v946
    %1496 = vmatpush1.bf16.msra.mxu0 %v945
    %1497 = vmatprep.subr.bf16.mxu0 %v942
    %1498 = vmatpush1.bf16.msra.mxu0 %v941
    %1499 = vmatprep.subr.bf16.mxu0 %v938
    %1500 = vmatpush1.bf16.msra.mxu0 %v937
    %1501 = vmatprep.subr.bf16.mxu0 %v934
    %1502 = vmatpush1.bf16.msra.mxu0 %v933
    %1503 = vmatprep.subr.bf16.mxu0 %v930
    %1504 = vmatpush1.bf16.msra.mxu0 %v929
    %1505 = vmatprep.subr.bf16.mxu0 %v926
    %1506 = vmatpush1.bf16.msra.mxu0 %v925
    %1507 = vmatprep.subr.bf16.mxu0 %v986
    %1508 = vmatpush2.bf16.msra.mxu0 %v985
    %1509 = vmatprep.subr.bf16.mxu0 %v982
    %1510 = vmatpush2.bf16.msra.mxu0 %v981
    %1511 = vmatprep.subr.bf16.mxu0 %v978
    %1512 = vmatpush2.bf16.msra.mxu0 %v977
    %1513 = vmatprep.subr.bf16.mxu0 %v974
    %1514 = vmatpush2.bf16.msra.mxu0 %v973
    %1515 = vmatprep.subr.bf16.mxu0 %v970
    %1516 = vmatpush2.bf16.msra.mxu0 %v969
    %1517 = vmatprep.subr.bf16.mxu0 %v966
    %1518 = vmatpush2.bf16.msra.mxu0 %v965
    %1519 = vmatprep.subr.bf16.mxu0 %v962
    %1520 = vmatpush2.bf16.msra.mxu0 %v961
    %1521 = vmatprep.subr.bf16.mxu0 %v958
    %1522 = vmatpush2.bf16.msra.mxu0 %v957
    %1523 = vmatprep.mubr.bf16.mxu0 %v323
    %1524 = vmatmul.mubr.bf16.gmra.mxu0 %v322
    %v1525 = vpop.f32.mrf.mxu0
    %v1526 = vadd.f32 %v291, %v1525
    %v1527 = vpop.f32.mrf.mxu0
    %v1528 = vadd.f32 %v295, %v1527
    %v1529 = vpop.f32.mrf.mxu0
    %v1530 = vadd.f32 %v291, %v1529
    %v1531 = vpop.f32.mrf.mxu0
    %v1532 = vadd.f32 %v295, %v1531
    %1533 = vdwg.mxu0
    %1534 = vmatprep.subr.bf16.mxu0 %v1018
    %1535 = vmatpush1.bf16.msra.mxu0 %v1017
    %1536 = vmatprep.subr.bf16.mxu0 %v1014
    %1537 = vmatpush1.bf16.msra.mxu0 %v1013
    %1538 = vmatprep.subr.bf16.mxu0 %v1010
    %1539 = vmatpush1.bf16.msra.mxu0 %v1009
    %1540 = vmatprep.subr.bf16.mxu0 %v1006
    %1541 = vmatpush1.bf16.msra.mxu0 %v1005
    %1542 = vmatprep.subr.bf16.mxu0 %v1002
    %1543 = vmatpush1.bf16.msra.mxu0 %v1001
    %1544 = vmatprep.subr.bf16.mxu0 %v998
    %1545 = vmatpush1.bf16.msra.mxu0 %v997
    %1546 = vmatprep.subr.bf16.mxu0 %v994
    %1547 = vmatpush1.bf16.msra.mxu0 %v993
    %1548 = vmatprep.subr.bf16.mxu0 %v990
    %1549 = vmatpush1.bf16.msra.mxu0 %v989
    %1550 = vmatprep.subr.bf16.mxu0 %v1050
    %1551 = vmatpush2.bf16.msra.mxu0 %v1049
    %1552 = vmatprep.subr.bf16.mxu0 %v1046
    %1553 = vmatpush2.bf16.msra.mxu0 %v1045
    %1554 = vmatprep.subr.bf16.mxu0 %v1042
    %1555 = vmatpush2.bf16.msra.mxu0 %v1041
    %1556 = vmatprep.subr.bf16.mxu0 %v1038
    %1557 = vmatpush2.bf16.msra.mxu0 %v1037
    %1558 = vmatprep.subr.bf16.mxu0 %v1034
    %1559 = vmatpush2.bf16.msra.mxu0 %v1033
    %1560 = vmatprep.subr.bf16.mxu0 %v1030
    %1561 = vmatpush2.bf16.msra.mxu0 %v1029
    %1562 = vmatprep.subr.bf16.mxu0 %v1026
    %1563 = vmatpush2.bf16.msra.mxu0 %v1025
    %1564 = vmatprep.subr.bf16.mxu0 %v1022
    %1565 = vmatpush2.bf16.msra.mxu0 %v1021
    %1566 = vmatprep.mubr.bf16.mxu0 %v325
    %1567 = vmatmul.mubr.bf16.gmra.mxu0 %v324
    %v1568 = vpop.f32.mrf.mxu0
    %v1569 = vadd.f32 %v1526, %v1568
    %v1570 = vpop.f32.mrf.mxu0
    %v1571 = vadd.f32 %v1528, %v1570
    %v1572 = vpop.f32.mrf.mxu0
    %v1573 = vadd.f32 %v1530, %v1572
    %v1574 = vpop.f32.mrf.mxu0
    %v1575 = vadd.f32 %v1532, %v1574
    %1576 = vdwg.mxu0
    %1577 = vmatprep.subr.bf16.mxu0 %v1082
    %1578 = vmatpush1.bf16.msra.mxu0 %v1081
    %1579 = vmatprep.subr.bf16.mxu0 %v1078
    %1580 = vmatpush1.bf16.msra.mxu0 %v1077
    %1581 = vmatprep.subr.bf16.mxu0 %v1074
    %1582 = vmatpush1.bf16.msra.mxu0 %v1073
    %1583 = vmatprep.subr.bf16.mxu0 %v1070
    %1584 = vmatpush1.bf16.msra.mxu0 %v1069
    %1585 = vmatprep.subr.bf16.mxu0 %v1066
    %1586 = vmatpush1.bf16.msra.mxu0 %v1065
    %1587 = vmatprep.subr.bf16.mxu0 %v1062
    %1588 = vmatpush1.bf16.msra.mxu0 %v1061
    %1589 = vmatprep.subr.bf16.mxu0 %v1058
    %1590 = vmatpush1.bf16.msra.mxu0 %v1057
    %1591 = vmatprep.subr.bf16.mxu0 %v1054
    %1592 = vmatpush1.bf16.msra.mxu0 %v1053
    %1593 = vmatprep.subr.bf16.mxu0 %v1114
    %1594 = vmatpush2.bf16.msra.mxu0 %v1113
    %1595 = vmatprep.subr.bf16.mxu0 %v1110
    %1596 = vmatpush2.bf16.msra.mxu0 %v1109
    %1597 = vmatprep.subr.bf16.mxu0 %v1106
    %1598 = vmatpush2.bf16.msra.mxu0 %v1105
    %1599 = vmatprep.subr.bf16.mxu0 %v1102
    %1600 = vmatpush2.bf16.msra.mxu0 %v1101
    %1601 = vmatprep.subr.bf16.mxu0 %v1098
    %1602 = vmatpush2.bf16.msra.mxu0 %v1097
    %1603 = vmatprep.subr.bf16.mxu0 %v1094
    %1604 = vmatpush2.bf16.msra.mxu0 %v1093
    %1605 = vmatprep.subr.bf16.mxu0 %v1090
    %1606 = vmatpush2.bf16.msra.mxu0 %v1089
    %1607 = vmatprep.subr.bf16.mxu0 %v1086
    %1608 = vmatpush2.bf16.msra.mxu0 %v1085
    %1609 = vmatprep.mubr.bf16.mxu0 %v327
    %1610 = vmatmul.mubr.bf16.gmra.mxu0 %v326
    %v1611 = vpop.f32.mrf.mxu0
    %v1612 = vadd.f32 %v1569, %v1611
    %v1613 = vpop.f32.mrf.mxu0
    %v1614 = vadd.f32 %v1571, %v1613
    %v1615 = vpop.f32.mrf.mxu0
    %v1616 = vadd.f32 %v1573, %v1615
    %v1617 = vpop.f32.mrf.mxu0
    %v1618 = vadd.f32 %v1575, %v1617
    %1619 = vdwg.mxu0
    %1620 = vmatprep.subr.bf16.mxu0 0
    %1621 = vmatpush1.bf16.msra.mxu0 0
    %1622 = vmatprep.subr.bf16.mxu0 0
    %1623 = vmatpush1.bf16.msra.mxu0 0
    %1624 = vmatprep.subr.bf16.mxu0 0
    %1625 = vmatpush1.bf16.msra.mxu0 0
    %1626 = vmatprep.subr.bf16.mxu0 0
    %1627 = vmatpush1.bf16.msra.mxu0 0
    %1628 = vmatprep.subr.bf16.mxu0 0
    %1629 = vmatpush1.bf16.msra.mxu0 0
    %1630 = vmatprep.subr.bf16.mxu0 0
    %1631 = vmatpush1.bf16.msra.mxu0 0
    %1632 = vmatprep.subr.bf16.mxu0 0
    %1633 = vmatpush1.bf16.msra.mxu0 0
    %1634 = vmatprep.subr.bf16.mxu0 %v1118
    %1635 = vmatpush1.bf16.msra.mxu0 %v1117
    %1636 = vmatprep.subr.bf16.mxu0 0
    %1637 = vmatpush2.bf16.msra.mxu0 0
    %1638 = vmatprep.subr.bf16.mxu0 0
    %1639 = vmatpush2.bf16.msra.mxu0 0
    %1640 = vmatprep.subr.bf16.mxu0 0
    %1641 = vmatpush2.bf16.msra.mxu0 0
    %1642 = vmatprep.subr.bf16.mxu0 0
    %1643 = vmatpush2.bf16.msra.mxu0 0
    %1644 = vmatprep.subr.bf16.mxu0 0
    %1645 = vmatpush2.bf16.msra.mxu0 0
    %1646 = vmatprep.subr.bf16.mxu0 0
    %1647 = vmatpush2.bf16.msra.mxu0 0
    %1648 = vmatprep.subr.bf16.mxu0 0
    %1649 = vmatpush2.bf16.msra.mxu0 0
    %1650 = vmatprep.subr.bf16.mxu0 0
    %1651 = vmatpush2.bf16.msra.mxu0 0
    %1652 = vmatprep.mubr.bf16.mxu0 0
    %1653 = vmatmul.mubr.bf16.gmra.mxu0 %v1317
    %v1654 = vpop.f32.mrf.mxu0
    %v1655 = vadd.f32 %v1612, %v1654
    %v1656 = vpop.f32.mrf.mxu0
    %v1657 = vadd.f32 %v1614, %v1656
    %v1658 = vpop.f32.mrf.mxu0
    %v1659 = vadd.f32 %v1616, %v1658
    %v1660 = vpop.f32.mrf.mxu0
    %v1661 = vadd.f32 %v1618, %v1660
    %1662 = vdwg.mxu0
    %v1663 = vmax.f32 %v1483, 0.0
    %v1664 = vmax.f32 %v1485, 0.0
    %v1665 = vmax.f32 %v1655, 0.0
    %v1666 = vmax.f32 %v1657, 0.0
    %v1667 = vmax.f32 %v1487, 0.0
    %v1668 = vmax.f32 %v1489, 0.0
    %v1669 = vmax.f32 %v1659, 0.0
    %v1670 = vmax.f32 %v1661, 0.0
    %v1671 = vpack.c.bf16 %v1667, %v1663
    %v1672 = vpack.c.bf16 %v1668, %v1664
    %v1673 = vpack.c.bf16 %v1669, %v1665
    %v1674 = vpack.c.bf16 %v1670, %v1666
    %v1675 = vld [vmem:[#allocation4] sm:$0xff]
    %v1676 = vld [vmem:[#allocation4 + $0x8] sm:$0xff]
    %v1677 = vld [vmem:[#allocation4 + $0x10] sm:$0xff]
    %v1678 = vld [vmem:[#allocation4 + $0x18] sm:$0xff]
    %v1679 = vld [vmem:[#allocation4 + $0x20] sm:$0xff]
    %v1680 = vld [vmem:[#allocation4 + $0x28] sm:$0xff]
    %v1681 = vld [vmem:[#allocation4 + $0x30] sm:$0xff]
    %v1682 = vld [vmem:[#allocation4 + $0x38] sm:$0xff]
    %v1683 = vld [vmem:[#allocation4 + $0x40] sm:$0xff]
    %v1684 = vld [vmem:[#allocation4 + $0x48] sm:$0xff]
    %v1685 = vld [vmem:[#allocation4 + $0x50] sm:$0xff]
    %v1686 = vld [vmem:[#allocation4 + $0x58] sm:$0xff]
    %v1687 = vld [vmem:[#allocation4 + $0x60] sm:$0xff]
    %v1688 = vld [vmem:[#allocation4 + $0x68] sm:$0xff]
    %v1689 = vld [vmem:[#allocation4 + $0x70] sm:$0xff]
    %v1690 = vld [vmem:[#allocation4 + $0x78] sm:$0xff]
    %v1691 = vld [vmem:[#allocation4 + $0x80] sm:$0xff]
    %v1692 = vld [vmem:[#allocation4 + $0x88] sm:$0xff]
    %v1693 = vld [vmem:[#allocation4 + $0x90] sm:$0xff]
    %v1694 = vld [vmem:[#allocation4 + $0x98] sm:$0xff]
    %v1695 = vld [vmem:[#allocation4 + $0xa0] sm:$0xff]
    %v1696 = vld [vmem:[#allocation4 + $0xa8] sm:$0xff]
    %v1697 = vld [vmem:[#allocation4 + $0xb0] sm:$0xff]
    %v1698 = vld [vmem:[#allocation4 + $0xb8] sm:$0xff]
    %v1699 = vld [vmem:[#allocation4 + $0xc0] sm:$0xff]
    %v1700 = vld [vmem:[#allocation4 + $0xc8] sm:$0xff]
    %v1701 = vld [vmem:[#allocation4 + $0xd0] sm:$0xff]
    %v1702 = vld [vmem:[#allocation4 + $0xd8] sm:$0xff]
    %v1703 = vld [vmem:[#allocation4 + $0xe0] sm:$0xff]
    %v1704 = vld [vmem:[#allocation4 + $0xe8] sm:$0xff]
    %v1705 = vld [vmem:[#allocation4 + $0xf0] sm:$0xff]
    %v1706 = vld [vmem:[#allocation4 + $0xf8] sm:$0xff]
    %v1707 = vld [vmem:[#allocation4 + $0x100] sm:$0xff]
    %v1708 = vld [vmem:[#allocation4 + $0x108] sm:$0xff]
    %v1709 = vld [vmem:[#allocation4 + $0x110] sm:$0xff]
    %v1710 = vld [vmem:[#allocation4 + $0x118] sm:$0xff]
    %v1711 = vld [vmem:[#allocation4 + $0x120] sm:$0xff]
    %v1712 = vld [vmem:[#allocation4 + $0x128] sm:$0xff]
    %v1713 = vld [vmem:[#allocation4 + $0x130] sm:$0xff]
    %v1714 = vld [vmem:[#allocation4 + $0x138] sm:$0xff]
    %v1715 = vld [vmem:[#allocation4 + $0x140] sm:$0xff]
    %v1716 = vld [vmem:[#allocation4 + $0x148] sm:$0xff]
    %v1717 = vld [vmem:[#allocation4 + $0x150] sm:$0xff]
    %v1718 = vld [vmem:[#allocation4 + $0x158] sm:$0xff]
    %v1719 = vld [vmem:[#allocation4 + $0x160] sm:$0xff]
    %v1720 = vld [vmem:[#allocation4 + $0x168] sm:$0xff]
    %v1721 = vld [vmem:[#allocation4 + $0x170] sm:$0xff]
    %v1722 = vld [vmem:[#allocation4 + $0x178] sm:$0xff]
    %v1723 = vld [vmem:[#allocation4 + $0x180] sm:$0xff]
    %v1724 = vld [vmem:[#allocation4 + $0x188] sm:$0xff]
    %v1725 = vld [vmem:[#allocation4 + $0x190] sm:$0xff]
    %v1726 = vld [vmem:[#allocation4 + $0x198] sm:$0xff]
    %v1727 = vld [vmem:[#allocation4 + $0x1a0] sm:$0xff]
    %v1728 = vld [vmem:[#allocation4 + $0x1a8] sm:$0xff]
    %v1729 = vld [vmem:[#allocation4 + $0x1b0] sm:$0xff]
    %v1730 = vld [vmem:[#allocation4 + $0x1b8] sm:$0xff]
    %v1731 = vld [vmem:[#allocation4 + $0x1c0] sm:$0xff]
    %v1732 = vld [vmem:[#allocation4 + $0x1c8] sm:$0xff]
    %v1733 = vld [vmem:[#allocation4 + $0x1d0] sm:$0xff]
    %v1734 = vld [vmem:[#allocation4 + $0x1d8] sm:$0xff]
    %v1735 = vld [vmem:[#allocation4 + $0x1e0] sm:$0xff]
    %v1736 = vld [vmem:[#allocation4 + $0x1e8] sm:$0xff]
    %v1737 = vld [vmem:[#allocation4 + $0x1f0] sm:$0xff]
    %v1738 = vld [vmem:[#allocation4 + $0x1f8] sm:$0xff]
    %v1739 = vld [vmem:[#allocation4 + $0x200] sm:$0xff]
    %v1740 = vld [vmem:[#allocation4 + $0x208] sm:$0xff]
    %v1741 = vld [vmem:[#allocation4 + $0x210] sm:$0xff]
    %v1742 = vld [vmem:[#allocation4 + $0x218] sm:$0xff]
    %v1743 = vld [vmem:[#allocation4 + $0x220] sm:$0xff]
    %v1744 = vld [vmem:[#allocation4 + $0x228] sm:$0xff]
    %v1745 = vld [vmem:[#allocation4 + $0x230] sm:$0xff]
    %v1746 = vld [vmem:[#allocation4 + $0x238] sm:$0xff]
    %v1747 = vld [vmem:[#allocation4 + $0x240] sm:$0xff]
    %v1748 = vld [vmem:[#allocation4 + $0x248] sm:$0xff]
    %v1749 = vld [vmem:[#allocation4 + $0x250] sm:$0xff]
    %v1750 = vld [vmem:[#allocation4 + $0x258] sm:$0xff]
    %v1751 = vld [vmem:[#allocation4 + $0x260] sm:$0xff]
    %v1752 = vld [vmem:[#allocation4 + $0x268] sm:$0xff]
    %v1753 = vld [vmem:[#allocation4 + $0x270] sm:$0xff]
    %v1754 = vld [vmem:[#allocation4 + $0x278] sm:$0xff]
    %v1755 = vld [vmem:[#allocation4 + $0x280] sm:$0xff]
    %v1756 = vld [vmem:[#allocation4 + $0x288] sm:$0xff]
    %v1757 = vld [vmem:[#allocation4 + $0x290] sm:$0xff]
    %v1758 = vld [vmem:[#allocation4 + $0x298] sm:$0xff]
    %v1759 = vld [vmem:[#allocation4 + $0x2a0] sm:$0xff]
    %v1760 = vld [vmem:[#allocation4 + $0x2a8] sm:$0xff]
    %v1761 = vld [vmem:[#allocation4 + $0x2b0] sm:$0xff]
    %v1762 = vld [vmem:[#allocation4 + $0x2b8] sm:$0xff]
    %v1763 = vld [vmem:[#allocation4 + $0x2c0] sm:$0xff]
    %v1764 = vld [vmem:[#allocation4 + $0x2c8] sm:$0xff]
    %v1765 = vld [vmem:[#allocation4 + $0x2d0] sm:$0xff]
    %v1766 = vld [vmem:[#allocation4 + $0x2d8] sm:$0xff]
    %v1767 = vld [vmem:[#allocation4 + $0x2e0] sm:$0xff]
    %v1768 = vld [vmem:[#allocation4 + $0x2e8] sm:$0xff]
    %v1769 = vld [vmem:[#allocation4 + $0x2f0] sm:$0xff]
    %v1770 = vld [vmem:[#allocation4 + $0x2f8] sm:$0xff]
    %v1771 = vld [vmem:[#allocation4 + $0x300] sm:$0xff]
    %v1772 = vld [vmem:[#allocation4 + $0x308] sm:$0xff]
    %v1773 = vld [vmem:[#allocation4 + $0x310] sm:$0xff]
    %v1774 = vld [vmem:[#allocation4 + $0x318] sm:$0xff]
    %v1775 = vld [vmem:[#allocation4 + $0x320] sm:$0xff]
    %v1776 = vld [vmem:[#allocation4 + $0x328] sm:$0xff]
    %v1777 = vld [vmem:[#allocation4 + $0x330] sm:$0xff]
    %v1778 = vld [vmem:[#allocation4 + $0x338] sm:$0xff]
    %v1779 = vld [vmem:[#allocation4 + $0x340] sm:$0xff]
    %v1780 = vld [vmem:[#allocation4 + $0x348] sm:$0xff]
    %v1781 = vld [vmem:[#allocation4 + $0x350] sm:$0xff]
    %v1782 = vld [vmem:[#allocation4 + $0x358] sm:$0xff]
    %v1783 = vld [vmem:[#allocation4 + $0x360] sm:$0xff]
    %v1784 = vld [vmem:[#allocation4 + $0x368] sm:$0xff]
    %v1785 = vld [vmem:[#allocation4 + $0x370] sm:$0xff]
    %v1786 = vld [vmem:[#allocation4 + $0x378] sm:$0xff]
    %v1787 = vld [vmem:[#allocation4 + $0x380] sm:$0xff]
    %v1788 = vld [vmem:[#allocation4 + $0x388] sm:$0xff]
    %v1789 = vld [vmem:[#allocation4 + $0x390] sm:$0xff]
    %v1790 = vld [vmem:[#allocation4 + $0x398] sm:$0xff]
    %v1791 = vld [vmem:[#allocation4 + $0x3a0] sm:$0xff]
    %v1792 = vld [vmem:[#allocation4 + $0x3a8] sm:$0xff]
    %v1793 = vld [vmem:[#allocation4 + $0x3b0] sm:$0xff]
    %v1794 = vld [vmem:[#allocation4 + $0x3b8] sm:$0xff]
    %v1795 = vld [vmem:[#allocation4 + $0x3c0] sm:$0xff]
    %v1796 = vld [vmem:[#allocation4 + $0x3c8] sm:$0xff]
    %v1797 = vld [vmem:[#allocation4 + $0x3d0] sm:$0xff]
    %v1798 = vld [vmem:[#allocation4 + $0x3d8] sm:$0xff]
    %v1799 = vld [vmem:[#allocation4 + $0x3e0] sm:$0xff]
    %v1800 = vld [vmem:[#allocation4 + $0x3e8] sm:$0xff]
    %v1801 = vld [vmem:[#allocation4 + $0x3f0] sm:$0xff]
    %v1802 = vld [vmem:[#allocation4 + $0x3f8] sm:$0xff]
    %v1803 = vld [vmem:[%s4] sm:$0xf]
    %v1805 = vlaneseq
    %v1806 = vshrl.u32 %v1805, 7
    %v1807 = vsub.s32 0, %v1806
    %v1808 = vrot.slane %v1803, %v1807
    %v1809 = vlaneseq
    %v1810 = vshrl.u32 %v1809, 7
    %v1811 = vsub.s32 1, %v1810
    %v1812 = vrot.slane %v1803, %v1811
    %v1813 = vlaneseq
    %v1814 = vshrl.u32 %v1813, 7
    %v1815 = vsub.s32 2, %v1814
    %v1816 = vrot.slane %v1803, %v1815
    %v1817 = vlaneseq
    %v1818 = vshrl.u32 %v1817, 7
    %v1819 = vsub.s32 3, %v1818
    %v1820 = vrot.slane %v1803, %v1819
    %v1953 = vunpack.c.l.b16 %v1675
    %v1954 = vunpack.c.h.b16 %v1675
    %v1955 = vunpack.c.l.b16 %v1676
    %v1956 = vunpack.c.h.b16 %v1676
    %v1957 = vunpack.c.l.b16 %v1677
    %v1958 = vunpack.c.h.b16 %v1677
    %v1959 = vunpack.c.l.b16 %v1678
    %v1960 = vunpack.c.h.b16 %v1678
    %v1961 = vunpack.c.l.b16 %v1679
    %v1962 = vunpack.c.h.b16 %v1679
    %v1963 = vunpack.c.l.b16 %v1680
    %v1964 = vunpack.c.h.b16 %v1680
    %v1965 = vunpack.c.l.b16 %v1681
    %v1966 = vunpack.c.h.b16 %v1681
    %v1967 = vunpack.c.l.b16 %v1682
    %v1968 = vunpack.c.h.b16 %v1682
    %v1969 = vunpack.c.l.b16 %v1683
    %v1970 = vunpack.c.h.b16 %v1683
    %v1971 = vunpack.c.l.b16 %v1684
    %v1972 = vunpack.c.h.b16 %v1684
    %v1973 = vunpack.c.l.b16 %v1685
    %v1974 = vunpack.c.h.b16 %v1685
    %v1975 = vunpack.c.l.b16 %v1686
    %v1976 = vunpack.c.h.b16 %v1686
    %v1977 = vunpack.c.l.b16 %v1687
    %v1978 = vunpack.c.h.b16 %v1687
    %v1979 = vunpack.c.l.b16 %v1688
    %v1980 = vunpack.c.h.b16 %v1688
    %v1981 = vunpack.c.l.b16 %v1689
    %v1982 = vunpack.c.h.b16 %v1689
    %v1983 = vunpack.c.l.b16 %v1690
    %v1984 = vunpack.c.h.b16 %v1690
    %v1985 = vunpack.c.l.b16 %v1691
    %v1986 = vunpack.c.h.b16 %v1691
    %v1987 = vunpack.c.l.b16 %v1692
    %v1988 = vunpack.c.h.b16 %v1692
    %v1989 = vunpack.c.l.b16 %v1693
    %v1990 = vunpack.c.h.b16 %v1693
    %v1991 = vunpack.c.l.b16 %v1694
    %v1992 = vunpack.c.h.b16 %v1694
    %v1993 = vunpack.c.l.b16 %v1695
    %v1994 = vunpack.c.h.b16 %v1695
    %v1995 = vunpack.c.l.b16 %v1696
    %v1996 = vunpack.c.h.b16 %v1696
    %v1997 = vunpack.c.l.b16 %v1697
    %v1998 = vunpack.c.h.b16 %v1697
    %v1999 = vunpack.c.l.b16 %v1698
    %v2000 = vunpack.c.h.b16 %v1698
    %v2001 = vunpack.c.l.b16 %v1699
    %v2002 = vunpack.c.h.b16 %v1699
    %v2003 = vunpack.c.l.b16 %v1700
    %v2004 = vunpack.c.h.b16 %v1700
    %v2005 = vunpack.c.l.b16 %v1701
    %v2006 = vunpack.c.h.b16 %v1701
    %v2007 = vunpack.c.l.b16 %v1702
    %v2008 = vunpack.c.h.b16 %v1702
    %v2009 = vunpack.c.l.b16 %v1703
    %v2010 = vunpack.c.h.b16 %v1703
    %v2011 = vunpack.c.l.b16 %v1704
    %v2012 = vunpack.c.h.b16 %v1704
    %v2013 = vunpack.c.l.b16 %v1705
    %v2014 = vunpack.c.h.b16 %v1705
    %v2015 = vunpack.c.l.b16 %v1706
    %v2016 = vunpack.c.h.b16 %v1706
    %v2017 = vunpack.c.l.b16 %v1707
    %v2018 = vunpack.c.h.b16 %v1707
    %v2019 = vunpack.c.l.b16 %v1708
    %v2020 = vunpack.c.h.b16 %v1708
    %v2021 = vunpack.c.l.b16 %v1709
    %v2022 = vunpack.c.h.b16 %v1709
    %v2023 = vunpack.c.l.b16 %v1710
    %v2024 = vunpack.c.h.b16 %v1710
    %v2025 = vunpack.c.l.b16 %v1711
    %v2026 = vunpack.c.h.b16 %v1711
    %v2027 = vunpack.c.l.b16 %v1712
    %v2028 = vunpack.c.h.b16 %v1712
    %v2029 = vunpack.c.l.b16 %v1713
    %v2030 = vunpack.c.h.b16 %v1713
    %v2031 = vunpack.c.l.b16 %v1714
    %v2032 = vunpack.c.h.b16 %v1714
    %v2033 = vunpack.c.l.b16 %v1715
    %v2034 = vunpack.c.h.b16 %v1715
    %v2035 = vunpack.c.l.b16 %v1716
    %v2036 = vunpack.c.h.b16 %v1716
    %v2037 = vunpack.c.l.b16 %v1717
    %v2038 = vunpack.c.h.b16 %v1717
    %v2039 = vunpack.c.l.b16 %v1718
    %v2040 = vunpack.c.h.b16 %v1718
    %v2041 = vunpack.c.l.b16 %v1719
    %v2042 = vunpack.c.h.b16 %v1719
    %v2043 = vunpack.c.l.b16 %v1720
    %v2044 = vunpack.c.h.b16 %v1720
    %v2045 = vunpack.c.l.b16 %v1721
    %v2046 = vunpack.c.h.b16 %v1721
    %v2047 = vunpack.c.l.b16 %v1722
    %v2048 = vunpack.c.h.b16 %v1722
    %v2049 = vunpack.c.l.b16 %v1723
    %v2050 = vunpack.c.h.b16 %v1723
    %v2051 = vunpack.c.l.b16 %v1724
    %v2052 = vunpack.c.h.b16 %v1724
    %v2053 = vunpack.c.l.b16 %v1725
    %v2054 = vunpack.c.h.b16 %v1725
    %v2055 = vunpack.c.l.b16 %v1726
    %v2056 = vunpack.c.h.b16 %v1726
    %v2057 = vunpack.c.l.b16 %v1727
    %v2058 = vunpack.c.h.b16 %v1727
    %v2059 = vunpack.c.l.b16 %v1728
    %v2060 = vunpack.c.h.b16 %v1728
    %v2061 = vunpack.c.l.b16 %v1729
    %v2062 = vunpack.c.h.b16 %v1729
    %v2063 = vunpack.c.l.b16 %v1730
    %v2064 = vunpack.c.h.b16 %v1730
    %v2065 = vunpack.c.l.b16 %v1731
    %v2066 = vunpack.c.h.b16 %v1731
    %v2067 = vunpack.c.l.b16 %v1732
    %v2068 = vunpack.c.h.b16 %v1732
    %v2069 = vunpack.c.l.b16 %v1733
    %v2070 = vunpack.c.h.b16 %v1733
    %v2071 = vunpack.c.l.b16 %v1734
    %v2072 = vunpack.c.h.b16 %v1734
    %v2073 = vunpack.c.l.b16 %v1735
    %v2074 = vunpack.c.h.b16 %v1735
    %v2075 = vunpack.c.l.b16 %v1736
    %v2076 = vunpack.c.h.b16 %v1736
    %v2077 = vunpack.c.l.b16 %v1737
    %v2078 = vunpack.c.h.b16 %v1737
    %v2079 = vunpack.c.l.b16 %v1738
    %v2080 = vunpack.c.h.b16 %v1738
    %v2081 = vunpack.c.l.b16 %v1739
    %v2082 = vunpack.c.h.b16 %v1739
    %v2083 = vunpack.c.l.b16 %v1740
    %v2084 = vunpack.c.h.b16 %v1740
    %v2085 = vunpack.c.l.b16 %v1741
    %v2086 = vunpack.c.h.b16 %v1741
    %v2087 = vunpack.c.l.b16 %v1742
    %v2088 = vunpack.c.h.b16 %v1742
    %v2089 = vunpack.c.l.b16 %v1743
    %v2090 = vunpack.c.h.b16 %v1743
    %v2091 = vunpack.c.l.b16 %v1744
    %v2092 = vunpack.c.h.b16 %v1744
    %v2093 = vunpack.c.l.b16 %v1745
    %v2094 = vunpack.c.h.b16 %v1745
    %v2095 = vunpack.c.l.b16 %v1746
    %v2096 = vunpack.c.h.b16 %v1746
    %v2097 = vunpack.c.l.b16 %v1747
    %v2098 = vunpack.c.h.b16 %v1747
    %v2099 = vunpack.c.l.b16 %v1748
    %v2100 = vunpack.c.h.b16 %v1748
    %v2101 = vunpack.c.l.b16 %v1749
    %v2102 = vunpack.c.h.b16 %v1749
    %v2103 = vunpack.c.l.b16 %v1750
    %v2104 = vunpack.c.h.b16 %v1750
    %v2105 = vunpack.c.l.b16 %v1751
    %v2106 = vunpack.c.h.b16 %v1751
    %v2107 = vunpack.c.l.b16 %v1752
    %v2108 = vunpack.c.h.b16 %v1752
    %v2109 = vunpack.c.l.b16 %v1753
    %v2110 = vunpack.c.h.b16 %v1753
    %v2111 = vunpack.c.l.b16 %v1754
    %v2112 = vunpack.c.h.b16 %v1754
    %v2113 = vunpack.c.l.b16 %v1755
    %v2114 = vunpack.c.h.b16 %v1755
    %v2115 = vunpack.c.l.b16 %v1756
    %v2116 = vunpack.c.h.b16 %v1756
    %v2117 = vunpack.c.l.b16 %v1757
    %v2118 = vunpack.c.h.b16 %v1757
    %v2119 = vunpack.c.l.b16 %v1758
    %v2120 = vunpack.c.h.b16 %v1758
    %v2121 = vunpack.c.l.b16 %v1759
    %v2122 = vunpack.c.h.b16 %v1759
    %v2123 = vunpack.c.l.b16 %v1760
    %v2124 = vunpack.c.h.b16 %v1760
    %v2125 = vunpack.c.l.b16 %v1761
    %v2126 = vunpack.c.h.b16 %v1761
    %v2127 = vunpack.c.l.b16 %v1762
    %v2128 = vunpack.c.h.b16 %v1762
    %v2129 = vunpack.c.l.b16 %v1763
    %v2130 = vunpack.c.h.b16 %v1763
    %v2131 = vunpack.c.l.b16 %v1764
    %v2132 = vunpack.c.h.b16 %v1764
    %v2133 = vunpack.c.l.b16 %v1765
    %v2134 = vunpack.c.h.b16 %v1765
    %v2135 = vunpack.c.l.b16 %v1766
    %v2136 = vunpack.c.h.b16 %v1766
    %v2137 = vunpack.c.l.b16 %v1767
    %v2138 = vunpack.c.h.b16 %v1767
    %v2139 = vunpack.c.l.b16 %v1768
    %v2140 = vunpack.c.h.b16 %v1768
    %v2141 = vunpack.c.l.b16 %v1769
    %v2142 = vunpack.c.h.b16 %v1769
    %v2143 = vunpack.c.l.b16 %v1770
    %v2144 = vunpack.c.h.b16 %v1770
    %v2145 = vunpack.c.l.b16 %v1771
    %v2146 = vunpack.c.h.b16 %v1771
    %v2147 = vunpack.c.l.b16 %v1772
    %v2148 = vunpack.c.h.b16 %v1772
    %v2149 = vunpack.c.l.b16 %v1773
    %v2150 = vunpack.c.h.b16 %v1773
    %v2151 = vunpack.c.l.b16 %v1774
    %v2152 = vunpack.c.h.b16 %v1774
    %v2153 = vunpack.c.l.b16 %v1775
    %v2154 = vunpack.c.h.b16 %v1775
    %v2155 = vunpack.c.l.b16 %v1776
    %v2156 = vunpack.c.h.b16 %v1776
    %v2157 = vunpack.c.l.b16 %v1777
    %v2158 = vunpack.c.h.b16 %v1777
    %v2159 = vunpack.c.l.b16 %v1778
    %v2160 = vunpack.c.h.b16 %v1778
    %v2161 = vunpack.c.l.b16 %v1779
    %v2162 = vunpack.c.h.b16 %v1779
    %v2163 = vunpack.c.l.b16 %v1780
    %v2164 = vunpack.c.h.b16 %v1780
    %v2165 = vunpack.c.l.b16 %v1781
    %v2166 = vunpack.c.h.b16 %v1781
    %v2167 = vunpack.c.l.b16 %v1782
    %v2168 = vunpack.c.h.b16 %v1782
    %v2169 = vunpack.c.l.b16 %v1783
    %v2170 = vunpack.c.h.b16 %v1783
    %v2171 = vunpack.c.l.b16 %v1784
    %v2172 = vunpack.c.h.b16 %v1784
    %v2173 = vunpack.c.l.b16 %v1785
    %v2174 = vunpack.c.h.b16 %v1785
    %v2175 = vunpack.c.l.b16 %v1786
    %v2176 = vunpack.c.h.b16 %v1786
    %v2177 = vunpack.c.l.b16 %v1787
    %v2178 = vunpack.c.h.b16 %v1787
    %v2179 = vunpack.c.l.b16 %v1788
    %v2180 = vunpack.c.h.b16 %v1788
    %v2181 = vunpack.c.l.b16 %v1789
    %v2182 = vunpack.c.h.b16 %v1789
    %v2183 = vunpack.c.l.b16 %v1790
    %v2184 = vunpack.c.h.b16 %v1790
    %v2185 = vunpack.c.l.b16 %v1791
    %v2186 = vunpack.c.h.b16 %v1791
    %v2187 = vunpack.c.l.b16 %v1792
    %v2188 = vunpack.c.h.b16 %v1792
    %v2189 = vunpack.c.l.b16 %v1793
    %v2190 = vunpack.c.h.b16 %v1793
    %v2191 = vunpack.c.l.b16 %v1794
    %v2192 = vunpack.c.h.b16 %v1794
    %v2193 = vunpack.c.l.b16 %v1795
    %v2194 = vunpack.c.h.b16 %v1795
    %v2195 = vunpack.c.l.b16 %v1796
    %v2196 = vunpack.c.h.b16 %v1796
    %v2197 = vunpack.c.l.b16 %v1797
    %v2198 = vunpack.c.h.b16 %v1797
    %v2199 = vunpack.c.l.b16 %v1798
    %v2200 = vunpack.c.h.b16 %v1798
    %v2201 = vunpack.c.l.b16 %v1799
    %v2202 = vunpack.c.h.b16 %v1799
    %v2203 = vunpack.c.l.b16 %v1800
    %v2204 = vunpack.c.h.b16 %v1800
    %v2205 = vunpack.c.l.b16 %v1801
    %v2206 = vunpack.c.h.b16 %v1801
    %v2207 = vunpack.c.l.b16 %v1802
    %v2208 = vunpack.c.h.b16 %v1802
    %v2209 = vpack.c.b16 %v1957, %v1953
    %v2210 = vpack.c.b16 %v1958, %v1954
    %v2211 = vpack.c.b16 %v1959, %v1955
    %v2212 = vpack.c.b16 %v1960, %v1956
    %v2213 = vpack.c.b16 %v1965, %v1961
    %v2214 = vpack.c.b16 %v1966, %v1962
    %v2215 = vpack.c.b16 %v1967, %v1963
    %v2216 = vpack.c.b16 %v1968, %v1964
    %v2217 = vpack.c.b16 %v1973, %v1969
    %v2218 = vpack.c.b16 %v1974, %v1970
    %v2219 = vpack.c.b16 %v1975, %v1971
    %v2220 = vpack.c.b16 %v1976, %v1972
    %v2221 = vpack.c.b16 %v1981, %v1977
    %v2222 = vpack.c.b16 %v1982, %v1978
    %v2223 = vpack.c.b16 %v1983, %v1979
    %v2224 = vpack.c.b16 %v1984, %v1980
    %v2225 = vpack.c.b16 %v1989, %v1985
    %v2226 = vpack.c.b16 %v1990, %v1986
    %v2227 = vpack.c.b16 %v1991, %v1987
    %v2228 = vpack.c.b16 %v1992, %v1988
    %v2229 = vpack.c.b16 %v1997, %v1993
    %v2230 = vpack.c.b16 %v1998, %v1994
    %v2231 = vpack.c.b16 %v1999, %v1995
    %v2232 = vpack.c.b16 %v2000, %v1996
    %v2233 = vpack.c.b16 %v2005, %v2001
    %v2234 = vpack.c.b16 %v2006, %v2002
    %v2235 = vpack.c.b16 %v2007, %v2003
    %v2236 = vpack.c.b16 %v2008, %v2004
    %v2237 = vpack.c.b16 %v2013, %v2009
    %v2238 = vpack.c.b16 %v2014, %v2010
    %v2239 = vpack.c.b16 %v2015, %v2011
    %v2240 = vpack.c.b16 %v2016, %v2012
    %v2241 = vpack.c.b16 %v2021, %v2017
    %v2242 = vpack.c.b16 %v2022, %v2018
    %v2243 = vpack.c.b16 %v2023, %v2019
    %v2244 = vpack.c.b16 %v2024, %v2020
    %v2245 = vpack.c.b16 %v2029, %v2025
    %v2246 = vpack.c.b16 %v2030, %v2026
    %v2247 = vpack.c.b16 %v2031, %v2027
    %v2248 = vpack.c.b16 %v2032, %v2028
    %v2249 = vpack.c.b16 %v2037, %v2033
    %v2250 = vpack.c.b16 %v2038, %v2034
    %v2251 = vpack.c.b16 %v2039, %v2035
    %v2252 = vpack.c.b16 %v2040, %v2036
    %v2253 = vpack.c.b16 %v2045, %v2041
    %v2254 = vpack.c.b16 %v2046, %v2042
    %v2255 = vpack.c.b16 %v2047, %v2043
    %v2256 = vpack.c.b16 %v2048, %v2044
    %v2257 = vpack.c.b16 %v2053, %v2049
    %v2258 = vpack.c.b16 %v2054, %v2050
    %v2259 = vpack.c.b16 %v2055, %v2051
    %v2260 = vpack.c.b16 %v2056, %v2052
    %v2261 = vpack.c.b16 %v2061, %v2057
    %v2262 = vpack.c.b16 %v2062, %v2058
    %v2263 = vpack.c.b16 %v2063, %v2059
    %v2264 = vpack.c.b16 %v2064, %v2060
    %v2265 = vpack.c.b16 %v2069, %v2065
    %v2266 = vpack.c.b16 %v2070, %v2066
    %v2267 = vpack.c.b16 %v2071, %v2067
    %v2268 = vpack.c.b16 %v2072, %v2068
    %v2269 = vpack.c.b16 %v2077, %v2073
    %v2270 = vpack.c.b16 %v2078, %v2074
    %v2271 = vpack.c.b16 %v2079, %v2075
    %v2272 = vpack.c.b16 %v2080, %v2076
    %v2273 = vpack.c.b16 %v2085, %v2081
    %v2274 = vpack.c.b16 %v2086, %v2082
    %v2275 = vpack.c.b16 %v2087, %v2083
    %v2276 = vpack.c.b16 %v2088, %v2084
    %v2277 = vpack.c.b16 %v2093, %v2089
    %v2278 = vpack.c.b16 %v2094, %v2090
    %v2279 = vpack.c.b16 %v2095, %v2091
    %v2280 = vpack.c.b16 %v2096, %v2092
    %v2281 = vpack.c.b16 %v2101, %v2097
    %v2282 = vpack.c.b16 %v2102, %v2098
    %v2283 = vpack.c.b16 %v2103, %v2099
    %v2284 = vpack.c.b16 %v2104, %v2100
    %v2285 = vpack.c.b16 %v2109, %v2105
    %v2286 = vpack.c.b16 %v2110, %v2106
    %v2287 = vpack.c.b16 %v2111, %v2107
    %v2288 = vpack.c.b16 %v2112, %v2108
    %v2289 = vpack.c.b16 %v2117, %v2113
    %v2290 = vpack.c.b16 %v2118, %v2114
    %v2291 = vpack.c.b16 %v2119, %v2115
    %v2292 = vpack.c.b16 %v2120, %v2116
    %v2293 = vpack.c.b16 %v2125, %v2121
    %v2294 = vpack.c.b16 %v2126, %v2122
    %v2295 = vpack.c.b16 %v2127, %v2123
    %v2296 = vpack.c.b16 %v2128, %v2124
    %v2297 = vpack.c.b16 %v2133, %v2129
    %v2298 = vpack.c.b16 %v2134, %v2130
    %v2299 = vpack.c.b16 %v2135, %v2131
    %v2300 = vpack.c.b16 %v2136, %v2132
    %v2301 = vpack.c.b16 %v2141, %v2137
    %v2302 = vpack.c.b16 %v2142, %v2138
    %v2303 = vpack.c.b16 %v2143, %v2139
    %v2304 = vpack.c.b16 %v2144, %v2140
    %v2305 = vpack.c.b16 %v2149, %v2145
    %v2306 = vpack.c.b16 %v2150, %v2146
    %v2307 = vpack.c.b16 %v2151, %v2147
    %v2308 = vpack.c.b16 %v2152, %v2148
    %v2309 = vpack.c.b16 %v2157, %v2153
    %v2310 = vpack.c.b16 %v2158, %v2154
    %v2311 = vpack.c.b16 %v2159, %v2155
    %v2312 = vpack.c.b16 %v2160, %v2156
    %v2313 = vpack.c.b16 %v2165, %v2161
    %v2314 = vpack.c.b16 %v2166, %v2162
    %v2315 = vpack.c.b16 %v2167, %v2163
    %v2316 = vpack.c.b16 %v2168, %v2164
    %v2317 = vpack.c.b16 %v2173, %v2169
    %v2318 = vpack.c.b16 %v2174, %v2170
    %v2319 = vpack.c.b16 %v2175, %v2171
    %v2320 = vpack.c.b16 %v2176, %v2172
    %v2321 = vpack.c.b16 %v2181, %v2177
    %v2322 = vpack.c.b16 %v2182, %v2178
    %v2323 = vpack.c.b16 %v2183, %v2179
    %v2324 = vpack.c.b16 %v2184, %v2180
    %v2325 = vpack.c.b16 %v2189, %v2185
    %v2326 = vpack.c.b16 %v2190, %v2186
    %v2327 = vpack.c.b16 %v2191, %v2187
    %v2328 = vpack.c.b16 %v2192, %v2188
    %v2329 = vpack.c.b16 %v2197, %v2193
    %v2330 = vpack.c.b16 %v2198, %v2194
    %v2331 = vpack.c.b16 %v2199, %v2195
    %v2332 = vpack.c.b16 %v2200, %v2196
    %v2333 = vpack.c.b16 %v2205, %v2201
    %v2334 = vpack.c.b16 %v2206, %v2202
    %v2335 = vpack.c.b16 %v2207, %v2203
    %v2336 = vpack.c.b16 %v2208, %v2204
    %2465 = vmatprep.subr.bf16.mxu0 %v2238
    %2466 = vmatpush1.bf16.msra.mxu0 %v2237
    %2467 = vmatprep.subr.bf16.mxu0 %v2234
    %2468 = vmatpush1.bf16.msra.mxu0 %v2233
    %2469 = vmatprep.subr.bf16.mxu0 %v2230
    %2470 = vmatpush1.bf16.msra.mxu0 %v2229
    %2471 = vmatprep.subr.bf16.mxu0 %v2226
    %2472 = vmatpush1.bf16.msra.mxu0 %v2225
    %2473 = vmatprep.subr.bf16.mxu0 %v2222
    %2474 = vmatpush1.bf16.msra.mxu0 %v2221
    %2475 = vmatprep.subr.bf16.mxu0 %v2218
    %2476 = vmatpush1.bf16.msra.mxu0 %v2217
    %2477 = vmatprep.subr.bf16.mxu0 %v2214
    %2478 = vmatpush1.bf16.msra.mxu0 %v2213
    %2479 = vmatprep.subr.bf16.mxu0 %v2210
    %2480 = vmatpush1.bf16.msra.mxu0 %v2209
    %2481 = vmatprep.subr.bf16.mxu0 %v2270
    %2482 = vmatpush2.bf16.msra.mxu0 %v2269
    %2483 = vmatprep.subr.bf16.mxu0 %v2266
    %2484 = vmatpush2.bf16.msra.mxu0 %v2265
    %2485 = vmatprep.subr.bf16.mxu0 %v2262
    %2486 = vmatpush2.bf16.msra.mxu0 %v2261
    %2487 = vmatprep.subr.bf16.mxu0 %v2258
    %2488 = vmatpush2.bf16.msra.mxu0 %v2257
    %2489 = vmatprep.subr.bf16.mxu0 %v2254
    %2490 = vmatpush2.bf16.msra.mxu0 %v2253
    %2491 = vmatprep.subr.bf16.mxu0 %v2250
    %2492 = vmatpush2.bf16.msra.mxu0 %v2249
    %2493 = vmatprep.subr.bf16.mxu0 %v2246
    %2494 = vmatpush2.bf16.msra.mxu0 %v2245
    %2495 = vmatprep.subr.bf16.mxu0 %v2242
    %2496 = vmatpush2.bf16.msra.mxu0 %v2241
    %2497 = vmatprep.mubr.bf16.mxu0 %v1672
    %2498 = vmatmul.mubr.bf16.gmra.mxu0 %v1671
    %v2499 = vpop.f32.mrf.mxu0
    %v2500 = vadd.f32 %v1808, %v2499
    %v2501 = vpop.f32.mrf.mxu0
    %v2502 = vadd.f32 %v1812, %v2501
    %v2503 = vpop.f32.mrf.mxu0
    %v2504 = vadd.f32 %v1808, %v2503
    %v2505 = vpop.f32.mrf.mxu0
    %v2506 = vadd.f32 %v1812, %v2505
    %2507 = vdwg.mxu0
    %2508 = vmatprep.subr.bf16.mxu0 %v2302
    %2509 = vmatpush1.bf16.msra.mxu0 %v2301
    %2510 = vmatprep.subr.bf16.mxu0 %v2298
    %2511 = vmatpush1.bf16.msra.mxu0 %v2297
    %2512 = vmatprep.subr.bf16.mxu0 %v2294
    %2513 = vmatpush1.bf16.msra.mxu0 %v2293
    %2514 = vmatprep.subr.bf16.mxu0 %v2290
    %2515 = vmatpush1.bf16.msra.mxu0 %v2289
    %2516 = vmatprep.subr.bf16.mxu0 %v2286
    %2517 = vmatpush1.bf16.msra.mxu0 %v2285
    %2518 = vmatprep.subr.bf16.mxu0 %v2282
    %2519 = vmatpush1.bf16.msra.mxu0 %v2281
    %2520 = vmatprep.subr.bf16.mxu0 %v2278
    %2521 = vmatpush1.bf16.msra.mxu0 %v2277
    %2522 = vmatprep.subr.bf16.mxu0 %v2274
    %2523 = vmatpush1.bf16.msra.mxu0 %v2273
    %2524 = vmatprep.subr.bf16.mxu0 %v2334
    %2525 = vmatpush2.bf16.msra.mxu0 %v2333
    %2526 = vmatprep.subr.bf16.mxu0 %v2330
    %2527 = vmatpush2.bf16.msra.mxu0 %v2329
    %2528 = vmatprep.subr.bf16.mxu0 %v2326
    %2529 = vmatpush2.bf16.msra.mxu0 %v2325
    %2530 = vmatprep.subr.bf16.mxu0 %v2322
    %2531 = vmatpush2.bf16.msra.mxu0 %v2321
    %2532 = vmatprep.subr.bf16.mxu0 %v2318
    %2533 = vmatpush2.bf16.msra.mxu0 %v2317
    %2534 = vmatprep.subr.bf16.mxu0 %v2314
    %2535 = vmatpush2.bf16.msra.mxu0 %v2313
    %2536 = vmatprep.subr.bf16.mxu0 %v2310
    %2537 = vmatpush2.bf16.msra.mxu0 %v2309
    %2538 = vmatprep.subr.bf16.mxu0 %v2306
    %2539 = vmatpush2.bf16.msra.mxu0 %v2305
    %2540 = vmatprep.mubr.bf16.mxu0 %v1674
    %2541 = vmatmul.mubr.bf16.gmra.mxu0 %v1673
    %v2542 = vpop.f32.mrf.mxu0
    %v2543 = vadd.f32 %v2500, %v2542
    %v2544 = vpop.f32.mrf.mxu0
    %v2545 = vadd.f32 %v2502, %v2544
    %v2546 = vpop.f32.mrf.mxu0
    %v2547 = vadd.f32 %v2504, %v2546
    %v2548 = vpop.f32.mrf.mxu0
    %v2549 = vadd.f32 %v2506, %v2548
    %2550 = vdwg.mxu0
    %2551 = vmatprep.subr.bf16.mxu0 %v2240
    %2552 = vmatpush1.bf16.msra.mxu0 %v2239
    %2553 = vmatprep.subr.bf16.mxu0 %v2236
    %2554 = vmatpush1.bf16.msra.mxu0 %v2235
    %2555 = vmatprep.subr.bf16.mxu0 %v2232
    %2556 = vmatpush1.bf16.msra.mxu0 %v2231
    %2557 = vmatprep.subr.bf16.mxu0 %v2228
    %2558 = vmatpush1.bf16.msra.mxu0 %v2227
    %2559 = vmatprep.subr.bf16.mxu0 %v2224
    %2560 = vmatpush1.bf16.msra.mxu0 %v2223
    %2561 = vmatprep.subr.bf16.mxu0 %v2220
    %2562 = vmatpush1.bf16.msra.mxu0 %v2219
    %2563 = vmatprep.subr.bf16.mxu0 %v2216
    %2564 = vmatpush1.bf16.msra.mxu0 %v2215
    %2565 = vmatprep.subr.bf16.mxu0 %v2212
    %2566 = vmatpush1.bf16.msra.mxu0 %v2211
    %2567 = vmatprep.subr.bf16.mxu0 %v2272
    %2568 = vmatpush2.bf16.msra.mxu0 %v2271
    %2569 = vmatprep.subr.bf16.mxu0 %v2268
    %2570 = vmatpush2.bf16.msra.mxu0 %v2267
    %2571 = vmatprep.subr.bf16.mxu0 %v2264
    %2572 = vmatpush2.bf16.msra.mxu0 %v2263
    %2573 = vmatprep.subr.bf16.mxu0 %v2260
    %2574 = vmatpush2.bf16.msra.mxu0 %v2259
    %2575 = vmatprep.subr.bf16.mxu0 %v2256
    %2576 = vmatpush2.bf16.msra.mxu0 %v2255
    %2577 = vmatprep.subr.bf16.mxu0 %v2252
    %2578 = vmatpush2.bf16.msra.mxu0 %v2251
    %2579 = vmatprep.subr.bf16.mxu0 %v2248
    %2580 = vmatpush2.bf16.msra.mxu0 %v2247
    %2581 = vmatprep.subr.bf16.mxu0 %v2244
    %2582 = vmatpush2.bf16.msra.mxu0 %v2243
    %2583 = vmatprep.mubr.bf16.mxu0 %v1672
    %2584 = vmatmul.mubr.bf16.gmra.mxu0 %v1671
    %v2585 = vpop.f32.mrf.mxu0
    %v2586 = vadd.f32 %v1816, %v2585
    %v2587 = vpop.f32.mrf.mxu0
    %v2588 = vadd.f32 %v1820, %v2587
    %v2589 = vpop.f32.mrf.mxu0
    %v2590 = vadd.f32 %v1816, %v2589
    %v2591 = vpop.f32.mrf.mxu0
    %v2592 = vadd.f32 %v1820, %v2591
    %2593 = vdwg.mxu0
    %2594 = vmatprep.subr.bf16.mxu0 %v2304
    %2595 = vmatpush1.bf16.msra.mxu0 %v2303
    %2596 = vmatprep.subr.bf16.mxu0 %v2300
    %2597 = vmatpush1.bf16.msra.mxu0 %v2299
    %2598 = vmatprep.subr.bf16.mxu0 %v2296
    %2599 = vmatpush1.bf16.msra.mxu0 %v2295
    %2600 = vmatprep.subr.bf16.mxu0 %v2292
    %2601 = vmatpush1.bf16.msra.mxu0 %v2291
    %2602 = vmatprep.subr.bf16.mxu0 %v2288
    %2603 = vmatpush1.bf16.msra.mxu0 %v2287
    %2604 = vmatprep.subr.bf16.mxu0 %v2284
    %2605 = vmatpush1.bf16.msra.mxu0 %v2283
    %2606 = vmatprep.subr.bf16.mxu0 %v2280
    %2607 = vmatpush1.bf16.msra.mxu0 %v2279
    %2608 = vmatprep.subr.bf16.mxu0 %v2276
    %2609 = vmatpush1.bf16.msra.mxu0 %v2275
    %2610 = vmatprep.subr.bf16.mxu0 %v2336
    %2611 = vmatpush2.bf16.msra.mxu0 %v2335
    %2612 = vmatprep.subr.bf16.mxu0 %v2332
    %2613 = vmatpush2.bf16.msra.mxu0 %v2331
    %2614 = vmatprep.subr.bf16.mxu0 %v2328
    %2615 = vmatpush2.bf16.msra.mxu0 %v2327
    %2616 = vmatprep.subr.bf16.mxu0 %v2324
    %2617 = vmatpush2.bf16.msra.mxu0 %v2323
    %2618 = vmatprep.subr.bf16.mxu0 %v2320
    %2619 = vmatpush2.bf16.msra.mxu0 %v2319
    %2620 = vmatprep.subr.bf16.mxu0 %v2316
    %2621 = vmatpush2.bf16.msra.mxu0 %v2315
    %2622 = vmatprep.subr.bf16.mxu0 %v2312
    %2623 = vmatpush2.bf16.msra.mxu0 %v2311
    %2624 = vmatprep.subr.bf16.mxu0 %v2308
    %2625 = vmatpush2.bf16.msra.mxu0 %v2307
    %2626 = vmatprep.mubr.bf16.mxu0 %v1674
    %2627 = vmatmul.mubr.bf16.gmra.mxu0 %v1673
    %v2628 = vpop.f32.mrf.mxu0
    %v2629 = vadd.f32 %v2586, %v2628
    %v2630 = vpop.f32.mrf.mxu0
    %v2631 = vadd.f32 %v2588, %v2630
    %v2632 = vpop.f32.mrf.mxu0
    %v2633 = vadd.f32 %v2590, %v2632
    %v2634 = vpop.f32.mrf.mxu0
    %v2635 = vadd.f32 %v2592, %v2634
    %2636 = vdwg.mxu0
    %v2637 = vmax.f32 %v2543, 0.0
    %v2638 = vmax.f32 %v2545, 0.0
    %v2639 = vmax.f32 %v2629, 0.0
    %v2640 = vmax.f32 %v2631, 0.0
    %v2641 = vmax.f32 %v2547, 0.0
    %v2642 = vmax.f32 %v2549, 0.0
    %v2643 = vmax.f32 %v2633, 0.0
    %v2644 = vmax.f32 %v2635, 0.0
    %v2645 = vpack.c.bf16 %v2641, %v2637
    %v2646 = vpack.c.bf16 %v2642, %v2638
    %v2647 = vpack.c.bf16 %v2643, %v2639
    %v2648 = vpack.c.bf16 %v2644, %v2640
    %v2649 = vld [vmem:[#allocation6] sm:$0xff]
    %v2650 = vld [vmem:[#allocation6 + $0x8] sm:$0xff]
    %v2651 = vld [vmem:[#allocation6 + $0x10] sm:$0xff]
    %v2652 = vld [vmem:[#allocation6 + $0x18] sm:$0xff]
    %v2653 = vld [vmem:[#allocation6 + $0x20] sm:$0xff]
    %v2654 = vld [vmem:[#allocation6 + $0x28] sm:$0xff]
    %v2655 = vld [vmem:[#allocation6 + $0x30] sm:$0xff]
    %v2656 = vld [vmem:[#allocation6 + $0x38] sm:$0xff]
    %v2657 = vld [vmem:[#allocation6 + $0x40] sm:$0xff]
    %v2658 = vld [vmem:[#allocation6 + $0x48] sm:$0xff]
    %v2659 = vld [vmem:[#allocation6 + $0x50] sm:$0xff]
    %v2660 = vld [vmem:[#allocation6 + $0x58] sm:$0xff]
    %v2661 = vld [vmem:[#allocation6 + $0x60] sm:$0xff]
    %v2662 = vld [vmem:[#allocation6 + $0x68] sm:$0xff]
    %v2663 = vld [vmem:[#allocation6 + $0x70] sm:$0xff]
    %v2664 = vld [vmem:[#allocation6 + $0x78] sm:$0xff]
    %v2665 = vld [vmem:[#allocation6 + $0x80] sm:$0xff]
    %v2666 = vld [vmem:[#allocation6 + $0x88] sm:$0xff]
    %v2667 = vld [vmem:[#allocation6 + $0x90] sm:$0xff]
    %v2668 = vld [vmem:[#allocation6 + $0x98] sm:$0xff]
    %v2669 = vld [vmem:[#allocation6 + $0xa0] sm:$0xff]
    %v2670 = vld [vmem:[#allocation6 + $0xa8] sm:$0xff]
    %v2671 = vld [vmem:[#allocation6 + $0xb0] sm:$0xff]
    %v2672 = vld [vmem:[#allocation6 + $0xb8] sm:$0xff]
    %v2673 = vld [vmem:[#allocation6 + $0xc0] sm:$0xff]
    %v2674 = vld [vmem:[#allocation6 + $0xc8] sm:$0xff]
    %v2675 = vld [vmem:[#allocation6 + $0xd0] sm:$0xff]
    %v2676 = vld [vmem:[#allocation6 + $0xd8] sm:$0xff]
    %v2677 = vld [vmem:[#allocation6 + $0xe0] sm:$0xff]
    %v2678 = vld [vmem:[#allocation6 + $0xe8] sm:$0xff]
    %v2679 = vld [vmem:[#allocation6 + $0xf0] sm:$0xff]
    %v2680 = vld [vmem:[#allocation6 + $0xf8] sm:$0xff]
    %v2681 = vld [vmem:[#allocation6 + $0x100] sm:$0xff]
    %v2682 = vld [vmem:[#allocation6 + $0x108] sm:$0xff]
    %v2683 = vld [vmem:[#allocation6 + $0x110] sm:$0xff]
    %v2684 = vld [vmem:[#allocation6 + $0x118] sm:$0xff]
    %v2685 = vld [vmem:[#allocation6 + $0x120] sm:$0xff]
    %v2686 = vld [vmem:[#allocation6 + $0x128] sm:$0xff]
    %v2687 = vld [vmem:[#allocation6 + $0x130] sm:$0xff]
    %v2688 = vld [vmem:[#allocation6 + $0x138] sm:$0xff]
    %v2689 = vld [vmem:[#allocation6 + $0x140] sm:$0xff]
    %v2690 = vld [vmem:[#allocation6 + $0x148] sm:$0xff]
    %v2691 = vld [vmem:[#allocation6 + $0x150] sm:$0xff]
    %v2692 = vld [vmem:[#allocation6 + $0x158] sm:$0xff]
    %v2693 = vld [vmem:[#allocation6 + $0x160] sm:$0xff]
    %v2694 = vld [vmem:[#allocation6 + $0x168] sm:$0xff]
    %v2695 = vld [vmem:[#allocation6 + $0x170] sm:$0xff]
    %v2696 = vld [vmem:[#allocation6 + $0x178] sm:$0xff]
    %v2697 = vld [vmem:[#allocation6 + $0x180] sm:$0xff]
    %v2698 = vld [vmem:[#allocation6 + $0x188] sm:$0xff]
    %v2699 = vld [vmem:[#allocation6 + $0x190] sm:$0xff]
    %v2700 = vld [vmem:[#allocation6 + $0x198] sm:$0xff]
    %v2701 = vld [vmem:[#allocation6 + $0x1a0] sm:$0xff]
    %v2702 = vld [vmem:[#allocation6 + $0x1a8] sm:$0xff]
    %v2703 = vld [vmem:[#allocation6 + $0x1b0] sm:$0xff]
    %v2704 = vld [vmem:[#allocation6 + $0x1b8] sm:$0xff]
    %v2705 = vld [vmem:[#allocation6 + $0x1c0] sm:$0xff]
    %v2706 = vld [vmem:[#allocation6 + $0x1c8] sm:$0xff]
    %v2707 = vld [vmem:[#allocation6 + $0x1d0] sm:$0xff]
    %v2708 = vld [vmem:[#allocation6 + $0x1d8] sm:$0xff]
    %v2709 = vld [vmem:[#allocation6 + $0x1e0] sm:$0xff]
    %v2710 = vld [vmem:[#allocation6 + $0x1e8] sm:$0xff]
    %v2711 = vld [vmem:[#allocation6 + $0x1f0] sm:$0xff]
    %v2712 = vld [vmem:[#allocation6 + $0x1f8] sm:$0xff]
    %v2713 = vld [vmem:[#allocation6 + $0x200] sm:$0xff]
    %v2714 = vld [vmem:[#allocation6 + $0x208] sm:$0xff]
    %v2715 = vld [vmem:[#allocation6 + $0x210] sm:$0xff]
    %v2716 = vld [vmem:[#allocation6 + $0x218] sm:$0xff]
    %v2717 = vld [vmem:[#allocation6 + $0x220] sm:$0xff]
    %v2718 = vld [vmem:[#allocation6 + $0x228] sm:$0xff]
    %v2719 = vld [vmem:[#allocation6 + $0x230] sm:$0xff]
    %v2720 = vld [vmem:[#allocation6 + $0x238] sm:$0xff]
    %v2721 = vld [vmem:[#allocation6 + $0x240] sm:$0xff]
    %v2722 = vld [vmem:[#allocation6 + $0x248] sm:$0xff]
    %v2723 = vld [vmem:[#allocation6 + $0x250] sm:$0xff]
    %v2724 = vld [vmem:[#allocation6 + $0x258] sm:$0xff]
    %v2725 = vld [vmem:[#allocation6 + $0x260] sm:$0xff]
    %v2726 = vld [vmem:[#allocation6 + $0x268] sm:$0xff]
    %v2727 = vld [vmem:[#allocation6 + $0x270] sm:$0xff]
    %v2728 = vld [vmem:[#allocation6 + $0x278] sm:$0xff]
    %v2729 = vld [vmem:[#allocation6 + $0x280] sm:$0xff]
    %v2730 = vld [vmem:[#allocation6 + $0x288] sm:$0xff]
    %v2731 = vld [vmem:[#allocation6 + $0x290] sm:$0xff]
    %v2732 = vld [vmem:[#allocation6 + $0x298] sm:$0xff]
    %v2733 = vld [vmem:[#allocation6 + $0x2a0] sm:$0xff]
    %v2734 = vld [vmem:[#allocation6 + $0x2a8] sm:$0xff]
    %v2735 = vld [vmem:[#allocation6 + $0x2b0] sm:$0xff]
    %v2736 = vld [vmem:[#allocation6 + $0x2b8] sm:$0xff]
    %v2737 = vld [vmem:[#allocation6 + $0x2c0] sm:$0xff]
    %v2738 = vld [vmem:[#allocation6 + $0x2c8] sm:$0xff]
    %v2739 = vld [vmem:[#allocation6 + $0x2d0] sm:$0xff]
    %v2740 = vld [vmem:[#allocation6 + $0x2d8] sm:$0xff]
    %v2741 = vld [vmem:[#allocation6 + $0x2e0] sm:$0xff]
    %v2742 = vld [vmem:[#allocation6 + $0x2e8] sm:$0xff]
    %v2743 = vld [vmem:[#allocation6 + $0x2f0] sm:$0xff]
    %v2744 = vld [vmem:[#allocation6 + $0x2f8] sm:$0xff]
    %v2745 = vld [vmem:[#allocation6 + $0x300] sm:$0xff]
    %v2746 = vld [vmem:[#allocation6 + $0x308] sm:$0xff]
    %v2747 = vld [vmem:[#allocation6 + $0x310] sm:$0xff]
    %v2748 = vld [vmem:[#allocation6 + $0x318] sm:$0xff]
    %v2749 = vld [vmem:[#allocation6 + $0x320] sm:$0xff]
    %v2750 = vld [vmem:[#allocation6 + $0x328] sm:$0xff]
    %v2751 = vld [vmem:[#allocation6 + $0x330] sm:$0xff]
    %v2752 = vld [vmem:[#allocation6 + $0x338] sm:$0xff]
    %v2753 = vld [vmem:[#allocation6 + $0x340] sm:$0xff]
    %v2754 = vld [vmem:[#allocation6 + $0x348] sm:$0xff]
    %v2755 = vld [vmem:[#allocation6 + $0x350] sm:$0xff]
    %v2756 = vld [vmem:[#allocation6 + $0x358] sm:$0xff]
    %v2757 = vld [vmem:[#allocation6 + $0x360] sm:$0xff]
    %v2758 = vld [vmem:[#allocation6 + $0x368] sm:$0xff]
    %v2759 = vld [vmem:[#allocation6 + $0x370] sm:$0xff]
    %v2760 = vld [vmem:[#allocation6 + $0x378] sm:$0xff]
    %v2761 = vld [vmem:[#allocation6 + $0x380] sm:$0xff]
    %v2762 = vld [vmem:[#allocation6 + $0x388] sm:$0xff]
    %v2763 = vld [vmem:[#allocation6 + $0x390] sm:$0xff]
    %v2764 = vld [vmem:[#allocation6 + $0x398] sm:$0xff]
    %v2765 = vld [vmem:[#allocation6 + $0x3a0] sm:$0xff]
    %v2766 = vld [vmem:[#allocation6 + $0x3a8] sm:$0xff]
    %v2767 = vld [vmem:[#allocation6 + $0x3b0] sm:$0xff]
    %v2768 = vld [vmem:[#allocation6 + $0x3b8] sm:$0xff]
    %v2769 = vld [vmem:[#allocation6 + $0x3c0] sm:$0xff]
    %v2770 = vld [vmem:[#allocation6 + $0x3c8] sm:$0xff]
    %v2771 = vld [vmem:[#allocation6 + $0x3d0] sm:$0xff]
    %v2772 = vld [vmem:[#allocation6 + $0x3d8] sm:$0xff]
    %v2773 = vld [vmem:[#allocation6 + $0x3e0] sm:$0xff]
    %v2774 = vld [vmem:[#allocation6 + $0x3e8] sm:$0xff]
    %v2775 = vld [vmem:[#allocation6 + $0x3f0] sm:$0xff]
    %v2776 = vld [vmem:[#allocation6 + $0x3f8] sm:$0xff]
    %v2777 = vld [vmem:[%s6] sm:$0xf]
    %v2779 = vlaneseq
    %v2780 = vshrl.u32 %v2779, 7
    %v2781 = vsub.s32 0, %v2780
    %v2782 = vrot.slane %v2777, %v2781
    %v2783 = vlaneseq
    %v2784 = vshrl.u32 %v2783, 7
    %v2785 = vsub.s32 1, %v2784
    %v2786 = vrot.slane %v2777, %v2785
    %v2787 = vlaneseq
    %v2788 = vshrl.u32 %v2787, 7
    %v2789 = vsub.s32 2, %v2788
    %v2790 = vrot.slane %v2777, %v2789
    %v2791 = vlaneseq
    %v2792 = vshrl.u32 %v2791, 7
    %v2793 = vsub.s32 3, %v2792
    %v2794 = vrot.slane %v2777, %v2793
    %v2927 = vunpack.c.l.b16 %v2649
    %v2928 = vunpack.c.h.b16 %v2649
    %v2929 = vunpack.c.l.b16 %v2650
    %v2930 = vunpack.c.h.b16 %v2650
    %v2931 = vunpack.c.l.b16 %v2651
    %v2932 = vunpack.c.h.b16 %v2651
    %v2933 = vunpack.c.l.b16 %v2652
    %v2934 = vunpack.c.h.b16 %v2652
    %v2935 = vunpack.c.l.b16 %v2653
    %v2936 = vunpack.c.h.b16 %v2653
    %v2937 = vunpack.c.l.b16 %v2654
    %v2938 = vunpack.c.h.b16 %v2654
    %v2939 = vunpack.c.l.b16 %v2655
    %v2940 = vunpack.c.h.b16 %v2655
    %v2941 = vunpack.c.l.b16 %v2656
    %v2942 = vunpack.c.h.b16 %v2656
    %v2943 = vunpack.c.l.b16 %v2657
    %v2944 = vunpack.c.h.b16 %v2657
    %v2945 = vunpack.c.l.b16 %v2658
    %v2946 = vunpack.c.h.b16 %v2658
    %v2947 = vunpack.c.l.b16 %v2659
    %v2948 = vunpack.c.h.b16 %v2659
    %v2949 = vunpack.c.l.b16 %v2660
    %v2950 = vunpack.c.h.b16 %v2660
    %v2951 = vunpack.c.l.b16 %v2661
    %v2952 = vunpack.c.h.b16 %v2661
    %v2953 = vunpack.c.l.b16 %v2662
    %v2954 = vunpack.c.h.b16 %v2662
    %v2955 = vunpack.c.l.b16 %v2663
    %v2956 = vunpack.c.h.b16 %v2663
    %v2957 = vunpack.c.l.b16 %v2664
    %v2958 = vunpack.c.h.b16 %v2664
    %v2959 = vunpack.c.l.b16 %v2665
    %v2960 = vunpack.c.h.b16 %v2665
    %v2961 = vunpack.c.l.b16 %v2666
    %v2962 = vunpack.c.h.b16 %v2666
    %v2963 = vunpack.c.l.b16 %v2667
    %v2964 = vunpack.c.h.b16 %v2667
    %v2965 = vunpack.c.l.b16 %v2668
    %v2966 = vunpack.c.h.b16 %v2668
    %v2967 = vunpack.c.l.b16 %v2669
    %v2968 = vunpack.c.h.b16 %v2669
    %v2969 = vunpack.c.l.b16 %v2670
    %v2970 = vunpack.c.h.b16 %v2670
    %v2971 = vunpack.c.l.b16 %v2671
    %v2972 = vunpack.c.h.b16 %v2671
    %v2973 = vunpack.c.l.b16 %v2672
    %v2974 = vunpack.c.h.b16 %v2672
    %v2975 = vunpack.c.l.b16 %v2673
    %v2976 = vunpack.c.h.b16 %v2673
    %v2977 = vunpack.c.l.b16 %v2674
    %v2978 = vunpack.c.h.b16 %v2674
    %v2979 = vunpack.c.l.b16 %v2675
    %v2980 = vunpack.c.h.b16 %v2675
    %v2981 = vunpack.c.l.b16 %v2676
    %v2982 = vunpack.c.h.b16 %v2676
    %v2983 = vunpack.c.l.b16 %v2677
    %v2984 = vunpack.c.h.b16 %v2677
    %v2985 = vunpack.c.l.b16 %v2678
    %v2986 = vunpack.c.h.b16 %v2678
    %v2987 = vunpack.c.l.b16 %v2679
    %v2988 = vunpack.c.h.b16 %v2679
    %v2989 = vunpack.c.l.b16 %v2680
    %v2990 = vunpack.c.h.b16 %v2680
    %v2991 = vunpack.c.l.b16 %v2681
    %v2992 = vunpack.c.h.b16 %v2681
    %v2993 = vunpack.c.l.b16 %v2682
    %v2994 = vunpack.c.h.b16 %v2682
    %v2995 = vunpack.c.l.b16 %v2683
    %v2996 = vunpack.c.h.b16 %v2683
    %v2997 = vunpack.c.l.b16 %v2684
    %v2998 = vunpack.c.h.b16 %v2684
    %v2999 = vunpack.c.l.b16 %v2685
    %v3000 = vunpack.c.h.b16 %v2685
    %v3001 = vunpack.c.l.b16 %v2686
    %v3002 = vunpack.c.h.b16 %v2686
    %v3003 = vunpack.c.l.b16 %v2687
    %v3004 = vunpack.c.h.b16 %v2687
    %v3005 = vunpack.c.l.b16 %v2688
    %v3006 = vunpack.c.h.b16 %v2688
    %v3007 = vunpack.c.l.b16 %v2689
    %v3008 = vunpack.c.h.b16 %v2689
    %v3009 = vunpack.c.l.b16 %v2690
    %v3010 = vunpack.c.h.b16 %v2690
    %v3011 = vunpack.c.l.b16 %v2691
    %v3012 = vunpack.c.h.b16 %v2691
    %v3013 = vunpack.c.l.b16 %v2692
    %v3014 = vunpack.c.h.b16 %v2692
    %v3015 = vunpack.c.l.b16 %v2693
    %v3016 = vunpack.c.h.b16 %v2693
    %v3017 = vunpack.c.l.b16 %v2694
    %v3018 = vunpack.c.h.b16 %v2694
    %v3019 = vunpack.c.l.b16 %v2695
    %v3020 = vunpack.c.h.b16 %v2695
    %v3021 = vunpack.c.l.b16 %v2696
    %v3022 = vunpack.c.h.b16 %v2696
    %v3023 = vunpack.c.l.b16 %v2697
    %v3024 = vunpack.c.h.b16 %v2697
    %v3025 = vunpack.c.l.b16 %v2698
    %v3026 = vunpack.c.h.b16 %v2698
    %v3027 = vunpack.c.l.b16 %v2699
    %v3028 = vunpack.c.h.b16 %v2699
    %v3029 = vunpack.c.l.b16 %v2700
    %v3030 = vunpack.c.h.b16 %v2700
    %v3031 = vunpack.c.l.b16 %v2701
    %v3032 = vunpack.c.h.b16 %v2701
    %v3033 = vunpack.c.l.b16 %v2702
    %v3034 = vunpack.c.h.b16 %v2702
    %v3035 = vunpack.c.l.b16 %v2703
    %v3036 = vunpack.c.h.b16 %v2703
    %v3037 = vunpack.c.l.b16 %v2704
    %v3038 = vunpack.c.h.b16 %v2704
    %v3039 = vunpack.c.l.b16 %v2705
    %v3040 = vunpack.c.h.b16 %v2705
    %v3041 = vunpack.c.l.b16 %v2706
    %v3042 = vunpack.c.h.b16 %v2706
    %v3043 = vunpack.c.l.b16 %v2707
    %v3044 = vunpack.c.h.b16 %v2707
    %v3045 = vunpack.c.l.b16 %v2708
    %v3046 = vunpack.c.h.b16 %v2708
    %v3047 = vunpack.c.l.b16 %v2709
    %v3048 = vunpack.c.h.b16 %v2709
    %v3049 = vunpack.c.l.b16 %v2710
    %v3050 = vunpack.c.h.b16 %v2710
    %v3051 = vunpack.c.l.b16 %v2711
    %v3052 = vunpack.c.h.b16 %v2711
    %v3053 = vunpack.c.l.b16 %v2712
    %v3054 = vunpack.c.h.b16 %v2712
    %v3055 = vunpack.c.l.b16 %v2713
    %v3056 = vunpack.c.h.b16 %v2713
    %v3057 = vunpack.c.l.b16 %v2714
    %v3058 = vunpack.c.h.b16 %v2714
    %v3059 = vunpack.c.l.b16 %v2715
    %v3060 = vunpack.c.h.b16 %v2715
    %v3061 = vunpack.c.l.b16 %v2716
    %v3062 = vunpack.c.h.b16 %v2716
    %v3063 = vunpack.c.l.b16 %v2717
    %v3064 = vunpack.c.h.b16 %v2717
    %v3065 = vunpack.c.l.b16 %v2718
    %v3066 = vunpack.c.h.b16 %v2718
    %v3067 = vunpack.c.l.b16 %v2719
    %v3068 = vunpack.c.h.b16 %v2719
    %v3069 = vunpack.c.l.b16 %v2720
    %v3070 = vunpack.c.h.b16 %v2720
    %v3071 = vunpack.c.l.b16 %v2721
    %v3072 = vunpack.c.h.b16 %v2721
    %v3073 = vunpack.c.l.b16 %v2722
    %v3074 = vunpack.c.h.b16 %v2722
    %v3075 = vunpack.c.l.b16 %v2723
    %v3076 = vunpack.c.h.b16 %v2723
    %v3077 = vunpack.c.l.b16 %v2724
    %v3078 = vunpack.c.h.b16 %v2724
    %v3079 = vunpack.c.l.b16 %v2725
    %v3080 = vunpack.c.h.b16 %v2725
    %v3081 = vunpack.c.l.b16 %v2726
    %v3082 = vunpack.c.h.b16 %v2726
    %v3083 = vunpack.c.l.b16 %v2727
    %v3084 = vunpack.c.h.b16 %v2727
    %v3085 = vunpack.c.l.b16 %v2728
    %v3086 = vunpack.c.h.b16 %v2728
    %v3087 = vunpack.c.l.b16 %v2729
    %v3088 = vunpack.c.h.b16 %v2729
    %v3089 = vunpack.c.l.b16 %v2730
    %v3090 = vunpack.c.h.b16 %v2730
    %v3091 = vunpack.c.l.b16 %v2731
    %v3092 = vunpack.c.h.b16 %v2731
    %v3093 = vunpack.c.l.b16 %v2732
    %v3094 = vunpack.c.h.b16 %v2732
    %v3095 = vunpack.c.l.b16 %v2733
    %v3096 = vunpack.c.h.b16 %v2733
    %v3097 = vunpack.c.l.b16 %v2734
    %v3098 = vunpack.c.h.b16 %v2734
    %v3099 = vunpack.c.l.b16 %v2735
    %v3100 = vunpack.c.h.b16 %v2735
    %v3101 = vunpack.c.l.b16 %v2736
    %v3102 = vunpack.c.h.b16 %v2736
    %v3103 = vunpack.c.l.b16 %v2737
    %v3104 = vunpack.c.h.b16 %v2737
    %v3105 = vunpack.c.l.b16 %v2738
    %v3106 = vunpack.c.h.b16 %v2738
    %v3107 = vunpack.c.l.b16 %v2739
    %v3108 = vunpack.c.h.b16 %v2739
    %v3109 = vunpack.c.l.b16 %v2740
    %v3110 = vunpack.c.h.b16 %v2740
    %v3111 = vunpack.c.l.b16 %v2741
    %v3112 = vunpack.c.h.b16 %v2741
    %v3113 = vunpack.c.l.b16 %v2742
    %v3114 = vunpack.c.h.b16 %v2742
    %v3115 = vunpack.c.l.b16 %v2743
    %v3116 = vunpack.c.h.b16 %v2743
    %v3117 = vunpack.c.l.b16 %v2744
    %v3118 = vunpack.c.h.b16 %v2744
    %v3119 = vunpack.c.l.b16 %v2745
    %v3120 = vunpack.c.h.b16 %v2745
    %v3121 = vunpack.c.l.b16 %v2746
    %v3122 = vunpack.c.h.b16 %v2746
    %v3123 = vunpack.c.l.b16 %v2747
    %v3124 = vunpack.c.h.b16 %v2747
    %v3125 = vunpack.c.l.b16 %v2748
    %v3126 = vunpack.c.h.b16 %v2748
    %v3127 = vunpack.c.l.b16 %v2749
    %v3128 = vunpack.c.h.b16 %v2749
    %v3129 = vunpack.c.l.b16 %v2750
    %v3130 = vunpack.c.h.b16 %v2750
    %v3131 = vunpack.c.l.b16 %v2751
    %v3132 = vunpack.c.h.b16 %v2751
    %v3133 = vunpack.c.l.b16 %v2752
    %v3134 = vunpack.c.h.b16 %v2752
    %v3135 = vunpack.c.l.b16 %v2753
    %v3136 = vunpack.c.h.b16 %v2753
    %v3137 = vunpack.c.l.b16 %v2754
    %v3138 = vunpack.c.h.b16 %v2754
    %v3139 = vunpack.c.l.b16 %v2755
    %v3140 = vunpack.c.h.b16 %v2755
    %v3141 = vunpack.c.l.b16 %v2756
    %v3142 = vunpack.c.h.b16 %v2756
    %v3143 = vunpack.c.l.b16 %v2757
    %v3144 = vunpack.c.h.b16 %v2757
    %v3145 = vunpack.c.l.b16 %v2758
    %v3146 = vunpack.c.h.b16 %v2758
    %v3147 = vunpack.c.l.b16 %v2759
    %v3148 = vunpack.c.h.b16 %v2759
    %v3149 = vunpack.c.l.b16 %v2760
    %v3150 = vunpack.c.h.b16 %v2760
    %v3151 = vunpack.c.l.b16 %v2761
    %v3152 = vunpack.c.h.b16 %v2761
    %v3153 = vunpack.c.l.b16 %v2762
    %v3154 = vunpack.c.h.b16 %v2762
    %v3155 = vunpack.c.l.b16 %v2763
    %v3156 = vunpack.c.h.b16 %v2763
    %v3157 = vunpack.c.l.b16 %v2764
    %v3158 = vunpack.c.h.b16 %v2764
    %v3159 = vunpack.c.l.b16 %v2765
    %v3160 = vunpack.c.h.b16 %v2765
    %v3161 = vunpack.c.l.b16 %v2766
    %v3162 = vunpack.c.h.b16 %v2766
    %v3163 = vunpack.c.l.b16 %v2767
    %v3164 = vunpack.c.h.b16 %v2767
    %v3165 = vunpack.c.l.b16 %v2768
    %v3166 = vunpack.c.h.b16 %v2768
    %v3167 = vunpack.c.l.b16 %v2769
    %v3168 = vunpack.c.h.b16 %v2769
    %v3169 = vunpack.c.l.b16 %v2770
    %v3170 = vunpack.c.h.b16 %v2770
    %v3171 = vunpack.c.l.b16 %v2771
    %v3172 = vunpack.c.h.b16 %v2771
    %v3173 = vunpack.c.l.b16 %v2772
    %v3174 = vunpack.c.h.b16 %v2772
    %v3175 = vunpack.c.l.b16 %v2773
    %v3176 = vunpack.c.h.b16 %v2773
    %v3177 = vunpack.c.l.b16 %v2774
    %v3178 = vunpack.c.h.b16 %v2774
    %v3179 = vunpack.c.l.b16 %v2775
    %v3180 = vunpack.c.h.b16 %v2775
    %v3181 = vunpack.c.l.b16 %v2776
    %v3182 = vunpack.c.h.b16 %v2776
    %v3183 = vpack.c.b16 %v2931, %v2927
    %v3184 = vpack.c.b16 %v2932, %v2928
    %v3185 = vpack.c.b16 %v2933, %v2929
    %v3186 = vpack.c.b16 %v2934, %v2930
    %v3187 = vpack.c.b16 %v2939, %v2935
    %v3188 = vpack.c.b16 %v2940, %v2936
    %v3189 = vpack.c.b16 %v2941, %v2937
    %v3190 = vpack.c.b16 %v2942, %v2938
    %v3191 = vpack.c.b16 %v2947, %v2943
    %v3192 = vpack.c.b16 %v2948, %v2944
    %v3193 = vpack.c.b16 %v2949, %v2945
    %v3194 = vpack.c.b16 %v2950, %v2946
    %v3195 = vpack.c.b16 %v2955, %v2951
    %v3196 = vpack.c.b16 %v2956, %v2952
    %v3197 = vpack.c.b16 %v2957, %v2953
    %v3198 = vpack.c.b16 %v2958, %v2954
    %v3199 = vpack.c.b16 %v2963, %v2959
    %v3200 = vpack.c.b16 %v2964, %v2960
    %v3201 = vpack.c.b16 %v2965, %v2961
    %v3202 = vpack.c.b16 %v2966, %v2962
    %v3203 = vpack.c.b16 %v2971, %v2967
    %v3204 = vpack.c.b16 %v2972, %v2968
    %v3205 = vpack.c.b16 %v2973, %v2969
    %v3206 = vpack.c.b16 %v2974, %v2970
    %v3207 = vpack.c.b16 %v2979, %v2975
    %v3208 = vpack.c.b16 %v2980, %v2976
    %v3209 = vpack.c.b16 %v2981, %v2977
    %v3210 = vpack.c.b16 %v2982, %v2978
    %v3211 = vpack.c.b16 %v2987, %v2983
    %v3212 = vpack.c.b16 %v2988, %v2984
    %v3213 = vpack.c.b16 %v2989, %v2985
    %v3214 = vpack.c.b16 %v2990, %v2986
    %v3215 = vpack.c.b16 %v2995, %v2991
    %v3216 = vpack.c.b16 %v2996, %v2992
    %v3217 = vpack.c.b16 %v2997, %v2993
    %v3218 = vpack.c.b16 %v2998, %v2994
    %v3219 = vpack.c.b16 %v3003, %v2999
    %v3220 = vpack.c.b16 %v3004, %v3000
    %v3221 = vpack.c.b16 %v3005, %v3001
    %v3222 = vpack.c.b16 %v3006, %v3002
    %v3223 = vpack.c.b16 %v3011, %v3007
    %v3224 = vpack.c.b16 %v3012, %v3008
    %v3225 = vpack.c.b16 %v3013, %v3009
    %v3226 = vpack.c.b16 %v3014, %v3010
    %v3227 = vpack.c.b16 %v3019, %v3015
    %v3228 = vpack.c.b16 %v3020, %v3016
    %v3229 = vpack.c.b16 %v3021, %v3017
    %v3230 = vpack.c.b16 %v3022, %v3018
    %v3231 = vpack.c.b16 %v3027, %v3023
    %v3232 = vpack.c.b16 %v3028, %v3024
    %v3233 = vpack.c.b16 %v3029, %v3025
    %v3234 = vpack.c.b16 %v3030, %v3026
    %v3235 = vpack.c.b16 %v3035, %v3031
    %v3236 = vpack.c.b16 %v3036, %v3032
    %v3237 = vpack.c.b16 %v3037, %v3033
    %v3238 = vpack.c.b16 %v3038, %v3034
    %v3239 = vpack.c.b16 %v3043, %v3039
    %v3240 = vpack.c.b16 %v3044, %v3040
    %v3241 = vpack.c.b16 %v3045, %v3041
    %v3242 = vpack.c.b16 %v3046, %v3042
    %v3243 = vpack.c.b16 %v3051, %v3047
    %v3244 = vpack.c.b16 %v3052, %v3048
    %v3245 = vpack.c.b16 %v3053, %v3049
    %v3246 = vpack.c.b16 %v3054, %v3050
    %v3247 = vpack.c.b16 %v3059, %v3055
    %v3248 = vpack.c.b16 %v3060, %v3056
    %v3249 = vpack.c.b16 %v3061, %v3057
    %v3250 = vpack.c.b16 %v3062, %v3058
    %v3251 = vpack.c.b16 %v3067, %v3063
    %v3252 = vpack.c.b16 %v3068, %v3064
    %v3253 = vpack.c.b16 %v3069, %v3065
    %v3254 = vpack.c.b16 %v3070, %v3066
    %v3255 = vpack.c.b16 %v3075, %v3071
    %v3256 = vpack.c.b16 %v3076, %v3072
    %v3257 = vpack.c.b16 %v3077, %v3073
    %v3258 = vpack.c.b16 %v3078, %v3074
    %v3259 = vpack.c.b16 %v3083, %v3079
    %v3260 = vpack.c.b16 %v3084, %v3080
    %v3261 = vpack.c.b16 %v3085, %v3081
    %v3262 = vpack.c.b16 %v3086, %v3082
    %v3263 = vpack.c.b16 %v3091, %v3087
    %v3264 = vpack.c.b16 %v3092, %v3088
    %v3265 = vpack.c.b16 %v3093, %v3089
    %v3266 = vpack.c.b16 %v3094, %v3090
    %v3267 = vpack.c.b16 %v3099, %v3095
    %v3268 = vpack.c.b16 %v3100, %v3096
    %v3269 = vpack.c.b16 %v3101, %v3097
    %v3270 = vpack.c.b16 %v3102, %v3098
    %v3271 = vpack.c.b16 %v3107, %v3103
    %v3272 = vpack.c.b16 %v3108, %v3104
    %v3273 = vpack.c.b16 %v3109, %v3105
    %v3274 = vpack.c.b16 %v3110, %v3106
    %v3275 = vpack.c.b16 %v3115, %v3111
    %v3276 = vpack.c.b16 %v3116, %v3112
    %v3277 = vpack.c.b16 %v3117, %v3113
    %v3278 = vpack.c.b16 %v3118, %v3114
    %v3279 = vpack.c.b16 %v3123, %v3119
    %v3280 = vpack.c.b16 %v3124, %v3120
    %v3281 = vpack.c.b16 %v3125, %v3121
    %v3282 = vpack.c.b16 %v3126, %v3122
    %v3283 = vpack.c.b16 %v3131, %v3127
    %v3284 = vpack.c.b16 %v3132, %v3128
    %v3285 = vpack.c.b16 %v3133, %v3129
    %v3286 = vpack.c.b16 %v3134, %v3130
    %v3287 = vpack.c.b16 %v3139, %v3135
    %v3288 = vpack.c.b16 %v3140, %v3136
    %v3289 = vpack.c.b16 %v3141, %v3137
    %v3290 = vpack.c.b16 %v3142, %v3138
    %v3291 = vpack.c.b16 %v3147, %v3143
    %v3292 = vpack.c.b16 %v3148, %v3144
    %v3293 = vpack.c.b16 %v3149, %v3145
    %v3294 = vpack.c.b16 %v3150, %v3146
    %v3295 = vpack.c.b16 %v3155, %v3151
    %v3296 = vpack.c.b16 %v3156, %v3152
    %v3297 = vpack.c.b16 %v3157, %v3153
    %v3298 = vpack.c.b16 %v3158, %v3154
    %v3299 = vpack.c.b16 %v3163, %v3159
    %v3300 = vpack.c.b16 %v3164, %v3160
    %v3301 = vpack.c.b16 %v3165, %v3161
    %v3302 = vpack.c.b16 %v3166, %v3162
    %v3303 = vpack.c.b16 %v3171, %v3167
    %v3304 = vpack.c.b16 %v3172, %v3168
    %v3305 = vpack.c.b16 %v3173, %v3169
    %v3306 = vpack.c.b16 %v3174, %v3170
    %v3307 = vpack.c.b16 %v3179, %v3175
    %v3308 = vpack.c.b16 %v3180, %v3176
    %v3309 = vpack.c.b16 %v3181, %v3177
    %v3310 = vpack.c.b16 %v3182, %v3178
    %3439 = vmatprep.subr.bf16.mxu0 %v3212
    %3440 = vmatpush1.bf16.msra.mxu0 %v3211
    %3441 = vmatprep.subr.bf16.mxu0 %v3208
    %3442 = vmatpush1.bf16.msra.mxu0 %v3207
    %3443 = vmatprep.subr.bf16.mxu0 %v3204
    %3444 = vmatpush1.bf16.msra.mxu0 %v3203
    %3445 = vmatprep.subr.bf16.mxu0 %v3200
    %3446 = vmatpush1.bf16.msra.mxu0 %v3199
    %3447 = vmatprep.subr.bf16.mxu0 %v3196
    %3448 = vmatpush1.bf16.msra.mxu0 %v3195
    %3449 = vmatprep.subr.bf16.mxu0 %v3192
    %3450 = vmatpush1.bf16.msra.mxu0 %v3191
    %3451 = vmatprep.subr.bf16.mxu0 %v3188
    %3452 = vmatpush1.bf16.msra.mxu0 %v3187
    %3453 = vmatprep.subr.bf16.mxu0 %v3184
    %3454 = vmatpush1.bf16.msra.mxu0 %v3183
    %3455 = vmatprep.subr.bf16.mxu0 %v3244
    %3456 = vmatpush2.bf16.msra.mxu0 %v3243
    %3457 = vmatprep.subr.bf16.mxu0 %v3240
    %3458 = vmatpush2.bf16.msra.mxu0 %v3239
    %3459 = vmatprep.subr.bf16.mxu0 %v3236
    %3460 = vmatpush2.bf16.msra.mxu0 %v3235
    %3461 = vmatprep.subr.bf16.mxu0 %v3232
    %3462 = vmatpush2.bf16.msra.mxu0 %v3231
    %3463 = vmatprep.subr.bf16.mxu0 %v3228
    %3464 = vmatpush2.bf16.msra.mxu0 %v3227
    %3465 = vmatprep.subr.bf16.mxu0 %v3224
    %3466 = vmatpush2.bf16.msra.mxu0 %v3223
    %3467 = vmatprep.subr.bf16.mxu0 %v3220
    %3468 = vmatpush2.bf16.msra.mxu0 %v3219
    %3469 = vmatprep.subr.bf16.mxu0 %v3216
    %3470 = vmatpush2.bf16.msra.mxu0 %v3215
    %3471 = vmatprep.mubr.bf16.mxu0 %v2646
    %3472 = vmatmul.mubr.bf16.gmra.mxu0 %v2645
    %v3473 = vpop.f32.mrf.mxu0
    %v3474 = vadd.f32 %v2782, %v3473
    %v3475 = vpop.f32.mrf.mxu0
    %v3476 = vadd.f32 %v2786, %v3475
    %v3477 = vpop.f32.mrf.mxu0
    %v3478 = vadd.f32 %v2782, %v3477
    %v3479 = vpop.f32.mrf.mxu0
    %v3480 = vadd.f32 %v2786, %v3479
    %3481 = vdwg.mxu0
    %3482 = vmatprep.subr.bf16.mxu0 %v3276
    %3483 = vmatpush1.bf16.msra.mxu0 %v3275
    %3484 = vmatprep.subr.bf16.mxu0 %v3272
    %3485 = vmatpush1.bf16.msra.mxu0 %v3271
    %3486 = vmatprep.subr.bf16.mxu0 %v3268
    %3487 = vmatpush1.bf16.msra.mxu0 %v3267
    %3488 = vmatprep.subr.bf16.mxu0 %v3264
    %3489 = vmatpush1.bf16.msra.mxu0 %v3263
    %3490 = vmatprep.subr.bf16.mxu0 %v3260
    %3491 = vmatpush1.bf16.msra.mxu0 %v3259
    %3492 = vmatprep.subr.bf16.mxu0 %v3256
    %3493 = vmatpush1.bf16.msra.mxu0 %v3255
    %3494 = vmatprep.subr.bf16.mxu0 %v3252
    %3495 = vmatpush1.bf16.msra.mxu0 %v3251
    %3496 = vmatprep.subr.bf16.mxu0 %v3248
    %3497 = vmatpush1.bf16.msra.mxu0 %v3247
    %3498 = vmatprep.subr.bf16.mxu0 %v3308
    %3499 = vmatpush2.bf16.msra.mxu0 %v3307
    %3500 = vmatprep.subr.bf16.mxu0 %v3304
    %3501 = vmatpush2.bf16.msra.mxu0 %v3303
    %3502 = vmatprep.subr.bf16.mxu0 %v3300
    %3503 = vmatpush2.bf16.msra.mxu0 %v3299
    %3504 = vmatprep.subr.bf16.mxu0 %v3296
    %3505 = vmatpush2.bf16.msra.mxu0 %v3295
    %3506 = vmatprep.subr.bf16.mxu0 %v3292
    %3507 = vmatpush2.bf16.msra.mxu0 %v3291
    %3508 = vmatprep.subr.bf16.mxu0 %v3288
    %3509 = vmatpush2.bf16.msra.mxu0 %v3287
    %3510 = vmatprep.subr.bf16.mxu0 %v3284
    %3511 = vmatpush2.bf16.msra.mxu0 %v3283
    %3512 = vmatprep.subr.bf16.mxu0 %v3280
    %3513 = vmatpush2.bf16.msra.mxu0 %v3279
    %3514 = vmatprep.mubr.bf16.mxu0 %v2648
    %3515 = vmatmul.mubr.bf16.gmra.mxu0 %v2647
    %v3516 = vpop.f32.mrf.mxu0
    %v3517 = vadd.f32 %v3474, %v3516
    %v3518 = vpop.f32.mrf.mxu0
    %v3519 = vadd.f32 %v3476, %v3518
    %v3520 = vpop.f32.mrf.mxu0
    %v3521 = vadd.f32 %v3478, %v3520
    %v3522 = vpop.f32.mrf.mxu0
    %v3523 = vadd.f32 %v3480, %v3522
    %3524 = vdwg.mxu0
    %3525 = vmatprep.subr.bf16.mxu0 %v3214
    %3526 = vmatpush1.bf16.msra.mxu0 %v3213
    %3527 = vmatprep.subr.bf16.mxu0 %v3210
    %3528 = vmatpush1.bf16.msra.mxu0 %v3209
    %3529 = vmatprep.subr.bf16.mxu0 %v3206
    %3530 = vmatpush1.bf16.msra.mxu0 %v3205
    %3531 = vmatprep.subr.bf16.mxu0 %v3202
    %3532 = vmatpush1.bf16.msra.mxu0 %v3201
    %3533 = vmatprep.subr.bf16.mxu0 %v3198
    %3534 = vmatpush1.bf16.msra.mxu0 %v3197
    %3535 = vmatprep.subr.bf16.mxu0 %v3194
    %3536 = vmatpush1.bf16.msra.mxu0 %v3193
    %3537 = vmatprep.subr.bf16.mxu0 %v3190
    %3538 = vmatpush1.bf16.msra.mxu0 %v3189
    %3539 = vmatprep.subr.bf16.mxu0 %v3186
    %3540 = vmatpush1.bf16.msra.mxu0 %v3185
    %3541 = vmatprep.subr.bf16.mxu0 %v3246
    %3542 = vmatpush2.bf16.msra.mxu0 %v3245
    %3543 = vmatprep.subr.bf16.mxu0 %v3242
    %3544 = vmatpush2.bf16.msra.mxu0 %v3241
    %3545 = vmatprep.subr.bf16.mxu0 %v3238
    %3546 = vmatpush2.bf16.msra.mxu0 %v3237
    %3547 = vmatprep.subr.bf16.mxu0 %v3234
    %3548 = vmatpush2.bf16.msra.mxu0 %v3233
    %3549 = vmatprep.subr.bf16.mxu0 %v3230
    %3550 = vmatpush2.bf16.msra.mxu0 %v3229
    %3551 = vmatprep.subr.bf16.mxu0 %v3226
    %3552 = vmatpush2.bf16.msra.mxu0 %v3225
    %3553 = vmatprep.subr.bf16.mxu0 %v3222
    %3554 = vmatpush2.bf16.msra.mxu0 %v3221
    %3555 = vmatprep.subr.bf16.mxu0 %v3218
    %3556 = vmatpush2.bf16.msra.mxu0 %v3217
    %3557 = vmatprep.mubr.bf16.mxu0 %v2646
    %3558 = vmatmul.mubr.bf16.gmra.mxu0 %v2645
    %v3559 = vpop.f32.mrf.mxu0
    %v3560 = vadd.f32 %v2790, %v3559
    %v3561 = vpop.f32.mrf.mxu0
    %v3562 = vadd.f32 %v2794, %v3561
    %v3563 = vpop.f32.mrf.mxu0
    %v3564 = vadd.f32 %v2790, %v3563
    %v3565 = vpop.f32.mrf.mxu0
    %v3566 = vadd.f32 %v2794, %v3565
    %3567 = vdwg.mxu0
    %3568 = vmatprep.subr.bf16.mxu0 %v3278
    %3569 = vmatpush1.bf16.msra.mxu0 %v3277
    %3570 = vmatprep.subr.bf16.mxu0 %v3274
    %3571 = vmatpush1.bf16.msra.mxu0 %v3273
    %3572 = vmatprep.subr.bf16.mxu0 %v3270
    %3573 = vmatpush1.bf16.msra.mxu0 %v3269
    %3574 = vmatprep.subr.bf16.mxu0 %v3266
    %3575 = vmatpush1.bf16.msra.mxu0 %v3265
    %3576 = vmatprep.subr.bf16.mxu0 %v3262
    %3577 = vmatpush1.bf16.msra.mxu0 %v3261
    %3578 = vmatprep.subr.bf16.mxu0 %v3258
    %3579 = vmatpush1.bf16.msra.mxu0 %v3257
    %3580 = vmatprep.subr.bf16.mxu0 %v3254
    %3581 = vmatpush1.bf16.msra.mxu0 %v3253
    %3582 = vmatprep.subr.bf16.mxu0 %v3250
    %3583 = vmatpush1.bf16.msra.mxu0 %v3249
    %3584 = vmatprep.subr.bf16.mxu0 %v3310
    %3585 = vmatpush2.bf16.msra.mxu0 %v3309
    %3586 = vmatprep.subr.bf16.mxu0 %v3306
    %3587 = vmatpush2.bf16.msra.mxu0 %v3305
    %3588 = vmatprep.subr.bf16.mxu0 %v3302
    %3589 = vmatpush2.bf16.msra.mxu0 %v3301
    %3590 = vmatprep.subr.bf16.mxu0 %v3298
    %3591 = vmatpush2.bf16.msra.mxu0 %v3297
    %3592 = vmatprep.subr.bf16.mxu0 %v3294
    %3593 = vmatpush2.bf16.msra.mxu0 %v3293
    %3594 = vmatprep.subr.bf16.mxu0 %v3290
    %3595 = vmatpush2.bf16.msra.mxu0 %v3289
    %3596 = vmatprep.subr.bf16.mxu0 %v3286
    %3597 = vmatpush2.bf16.msra.mxu0 %v3285
    %3598 = vmatprep.subr.bf16.mxu0 %v3282
    %3599 = vmatpush2.bf16.msra.mxu0 %v3281
    %3600 = vmatprep.mubr.bf16.mxu0 %v2648
    %3601 = vmatmul.mubr.bf16.gmra.mxu0 %v2647
    %v3602 = vpop.f32.mrf.mxu0
    %v3603 = vadd.f32 %v3560, %v3602
    %v3604 = vpop.f32.mrf.mxu0
    %v3605 = vadd.f32 %v3562, %v3604
    %v3606 = vpop.f32.mrf.mxu0
    %v3607 = vadd.f32 %v3564, %v3606
    %v3608 = vpop.f32.mrf.mxu0
    %v3609 = vadd.f32 %v3566, %v3608
    %3610 = vdwg.mxu0
    %v3611 = vmax.f32 %v3517, 0.0
    %v3612 = vmax.f32 %v3519, 0.0
    %v3613 = vmax.f32 %v3603, 0.0
    %v3614 = vmax.f32 %v3605, 0.0
    %v3615 = vmax.f32 %v3521, 0.0
    %v3616 = vmax.f32 %v3523, 0.0
    %v3617 = vmax.f32 %v3607, 0.0
    %v3618 = vmax.f32 %v3609, 0.0
    %v3619 = vpack.c.bf16 %v3615, %v3611
    %v3620 = vpack.c.bf16 %v3616, %v3612
    %v3621 = vpack.c.bf16 %v3617, %v3613
    %v3622 = vpack.c.bf16 %v3618, %v3614
    %v3623 = vld [vmem:[%s7] sm:$0xf]
    %v3624 = vld [vmem:[%s7 + $0x4] sm:$0xf]
    %v3625 = vld [vmem:[%s7 + $0x8] sm:$0xf]
    %v3626 = vld [vmem:[%s7 + $0xc] sm:$0xf]
    %v3627 = vld [vmem:[%s7 + $0x10] sm:$0xf]
    %v3628 = vld [vmem:[%s7 + $0x14] sm:$0xf]
    %v3629 = vld [vmem:[%s7 + $0x18] sm:$0xf]
    %v3630 = vld [vmem:[%s7 + $0x1c] sm:$0xf]
    %v3631 = vld [vmem:[%s7 + $0x20] sm:$0xf]
    %v3632 = vld [vmem:[%s7 + $0x24] sm:$0xf]
    %v3633 = vld [vmem:[%s7 + $0x28] sm:$0xf]
    %v3634 = vld [vmem:[%s7 + $0x2c] sm:$0xf]
    %v3635 = vld [vmem:[%s7 + $0x30] sm:$0xf]
    %v3636 = vld [vmem:[%s7 + $0x34] sm:$0xf]
    %v3637 = vld [vmem:[%s7 + $0x38] sm:$0xf]
    %v3638 = vld [vmem:[%s7 + $0x3c] sm:$0xf]
    %v3639 = vld [vmem:[%s7 + $0x40] sm:$0xf]
    %v3640 = vld [vmem:[%s7 + $0x44] sm:$0xf]
    %v3641 = vld [vmem:[%s7 + $0x48] sm:$0xf]
    %v3642 = vld [vmem:[%s7 + $0x4c] sm:$0xf]
    %v3643 = vld [vmem:[%s7 + $0x50] sm:$0xf]
    %v3644 = vld [vmem:[%s7 + $0x54] sm:$0xf]
    %v3645 = vld [vmem:[%s7 + $0x58] sm:$0xf]
    %v3646 = vld [vmem:[%s7 + $0x5c] sm:$0xf]
    %v3647 = vld [vmem:[%s7 + $0x60] sm:$0xf]
    %v3648 = vld [vmem:[%s7 + $0x64] sm:$0xf]
    %v3649 = vld [vmem:[%s7 + $0x68] sm:$0xf]
    %v3650 = vld [vmem:[%s7 + $0x6c] sm:$0xf]
    %v3651 = vld [vmem:[%s7 + $0x70] sm:$0xf]
    %v3652 = vld [vmem:[%s7 + $0x74] sm:$0xf]
    %v3653 = vld [vmem:[%s7 + $0x78] sm:$0xf]
    %v3654 = vld [vmem:[%s7 + $0x7c] sm:$0xf]
    %v3655 = vld [vmem:[%s7 + $0x80] sm:$0xf]
    %v3656 = vld [vmem:[%s7 + $0x84] sm:$0xf]
    %v3657 = vld [vmem:[%s7 + $0x88] sm:$0xf]
    %v3658 = vld [vmem:[%s7 + $0x8c] sm:$0xf]
    %v3659 = vld [vmem:[%s7 + $0x90] sm:$0xf]
    %v3660 = vld [vmem:[%s7 + $0x94] sm:$0xf]
    %v3661 = vld [vmem:[%s7 + $0x98] sm:$0xf]
    %v3662 = vld [vmem:[%s7 + $0x9c] sm:$0xf]
    %v3663 = vld [vmem:[%s7 + $0xa0] sm:$0xf]
    %v3664 = vld [vmem:[%s7 + $0xa4] sm:$0xf]
    %v3665 = vld [vmem:[%s7 + $0xa8] sm:$0xf]
    %v3666 = vld [vmem:[%s7 + $0xac] sm:$0xf]
    %v3667 = vld [vmem:[%s7 + $0xb0] sm:$0xf]
    %v3668 = vld [vmem:[%s7 + $0xb4] sm:$0xf]
    %v3669 = vld [vmem:[%s7 + $0xb8] sm:$0xf]
    %v3670 = vld [vmem:[%s7 + $0xbc] sm:$0xf]
    %v3671 = vld [vmem:[%s7 + $0xc0] sm:$0xf]
    %v3672 = vld [vmem:[%s7 + $0xc4] sm:$0xf]
    %v3673 = vld [vmem:[%s7 + $0xc8] sm:$0xf]
    %v3674 = vld [vmem:[%s7 + $0xcc] sm:$0xf]
    %v3675 = vld [vmem:[%s7 + $0xd0] sm:$0xf]
    %v3676 = vld [vmem:[%s7 + $0xd4] sm:$0xf]
    %v3677 = vld [vmem:[%s7 + $0xd8] sm:$0xf]
    %v3678 = vld [vmem:[%s7 + $0xdc] sm:$0xf]
    %v3679 = vld [vmem:[%s7 + $0xe0] sm:$0xf]
    %v3680 = vld [vmem:[%s7 + $0xe4] sm:$0xf]
    %v3681 = vld [vmem:[%s7 + $0xe8] sm:$0xf]
    %v3682 = vld [vmem:[%s7 + $0xec] sm:$0xf]
    %v3683 = vld [vmem:[%s7 + $0xf0] sm:$0xf]
    %v3684 = vld [vmem:[%s7 + $0xf4] sm:$0xf]
    %v3685 = vld [vmem:[%s7 + $0xf8] sm:$0xf]
    %v3686 = vld [vmem:[%s7 + $0xfc] sm:$0xf]
    %v3687 = vld [vmem:[%s8] sm:$0x1]
    %v3689 = vlaneseq
    %v3690 = vshrl.u32 %v3689, 7
    %v3691 = vsub.s32 0, %v3690
    %v3692 = vrot.slane %v3687, %v3691
    %v3758 = vunpack.c.l.b16 %v3623
    %v3759 = vunpack.c.l.b16 %v3624
    %v3760 = vunpack.c.l.b16 %v3625
    %v3761 = vunpack.c.l.b16 %v3626
    %v3762 = vunpack.c.l.b16 %v3627
    %v3763 = vunpack.c.l.b16 %v3628
    %v3764 = vunpack.c.l.b16 %v3629
    %v3765 = vunpack.c.l.b16 %v3630
    %v3766 = vunpack.c.l.b16 %v3631
    %v3767 = vunpack.c.l.b16 %v3632
    %v3768 = vunpack.c.l.b16 %v3633
    %v3769 = vunpack.c.l.b16 %v3634
    %v3770 = vunpack.c.l.b16 %v3635
    %v3771 = vunpack.c.l.b16 %v3636
    %v3772 = vunpack.c.l.b16 %v3637
    %v3773 = vunpack.c.l.b16 %v3638
    %v3774 = vunpack.c.l.b16 %v3639
    %v3775 = vunpack.c.l.b16 %v3640
    %v3776 = vunpack.c.l.b16 %v3641
    %v3777 = vunpack.c.l.b16 %v3642
    %v3778 = vunpack.c.l.b16 %v3643
    %v3779 = vunpack.c.l.b16 %v3644
    %v3780 = vunpack.c.l.b16 %v3645
    %v3781 = vunpack.c.l.b16 %v3646
    %v3782 = vunpack.c.l.b16 %v3647
    %v3783 = vunpack.c.l.b16 %v3648
    %v3784 = vunpack.c.l.b16 %v3649
    %v3785 = vunpack.c.l.b16 %v3650
    %v3786 = vunpack.c.l.b16 %v3651
    %v3787 = vunpack.c.l.b16 %v3652
    %v3788 = vunpack.c.l.b16 %v3653
    %v3789 = vunpack.c.l.b16 %v3654
    %v3790 = vunpack.c.l.b16 %v3655
    %v3791 = vunpack.c.l.b16 %v3656
    %v3792 = vunpack.c.l.b16 %v3657
    %v3793 = vunpack.c.l.b16 %v3658
    %v3794 = vunpack.c.l.b16 %v3659
    %v3795 = vunpack.c.l.b16 %v3660
    %v3796 = vunpack.c.l.b16 %v3661
    %v3797 = vunpack.c.l.b16 %v3662
    %v3798 = vunpack.c.l.b16 %v3663
    %v3799 = vunpack.c.l.b16 %v3664
    %v3800 = vunpack.c.l.b16 %v3665
    %v3801 = vunpack.c.l.b16 %v3666
    %v3802 = vunpack.c.l.b16 %v3667
    %v3803 = vunpack.c.l.b16 %v3668
    %v3804 = vunpack.c.l.b16 %v3669
    %v3805 = vunpack.c.l.b16 %v3670
    %v3806 = vunpack.c.l.b16 %v3671
    %v3807 = vunpack.c.l.b16 %v3672
    %v3808 = vunpack.c.l.b16 %v3673
    %v3809 = vunpack.c.l.b16 %v3674
    %v3810 = vunpack.c.l.b16 %v3675
    %v3811 = vunpack.c.l.b16 %v3676
    %v3812 = vunpack.c.l.b16 %v3677
    %v3813 = vunpack.c.l.b16 %v3678
    %v3814 = vunpack.c.l.b16 %v3679
    %v3815 = vunpack.c.l.b16 %v3680
    %v3816 = vunpack.c.l.b16 %v3681
    %v3817 = vunpack.c.l.b16 %v3682
    %v3818 = vunpack.c.l.b16 %v3683
    %v3819 = vunpack.c.l.b16 %v3684
    %v3820 = vunpack.c.l.b16 %v3685
    %v3821 = vunpack.c.l.b16 %v3686
    %v3822 = vpack.c.b16 %v3759, %v3758
    %v3823 = vpack.c.b16 %v3761, %v3760
    %v3824 = vpack.c.b16 %v3763, %v3762
    %v3825 = vpack.c.b16 %v3765, %v3764
    %v3826 = vpack.c.b16 %v3767, %v3766
    %v3827 = vpack.c.b16 %v3769, %v3768
    %v3828 = vpack.c.b16 %v3771, %v3770
    %v3829 = vpack.c.b16 %v3773, %v3772
    %v3830 = vpack.c.b16 %v3775, %v3774
    %v3831 = vpack.c.b16 %v3777, %v3776
    %v3832 = vpack.c.b16 %v3779, %v3778
    %v3833 = vpack.c.b16 %v3781, %v3780
    %v3834 = vpack.c.b16 %v3783, %v3782
    %v3835 = vpack.c.b16 %v3785, %v3784
    %v3836 = vpack.c.b16 %v3787, %v3786
    %v3837 = vpack.c.b16 %v3789, %v3788
    %v3838 = vpack.c.b16 %v3791, %v3790
    %v3839 = vpack.c.b16 %v3793, %v3792
    %v3840 = vpack.c.b16 %v3795, %v3794
    %v3841 = vpack.c.b16 %v3797, %v3796
    %v3842 = vpack.c.b16 %v3799, %v3798
    %v3843 = vpack.c.b16 %v3801, %v3800
    %v3844 = vpack.c.b16 %v3803, %v3802
    %v3845 = vpack.c.b16 %v3805, %v3804
    %v3846 = vpack.c.b16 %v3807, %v3806
    %v3847 = vpack.c.b16 %v3809, %v3808
    %v3848 = vpack.c.b16 %v3811, %v3810
    %v3849 = vpack.c.b16 %v3813, %v3812
    %v3850 = vpack.c.b16 %v3815, %v3814
    %v3851 = vpack.c.b16 %v3817, %v3816
    %v3852 = vpack.c.b16 %v3819, %v3818
    %v3853 = vpack.c.b16 %v3821, %v3820
    %3886 = vmatprep.subr.bf16.mxu0 0
    %3887 = vmatpush1.bf16.msra.mxu0 %v3829
    %3888 = vmatprep.subr.bf16.mxu0 0
    %3889 = vmatpush1.bf16.msra.mxu0 %v3828
    %3890 = vmatprep.subr.bf16.mxu0 0
    %3891 = vmatpush1.bf16.msra.mxu0 %v3827
    %3892 = vmatprep.subr.bf16.mxu0 0
    %3893 = vmatpush1.bf16.msra.mxu0 %v3826
    %3894 = vmatprep.subr.bf16.mxu0 0
    %3895 = vmatpush1.bf16.msra.mxu0 %v3825
    %3896 = vmatprep.subr.bf16.mxu0 0
    %3897 = vmatpush1.bf16.msra.mxu0 %v3824
    %3898 = vmatprep.subr.bf16.mxu0 0
    %3899 = vmatpush1.bf16.msra.mxu0 %v3823
    %3900 = vmatprep.subr.bf16.mxu0 0
    %3901 = vmatpush1.bf16.msra.mxu0 %v3822
    %3902 = vmatprep.subr.bf16.mxu0 0
    %3903 = vmatpush2.bf16.msra.mxu0 %v3837
    %3904 = vmatprep.subr.bf16.mxu0 0
    %3905 = vmatpush2.bf16.msra.mxu0 %v3836
    %3906 = vmatprep.subr.bf16.mxu0 0
    %3907 = vmatpush2.bf16.msra.mxu0 %v3835
    %3908 = vmatprep.subr.bf16.mxu0 0
    %3909 = vmatpush2.bf16.msra.mxu0 %v3834
    %3910 = vmatprep.subr.bf16.mxu0 0
    %3911 = vmatpush2.bf16.msra.mxu0 %v3833
    %3912 = vmatprep.subr.bf16.mxu0 0
    %3913 = vmatpush2.bf16.msra.mxu0 %v3832
    %3914 = vmatprep.subr.bf16.mxu0 0
    %3915 = vmatpush2.bf16.msra.mxu0 %v3831
    %3916 = vmatprep.subr.bf16.mxu0 0
    %3917 = vmatpush2.bf16.msra.mxu0 %v3830
    %3918 = vmatprep.mubr.bf16.mxu0 %v3620
    %3919 = vmatmul.mubr.bf16.gmra.mxu0 %v3619
    %v3920 = vpop.f32.mrf.mxu0
    %v3921 = vadd.f32 %v3692, %v3920
    %v3922 = vpop.f32.mrf.mxu0
    %v3923 = vpop.f32.mrf.mxu0
    %v3924 = vadd.f32 %v3692, %v3923
    %v3925 = vpop.f32.mrf.mxu0
    %3926 = vdwg.mxu0
    %3927 = vmatprep.subr.bf16.mxu0 0
    %3928 = vmatpush1.bf16.msra.mxu0 %v3845
    %3929 = vmatprep.subr.bf16.mxu0 0
    %3930 = vmatpush1.bf16.msra.mxu0 %v3844
    %3931 = vmatprep.subr.bf16.mxu0 0
    %3932 = vmatpush1.bf16.msra.mxu0 %v3843
    %3933 = vmatprep.subr.bf16.mxu0 0
    %3934 = vmatpush1.bf16.msra.mxu0 %v3842
    %3935 = vmatprep.subr.bf16.mxu0 0
    %3936 = vmatpush1.bf16.msra.mxu0 %v3841
    %3937 = vmatprep.subr.bf16.mxu0 0
    %3938 = vmatpush1.bf16.msra.mxu0 %v3840
    %3939 = vmatprep.subr.bf16.mxu0 0
    %3940 = vmatpush1.bf16.msra.mxu0 %v3839
    %3941 = vmatprep.subr.bf16.mxu0 0
    %3942 = vmatpush1.bf16.msra.mxu0 %v3838
    %3943 = vmatprep.subr.bf16.mxu0 0
    %3944 = vmatpush2.bf16.msra.mxu0 %v3853
    %3945 = vmatprep.subr.bf16.mxu0 0
    %3946 = vmatpush2.bf16.msra.mxu0 %v3852
    %3947 = vmatprep.subr.bf16.mxu0 0
    %3948 = vmatpush2.bf16.msra.mxu0 %v3851
    %3949 = vmatprep.subr.bf16.mxu0 0
    %3950 = vmatpush2.bf16.msra.mxu0 %v3850
    %3951 = vmatprep.subr.bf16.mxu0 0
    %3952 = vmatpush2.bf16.msra.mxu0 %v3849
    %3953 = vmatprep.subr.bf16.mxu0 0
    %3954 = vmatpush2.bf16.msra.mxu0 %v3848
    %3955 = vmatprep.subr.bf16.mxu0 0
    %3956 = vmatpush2.bf16.msra.mxu0 %v3847
    %3957 = vmatprep.subr.bf16.mxu0 0
    %3958 = vmatpush2.bf16.msra.mxu0 %v3846
    %3959 = vmatprep.mubr.bf16.mxu0 %v3622
    %3960 = vmatmul.mubr.bf16.gmra.mxu0 %v3621
    %v3961 = vpop.f32.mrf.mxu0
    %v3962 = vadd.f32 %v3921, %v3961
    %v3963 = vpop.f32.mrf.mxu0
    %v3964 = vpop.f32.mrf.mxu0
    %v3965 = vadd.f32 %v3924, %v3964
    %v3966 = vpop.f32.mrf.mxu0
    %3967 = vdwg.mxu0
    %v3968 = vlaneseq
    %v3969 = vand.u32 %v3968, 127
    %vm3970 = vcmp.lt.s32.totalorder %v3969, 10
    %v3971 = vsel %vm3970, %v3962, -1e+30
    %v3972 = vsel %vm3970, %v3965, -1e+30
    %3973 = vmax.xlane.f32.xlu0 %v3971
    %v3974 = vpop.xlane.xlu0 %3973
    %3975 = vmax.xlane.f32.xlu0 %v3972
    %v3976 = vpop.xlane.xlu0 %3975
    %v3977 = vsub.f32 %v3971, %v3974
    %v3978 = vsub.f32 %v3972, %v3976
    %v3979 = vmul.f32 %v3977, 1.442695
    %v3980 = vpow.pop %v3979
    %v3981 = vmul.f32 %v3978, 1.442695
    %v3982 = vpow.pop %v3981
    %3983 = vadd.xlane.f32.xlu0 %v3980
    %v3984 = vpop.xlane.xlu0 %3983
    %3985 = vadd.xlane.f32.xlu0 %v3982
    %v3986 = vpop.xlane.xlu0 %3985
    %v3987 = vlog2.pop %v3984
    %v3988 = vmul.f32 %v3987, 0.6931472
    %v3989 = vlog2.pop %v3986
    %v3990 = vmul.f32 %v3989, 0.6931472
    %v3991 = vsub.f32 %v3977, %v3988
    %v3992 = vsub.f32 %v3978, %v3990
    %3993 = vst [vmem:[%s9] sm:$0xff] %v3991
    %3994 = vst [vmem:[%s9 + $0x8] sm:$0xff] %v3992
    // Predicated region
    $region50: #{mlp_forward.1} parent=1 // pred_check
      _
    $region51: #{mlp_forward.1} parent=1 // pred_check_branch
      %3996 = sbr.rel (0) target = $region53
    $region52: #{mlp_forward.1} parent=1 // pred_region
      _
    $region53: #{mlp_forward.1} parent=1 // pred_fallthru
      _
    // Predicated region
    $region54: #{mlp_forward.1} parent=1 // pred_check
      _
    $region55: #{mlp_forward.1} parent=1 // pred_check_branch
      %3998 = sbr.rel (0) target = $region57
    $region56: #{mlp_forward.1} parent=1 // pred_region
      _
    $region57: #{mlp_forward.1} parent=1 // pred_fallthru
      _
    %3999 = vsyncpa [#allocation3], 1
    %4000 = vsyncpa [#allocation5], 1

</llo_original>
